<compile_context>
chip_gen: v7x
topology: tpu7x:2x2x1
jax: 0.10.0
libtpu: 0.0.40
codegen_flags: <defaults>
</compile_context>

<pallas_src>
import math
import functools

import jax
import jax.numpy as jnp
import numpy as np
from jax.experimental import pallas as pl
from jax.experimental.pallas import tpu as pltpu

NEG_INF = -1e30   # Python float literal -> no captured jnp constants in kernel

_N_PARAMS = 20
_MATMUL_W_IDX = (0, 2, 4, 6, 8, 10, 12)   # weight matrices stored in bf16


# ----------------------------------------------------------------------------
# In-kernel math helpers (batched over the batch tile).
# ----------------------------------------------------------------------------
def _layer_norm(x, w, b, eps=1e-5):
    mu = jnp.mean(x, axis=-1, keepdims=True)
    var = jnp.mean((x - mu) ** 2, axis=-1, keepdims=True)
    return (x - mu) * jax.lax.rsqrt(var + eps) * w + b


def _mha(q, k, v, bias, out_w, out_b, nhead, cdt):
    """Multi-head attention: batched over the batch tile, unrolled over heads.

    q: (Bt, Lq, D) f32; k, v: (Bt, Lk, D) f32; bias: (Bt, Lq, Lk) additive f32;
    out_w: (D, D) compute-dtype; out_b: (1, D) f32.
    Returns (out (Bt, Lq, D) f32, head-averaged attention map (Bt, Lq, Lk) f32).
    """
    Bt, Lq, D = q.shape
    hd = D // nhead
    scale = 1.0 / math.sqrt(hd)
    ctx_heads = []
    map_sum = None
    for h in range(nhead):                       # short static unroll; lane slices
        sl = slice(h * hd, (h + 1) * hd)
        qh = q[:, :, sl].astype(cdt)
        kh = k[:, :, sl].astype(cdt)
        vh = v[:, :, sl].astype(cdt)
        s = jnp.einsum('bqd,bkd->bqk', qh, kh,
                       preferred_element_type=jnp.float32) * scale + bias
        s = s - jnp.max(s, axis=-1, keepdims=True)
        e = jnp.exp(s)
        a = e * pl.reciprocal(jnp.sum(e, axis=-1, keepdims=True), approx=True)
        ctx_heads.append(jnp.einsum('bqk,bkd->bqd', a.astype(cdt), vh,
                                    preferred_element_type=jnp.float32))
        map_sum = a if map_sum is None else map_sum + a
    ctx = jnp.concatenate(ctx_heads, axis=-1)    # merge heads back to (Bt, Lq, D)
    out = (jnp.dot(ctx.reshape(Bt * Lq, D).astype(cdt), out_w,
                   preferred_element_type=jnp.float32)
           + out_b).reshape(Bt, Lq, D)           # single K=D output projection
    return out, map_sum * (1.0 / nhead)


# ----------------------------------------------------------------------------
# Fused decoder-stack kernel: grid = (batch_tiles, layer)
# ----------------------------------------------------------------------------
def decoder_stack_kernel(*refs, nhead, guided_layers, compute_dtype):
    (tgt_ref, mem_ref, bias_self_ref, bias_cross_ref, gw_ref,
     s_qkv_w_ref, s_qkv_b_ref, s_out_w_ref, s_out_b_ref,
     c_q_w_ref, c_q_b_ref, c_kv_w_ref, c_kv_b_ref, c_out_w_ref, c_out_b_ref,
     ff1_w_ref, ff1_b_ref, ff2_w_ref, ff2_b_ref,
     n1_w_ref, n1_b_ref, n2_w_ref, n2_b_ref, n3_w_ref, n3_b_ref,
     x_out_ref, cross_ref, self_ref, loss_ref) = refs

    l = pl.program_id(1)
    cdt = compute_dtype
    Bt, T, D = x_out_ref.shape
    S = mem_ref.shape[1]

    # Layer 0: seed the VMEM-resident activation carry + loss accumulator.
    @pl.when(l == 0)
    def _init():
        x_out_ref[...] = tgt_ref[...]
        loss_ref[...] = jnp.zeros_like(loss_ref)

    x = x_out_ref[...]           # (Bt, T, D) f32, carried across layers in VMEM
    mem = mem_ref[...]           # (Bt, S, D) f32

    def proj(a2d, w_ref, b_ref):
        # bf16 operands, f32 accumulation (single-pass MXU).
        return (jnp.dot(a2d.astype(cdt), w_ref[...],
                        preferred_element_type=jnp.float32) + b_ref[...])

    # ---- self-attention (fused QKV projection, Bt*T rows into the MXU) ----
    qkv = proj(x.reshape(Bt * T, D), s_qkv_w_ref, s_qkv_b_ref)      # (Bt*T, 3D)
    q = qkv[:, :D].reshape(Bt, T, D)
    k = qkv[:, D:2 * D].reshape(Bt, T, D)
    v = qkv[:, 2 * D:].reshape(Bt, T, D)
    sa, self_map = _mha(q, k, v, bias_self_ref[...],
                        s_out_w_ref[...], s_out_b_ref[...], nhead, cdt)
    x = _layer_norm(x + sa, n1_w_ref[...], n1_b_ref[...])

    # ---- cross-attention (fused KV projection of the memory) ----
    q_c = proj(x.reshape(Bt * T, D), c_q_w_ref, c_q_b_ref).reshape(Bt, T, D)
    kv_c = proj(mem.reshape(Bt * S, D), c_kv_w_ref, c_kv_b_ref)     # (Bt*S, 2D)
    k_c = kv_c[:, :D].reshape(Bt, S, D)
    v_c = kv_c[:, D:].reshape(Bt, S, D)
    ca, cross_map = _mha(q_c, k_c, v_c, bias_cross_ref[...],
                         c_out_w_ref[...], c_out_b_ref[...], nhead, cdt)
    x = _layer_norm(x + ca, n2_w_ref[...], n2_b_ref[...])

    # ---- feed-forward (ReLU; dropout is identity in eval mode) ----
    h = jnp.maximum(proj(x.reshape(Bt * T, D), ff1_w_ref, ff1_b_ref), 0.0)
    ff = proj(h, ff2_w_ref, ff2_b_ref).reshape(Bt, T, D)
    x = _layer_norm(x + ff, n3_w_ref[...], n3_b_ref[...])

    x_out_ref[...] = x
    cross_ref[...] = cross_map.astype(cross_ref.dtype)
    self_ref[...] = self_map.astype(self_ref.dtype)

    # ---- guided-attention loss numerator (Gaussian*mask precomputed, layer-
    #      invariant; denominator computed outside the kernel) ----
    num = jnp.sum(cross_map * gw_ref[...])

    @pl.when(l < guided_layers)
    def _acc():
        loss_ref[...] = loss_ref[...] + num


# ----------------------------------------------------------------------------
# BlockSpec helpers
# ----------------------------------------------------------------------------
def _batch_spec(arr, bt):
    ntail = arr.ndim - 1

    def index_map(b, l, _n=ntail):
        return (b,) + (0,) * _n

    return pl.BlockSpec((bt,) + tuple(arr.shape[1:]), index_map)


def _layer_spec(arr):
    ntail = arr.ndim - 1

    def index_map(b, l, _n=ntail):
        return (l,) + (0,) * _n

    # Leading (layer) dim squeezed out of the kernel view.
    return pl.BlockSpec((None,) + tuple(arr.shape[1:]), index_map)


# ----------------------------------------------------------------------------
# TransformerDecoderGuided.forward equivalent
# ----------------------------------------------------------------------------
def transformer_decoder_guided(tgt, text, layers_params, nhead, guided_sigma=0.7,
                               guided_layers=None, tgt_mask=None, memory_mask=None,
                               tgt_key_padding_mask=None,
                               text_key_padding_mask=None,
                               batch_tile=None, compute_dtype=jnp.bfloat16,
                               map_dtype=jnp.float32):
    num_layers = len(layers_params)
    if guided_layers is None:
        guided_layers = num_layers
    B, T, D = tgt.shape
    S = text.shape[1]
    if batch_tile is None:
        batch_tile = B
    batch_tile = min(batch_tile, B)
    assert B % batch_tile == 0, "batch must be divisible by batch_tile"
    nb = B // batch_tile

    tkpm = (tgt_key_padding_mask.astype(jnp.float32)
            if tgt_key_padding_mask is not None
            else jnp.zeros((B, T), jnp.float32))
    mkpm = (text_key_padding_mask.astype(jnp.float32)
            if text_key_padding_mask is not None
            else jnp.zeros((B, S), jnp.float32))
    tmask = tgt_mask if tgt_mask is not None else jnp.zeros((T, T), jnp.float32)
    mmask = memory_mask if memory_mask is not None else jnp.zeros((T, S), jnp.float32)

    # Layer-invariant per-batch terms, hoisted out of the layer loop.  Their
    # block index is constant along the layer axis, so they are DMA'd once per
    # batch tile and stay VMEM-resident for all layers.
    bias_self = tmask[None] + jnp.where(tkpm[:, None, :] > 0.5, NEG_INF, 0.0)
    bias_cross = mmask[None] + jnp.where(mkpm[:, None, :] > 0.5, NEG_INF, 0.0)

    t_len = jnp.maximum(jnp.sum(1.0 - tkpm, axis=-1), 1.0)[:, None, None]
    s_len = jnp.maximum(jnp.sum(1.0 - mkpm, axis=-1), 1.0)[:, None, None]
    gx = jnp.arange(T, dtype=jnp.float32)[None, :, None]
    gy = jnp.arange(S, dtype=jnp.float32)[None, None, :]
    gauss = 1.0 - jnp.exp(-((gy / s_len - gx / t_len) ** 2)
                          / (2.0 * guided_sigma ** 2))
    nmask = (1.0 - tkpm)[:, :, None] * (1.0 - mkpm)[:, None, :]
    gw = (gauss * nmask).astype(jnp.float32)          # (B, T, S)
    den = jnp.sum(nmask)                              # layer-invariant denominator

    stacked = []
    for i in range(_N_PARAMS):
        arr = jnp.stack([lp[i] for lp in layers_params], axis=0)
        if i in _MATMUL_W_IDX:
            arr = arr.astype(compute_dtype)           # bf16 weights: half DMA bytes
        stacked.append(arr)

    data = (tgt, text, bias_self, bias_cross, gw)

    in_specs = ([_batch_spec(a, batch_tile) for a in data]
                + [_layer_spec(p) for p in stacked])

    out_shape = (jax.ShapeDtypeStruct((B, T, D), jnp.float32),
                 jax.ShapeDtypeStruct((num_layers, B, T, S), map_dtype),
                 jax.ShapeDtypeStruct((num_layers, B, T, T), map_dtype),
                 jax.ShapeDtypeStruct((nb, 1, 1), jnp.float32))
    out_specs = (pl.BlockSpec((batch_tile, T, D), lambda b, l: (b, 0, 0)),
                 pl.BlockSpec((None, batch_tile, T, S), lambda b, l: (l, b, 0, 0)),
                 pl.BlockSpec((None, batch_tile, T, T), lambda b, l: (l, b, 0, 0)),
                 pl.BlockSpec((1, 1, 1), lambda b, l: (b, 0, 0)))

    out, cross_maps, self_maps, loss_num = pl.pallas_call(
        functools.partial(decoder_stack_kernel, nhead=int(nhead),
                          guided_layers=int(guided_layers),
                          compute_dtype=compute_dtype),
        grid=(nb, num_layers),
        in_specs=in_specs,
        out_specs=out_specs,
        out_shape=out_shape,
        compiler_params=pltpu.CompilerParams(
            dimension_semantics=("parallel", "arbitrary"),
            vmem_limit_bytes=48 * 1024 * 1024),
    )(*data, *stacked)

    attns = [cross_maps[i] for i in range(num_layers)]
    self_attns = [self_maps[i] for i in range(num_layers)]
    if tgt_key_padding_mask is not None and guided_layers > 0:
        guided_loss = jnp.sum(loss_num) / den
    else:
        guided_loss = 0.0
    # TODO(synk): final `norm` module is None in this configuration (as in the demo).
    return out, guided_loss, attns, self_attns


# ----------------------------------------------------------------------------
# Deterministic parameter init
# ----------------------------------------------------------------------------
def init_layer_params(key, d_model, dim_ff, nhead):
    D, F = d_model, dim_ff
    ks = jax.random.split(key, 14)

    def W(k, shape, scale=0.05):
        return (scale * jax.random.normal(k, shape)).astype(jnp.float32)

    def bvec(k, n, scale=0.01):
        return (scale * jax.random.normal(k, (1, n))).astype(jnp.float32)

    ones = lambda n: jnp.ones((1, n), jnp.float32)
    zeros = lambda n: jnp.zeros((1, n), jnp.float32)
    return (
        W(ks[0], (D, 3 * D)), bvec(ks[1], 3 * D),      # self-attn fused QKV
        W(ks[2], (D, D)), bvec(ks[3], D),              # self-attn out
        W(ks[4], (D, D)), bvec(ks[5], D),              # cross-attn Q
        W(ks[6], (D, 2 * D)), bvec(ks[7], 2 * D),      # cross-attn fused KV
        W(ks[8], (D, D)), bvec(ks[9], D),              # cross-attn out
        W(ks[10], (D, F)), bvec(ks[11], F),            # linear1
        W(ks[12], (F, D)), bvec(ks[13], D),            # linear2
        ones(D), zeros(D),                             # norm1
        ones(D), zeros(D),                             # norm2
        ones(D), zeros(D),                             # norm3
    )


# ----------------------------------------------------------------------------
# Pure-JAX f32 reference (independent of the kernel code paths)
# ----------------------------------------------------------------------------
_P = jax.lax.Precision.HIGHEST


def _ref_layer_norm(x, w, b, eps=1e-5):
    mu = jnp.mean(x, axis=-1, keepdims=True)
    var = jnp.mean((x - mu) ** 2, axis=-1, keepdims=True)
    return (x - mu) * jax.lax.rsqrt(var + eps) * w + b


def _ref_mha(xq, xkv, kpm, amask, wq, bq, wkv, bkv, wo, bo, nhead):
    B, Lq, D = xq.shape
    Lk = xkv.shape[1]
    hd = D // nhead
    q = jnp.einsum('bld,de->ble', xq, wq, precision=_P) + bq
    kv = jnp.einsum('bld,de->ble', xkv, wkv, precision=_P) + bkv
    k, v = kv[..., :D], kv[..., D:]
    qh = q.reshape(B, Lq, nhead, hd).transpose(0, 2, 1, 3)
    kh = k.reshape(B, Lk, nhead, hd).transpose(0, 2, 1, 3)
    vh = v.reshape(B, Lk, nhead, hd).transpose(0, 2, 1, 3)
    s = jnp.einsum('bhqd,bhkd->bhqk', qh, kh, precision=_P) / math.sqrt(hd)
    s = s + amask[None, None]
    s = jnp.where(kpm[:, None, None, :] > 0.5, NEG_INF, s)
    a = jax.nn.softmax(s, axis=-1)
    ctx = jnp.einsum('bhqk,bhkd->bhqd', a, vh, precision=_P)
    ctx = ctx.transpose(0, 2, 1, 3).reshape(B, Lq, D)
    out = jnp.einsum('bld,de->ble', ctx, wo, precision=_P) + bo
    return out, jnp.mean(a, axis=1)


def _ref_decoder_layer(x, mem, tkpm, mkpm, tmask, mmask, p, nhead):
    (s_qkv_w, s_qkv_b, s_out_w, s_out_b,
     c_q_w, c_q_b, c_kv_w, c_kv_b, c_out_w, c_out_b,
     ff1_w, ff1_b, ff2_w, ff2_b,
     n1_w, n1_b, n2_w, n2_b, n3_w, n3_b) = p
    D = x.shape[-1]
    sa, self_attn = _ref_mha(x, x, tkpm, tmask,
                             s_qkv_w[:, :D], s_qkv_b[:, :D],
                             s_qkv_w[:, D:], s_qkv_b[:, D:],
                             s_out_w, s_out_b, nhead)
    x = _ref_layer_norm(x + sa, n1_w, n1_b)
    ca, cross_attn = _ref_mha(x, mem, mkpm, mmask,
                              c_q_w, c_q_b, c_kv_w, c_kv_b,
                              c_out_w, c_out_b, nhead)
    x = _ref_layer_norm(x + ca, n2_w, n2_b)
    h = jnp.maximum(jnp.einsum('bld,df->blf', x, ff1_w, precision=_P) + ff1_b, 0.0)
    ff = jnp.einsum('blf,fd->bld', h, ff2_w, precision=_P) + ff2_b
    x = _ref_layer_norm(x + ff, n3_w, n3_b)
    return x, cross_attn, self_attn


def _ref_guided_loss(attn, tkpm, mkpm, sigma):
    B, T, S = attn.shape
    t_len = jnp.maximum(jnp.sum(1.0 - tkpm, axis=-1), 1.0)[:, None, None]
    s_len = jnp.maximum(jnp.sum(1.0 - mkpm, axis=-1), 1.0)[:, None, None]
    gx = jnp.arange(T, dtype=jnp.float32)[None, :, None]
    gy = jnp.arange(S, dtype=jnp.float32)[None, None, :]
    w = 1.0 - jnp.exp(-((gy / s_len - gx / t_len) ** 2) / (2.0 * sigma ** 2))
    nmask = (1.0 - tkpm)[:, :, None] * (1.0 - mkpm)[:, None, :]
    return jnp.sum(attn * w * nmask) / jnp.sum(nmask)


def reference_forward(tgt, text, layers_params, nhead, sigma,
                      tkpm, mkpm, tmask, mmask, guided_layers, use_guided):
    out = tgt
    gl = 0.0
    attns = []
    for i, p in enumerate(layers_params):
        out, attn, _ = _ref_decoder_layer(out, text, tkpm, mkpm, tmask, mmask,
                                          p, nhead)
        attns.append(attn)
        if use_guided and i < guided_layers:
            gl = _ref_guided_loss(attn, tkpm, mkpm, sigma) + gl
    return out, gl, attns


# ----------------------------------------------------------------------------
if __name__ == "__main__":
    B, T, S, D, H, FF = 2, 8, 8, 32, 4, 64
    NUM_LAYERS = 2
    SIGMA = 0.7

    key = jax.random.PRNGKey(0)
    k_tgt, k_txt, k_par = jax.random.split(key, 3)
    tgt = jax.random.normal(k_tgt, (B, T, D), jnp.float32)
    text = jax.random.normal(k_txt, (B, S, D), jnp.float32)

    tgt_lens = jnp.array([8, 5])
    txt_lens = jnp.array([7, 4])
    tgt_kpm = jnp.arange(T)[None, :] >= tgt_lens[:, None]   # bool, True = padded
    txt_kpm = jnp.arange(S)[None, :] >= txt_lens[:, None]

    layer_keys = jax.random.split(k_par, NUM_LAYERS)
    layers_params = [init_layer_params(lk, D, FF, H) for lk in layer_keys]

    out, gloss, attns, self_attns = transformer_decoder_guided(
        tgt, text, layers_params, H, guided_sigma=SIGMA,
        tgt_key_padding_mask=tgt_kpm, text_key_padding_mask=txt_kpm,
        batch_tile=B, compute_dtype=jnp.bfloat16)
    jax.block_until_ready((out, gloss, attns, self_attns))

    # Independent pure-JAX f32 reference check (bf16 kernel -> loosened tol).
    tkpm_f = tgt_kpm.astype(jnp.float32)
    mkpm_f = txt_kpm.astype(jnp.float32)
    tmask = jnp.zeros((T, T), jnp.float32)
    mmask = jnp.zeros((T, S), jnp.float32)
    ref_out, ref_gl, ref_attns = reference_forward(
        tgt, text, layers_params, H, SIGMA, tkpm_f, mkpm_f, tmask, mmask,
        guided_layers=NUM_LAYERS, use_guided=True)

    np.testing.assert_allclose(np.asarray(out), np.asarray(ref_out),
                               rtol=2e-2, atol=2e-2)
    np.testing.assert_allclose(np.asarray(gloss), np.asarray(ref_gl),
                               rtol=2e-2, atol=2e-2)
    np.testing.assert_allclose(np.asarray(attns[0]), np.asarray(ref_attns[0]),
                               rtol=2e-2, atol=2e-2)

    print("KERNEL_OK")
</pallas_src>

<mosaic_0001>
module attributes {stable_mosaic.version = 11 : i64} {
  func.func @decoder_stack_kernel(%arg0: i32, %arg1: i32, %arg2: memref<2x8x32xf32, #tpu.memory_space<vmem>>, %arg3: memref<2x8x32xf32, #tpu.memory_space<vmem>>, %arg4: memref<2x8x8xf32, #tpu.memory_space<vmem>>, %arg5: memref<2x8x8xf32, #tpu.memory_space<vmem>>, %arg6: memref<2x8x8xf32, #tpu.memory_space<vmem>>, %arg7: memref<1x32x96xbf16, #tpu.memory_space<vmem>>, %arg8: memref<1x1x96xf32, #tpu.memory_space<vmem>>, %arg9: memref<1x32x32xbf16, #tpu.memory_space<vmem>>, %arg10: memref<1x1x32xf32, #tpu.memory_space<vmem>>, %arg11: memref<1x32x32xbf16, #tpu.memory_space<vmem>>, %arg12: memref<1x1x32xf32, #tpu.memory_space<vmem>>, %arg13: memref<1x32x64xbf16, #tpu.memory_space<vmem>>, %arg14: memref<1x1x64xf32, #tpu.memory_space<vmem>>, %arg15: memref<1x32x32xbf16, #tpu.memory_space<vmem>>, %arg16: memref<1x1x32xf32, #tpu.memory_space<vmem>>, %arg17: memref<1x32x64xbf16, #tpu.memory_space<vmem>>, %arg18: memref<1x1x64xf32, #tpu.memory_space<vmem>>, %arg19: memref<1x64x32xbf16, #tpu.memory_space<vmem>>, %arg20: memref<1x1x32xf32, #tpu.memory_space<vmem>>, %arg21: memref<1x1x32xf32, #tpu.memory_space<vmem>>, %arg22: memref<1x1x32xf32, #tpu.memory_space<vmem>>, %arg23: memref<1x1x32xf32, #tpu.memory_space<vmem>>, %arg24: memref<1x1x32xf32, #tpu.memory_space<vmem>>, %arg25: memref<1x1x32xf32, #tpu.memory_space<vmem>>, %arg26: memref<1x1x32xf32, #tpu.memory_space<vmem>>, %arg27: memref<2x8x32xf32, #tpu.memory_space<vmem>>, %arg28: memref<1x2x8x8xf32, #tpu.memory_space<vmem>>, %arg29: memref<1x2x8x8xf32, #tpu.memory_space<vmem>>, %arg30: memref<1x1x1xf32, #tpu.memory_space<vmem>>) attributes {dimension_semantics = [#tpu.dimension_semantics<parallel>, #tpu.dimension_semantics<arbitrary>], iteration_bounds = array<i64: 1, 2>, scalar_prefetch = 0 : i64, scratch_operands = 0 : i64, tpu.core_type = #tpu.core_type<tc>, window_params = [{transform_indices = @transform_0, window_bounds = array<i64: 2, 8, 32>}, {transform_indices = @transform_1, window_bounds = array<i64: 2, 8, 32>}, {transform_indices = @transform_2, window_bounds = array<i64: 2, 8, 8>}, {transform_indices = @transform_3, window_bounds = array<i64: 2, 8, 8>}, {transform_indices = @transform_4, window_bounds = array<i64: 2, 8, 8>}, {transform_indices = @transform_5, window_bounds = array<i64: 1, 32, 96>}, {transform_indices = @transform_6, window_bounds = array<i64: 1, 1, 96>}, {transform_indices = @transform_7, window_bounds = array<i64: 1, 32, 32>}, {transform_indices = @transform_8, window_bounds = array<i64: 1, 1, 32>}, {transform_indices = @transform_9, window_bounds = array<i64: 1, 32, 32>}, {transform_indices = @transform_10, window_bounds = array<i64: 1, 1, 32>}, {transform_indices = @transform_11, window_bounds = array<i64: 1, 32, 64>}, {transform_indices = @transform_12, window_bounds = array<i64: 1, 1, 64>}, {transform_indices = @transform_13, window_bounds = array<i64: 1, 32, 32>}, {transform_indices = @transform_14, window_bounds = array<i64: 1, 1, 32>}, {transform_indices = @transform_15, window_bounds = array<i64: 1, 32, 64>}, {transform_indices = @transform_16, window_bounds = array<i64: 1, 1, 64>}, {transform_indices = @transform_17, window_bounds = array<i64: 1, 64, 32>}, {transform_indices = @transform_18, window_bounds = array<i64: 1, 1, 32>}, {transform_indices = @transform_19, window_bounds = array<i64: 1, 1, 32>}, {transform_indices = @transform_20, window_bounds = array<i64: 1, 1, 32>}, {transform_indices = @transform_21, window_bounds = array<i64: 1, 1, 32>}, {transform_indices = @transform_22, window_bounds = array<i64: 1, 1, 32>}, {transform_indices = @transform_23, window_bounds = array<i64: 1, 1, 32>}, {transform_indices = @transform_24, window_bounds = array<i64: 1, 1, 32>}, {transform_indices = @transform_25, window_bounds = array<i64: 2, 8, 32>}, {transform_indices = @transform_26, window_bounds = array<i64: 1, 2, 8, 8>}, {transform_indices = @transform_27, window_bounds = array<i64: 1, 2, 8, 8>}, {transform_indices = @transform_28, window_bounds = array<i64: 1, 1, 1>}]} {
    %c0_i32 = arith.constant 0 : i32
    %0 = arith.cmpi eq, %arg1, %c0_i32 : i32
    %1 = arith.extui %0 : i1 to i32
    %c0_i32_0 = arith.constant 0 : i32
    %2 = arith.cmpi ne, %1, %c0_i32_0 : i32
    scf.if %2 {
      %c0_152 = arith.constant 0 : index
      %c0_153 = arith.constant 0 : index
      %c0_154 = arith.constant 0 : index
      %376 = vector.load %arg2[%c0_152, %c0_153, %c0_154] : memref<2x8x32xf32, #tpu.memory_space<vmem>>, vector<2x8x32xf32>
      %c0_155 = arith.constant 0 : index
      %c0_156 = arith.constant 0 : index
      %c0_157 = arith.constant 0 : index
      %377 = vector.load %arg27[%c0_155, %c0_156, %c0_157] : memref<2x8x32xf32, #tpu.memory_space<vmem>>, vector<2x8x32xf32>
      tpu.vector_store %arg27[%c0_155, %c0_156, %c0_157], %376 {strides = array<i32>} : memref<2x8x32xf32, #tpu.memory_space<vmem>>, vector<2x8x32xf32>,
      %cst_158 = arith.constant 0.000000e+00 : f32
      %378 = vector.broadcast %cst_158 : f32 to vector<1x1x1xf32>
      %c0_159 = arith.constant 0 : index
      %c0_160 = arith.constant 0 : index
      %c0_161 = arith.constant 0 : index
      %379 = vector.load %arg30[%c0_159, %c0_160, %c0_161] : memref<1x1x1xf32, #tpu.memory_space<vmem>>, vector<1x1x1xf32>
      tpu.vector_store %arg30[%c0_159, %c0_160, %c0_161], %378 {strides = array<i32>} : memref<1x1x1xf32, #tpu.memory_space<vmem>>, vector<1x1x1xf32>,
    } else {
    }
    %c0 = arith.constant 0 : index
    %c0_1 = arith.constant 0 : index
    %c0_2 = arith.constant 0 : index
    %3 = vector.load %arg27[%c0, %c0_1, %c0_2] : memref<2x8x32xf32, #tpu.memory_space<vmem>>, vector<2x8x32xf32>
    %c0_3 = arith.constant 0 : index
    %c0_4 = arith.constant 0 : index
    %c0_5 = arith.constant 0 : index
    %4 = vector.load %arg3[%c0_3, %c0_4, %c0_5] : memref<2x8x32xf32, #tpu.memory_space<vmem>>, vector<2x8x32xf32>
    %5 = vector.shape_cast %3 : vector<2x8x32xf32> to vector<16x32xf32>
    %6 = arith.truncf %5 : vector<16x32xf32> to vector<16x32xbf16>
    %c0_6 = arith.constant 0 : index
    %c0_7 = arith.constant 0 : index
    %c0_8 = arith.constant 0 : index
    %7 = vector.load %arg7[%c0_6, %c0_7, %c0_8] : memref<1x32x96xbf16, #tpu.memory_space<vmem>>, vector<1x32x96xbf16>
    %8 = vector.shape_cast %7 : vector<1x32x96xbf16> to vector<32x96xbf16>
    %cst = arith.constant dense<0.000000e+00> : vector<16x96xf32>
    %9 = tpu.matmul %6, %8, %cst {dimension_numbers = #tpu.dot_dimension_numbers<[1], [0], [0], [1], [0, 0, 1, 1], [], []>} : vector<16x32xbf16>, vector<32x96xbf16>, vector<16x96xf32> -> vector<16x96xf32>
    %c0_9 = arith.constant 0 : index
    %c0_10 = arith.constant 0 : index
    %c0_11 = arith.constant 0 : index
    %10 = vector.load %arg8[%c0_9, %c0_10, %c0_11] : memref<1x1x96xf32, #tpu.memory_space<vmem>>, vector<1x1x96xf32>
    %11 = vector.shape_cast %10 : vector<1x1x96xf32> to vector<1x96xf32>
    %12 = vector.broadcast %11 : vector<1x96xf32> to vector<16x96xf32>
    %13 = arith.addf %9, %12 : vector<16x96xf32>
    %14 = vector.extract_strided_slice %13 {offsets = [0, 0], sizes = [16, 32], strides = [1, 1]} : vector<16x96xf32> to vector<16x32xf32>
    %15 = vector.shape_cast %14 : vector<16x32xf32> to vector<2x8x32xf32>
    %16 = vector.extract_strided_slice %13 {offsets = [0, 32], sizes = [16, 32], strides = [1, 1]} : vector<16x96xf32> to vector<16x32xf32>
    %17 = vector.shape_cast %16 : vector<16x32xf32> to vector<2x8x32xf32>
    %18 = vector.extract_strided_slice %13 {offsets = [0, 64], sizes = [16, 32], strides = [1, 1]} : vector<16x96xf32> to vector<16x32xf32>
    %19 = vector.shape_cast %18 : vector<16x32xf32> to vector<2x8x32xf32>
    %c0_12 = arith.constant 0 : index
    %c0_13 = arith.constant 0 : index
    %c0_14 = arith.constant 0 : index
    %20 = vector.load %arg4[%c0_12, %c0_13, %c0_14] : memref<2x8x8xf32, #tpu.memory_space<vmem>>, vector<2x8x8xf32>
    %c0_15 = arith.constant 0 : index
    %c0_16 = arith.constant 0 : index
    %c0_17 = arith.constant 0 : index
    %21 = vector.load %arg9[%c0_15, %c0_16, %c0_17] : memref<1x32x32xbf16, #tpu.memory_space<vmem>>, vector<1x32x32xbf16>
    %22 = vector.shape_cast %21 : vector<1x32x32xbf16> to vector<32x32xbf16>
    %c0_18 = arith.constant 0 : index
    %c0_19 = arith.constant 0 : index
    %c0_20 = arith.constant 0 : index
    %23 = vector.load %arg10[%c0_18, %c0_19, %c0_20] : memref<1x1x32xf32, #tpu.memory_space<vmem>>, vector<1x1x32xf32>
    %24 = vector.shape_cast %23 : vector<1x1x32xf32> to vector<1x32xf32>
    %25 = vector.extract_strided_slice %15 {offsets = [0, 0, 0], sizes = [2, 8, 8], strides = [1, 1, 1]} : vector<2x8x32xf32> to vector<2x8x8xf32>
    %26 = arith.truncf %25 : vector<2x8x8xf32> to vector<2x8x8xbf16>
    %27 = vector.extract_strided_slice %17 {offsets = [0, 0, 0], sizes = [2, 8, 8], strides = [1, 1, 1]} : vector<2x8x32xf32> to vector<2x8x8xf32>
    %28 = arith.truncf %27 : vector<2x8x8xf32> to vector<2x8x8xbf16>
    %29 = vector.extract_strided_slice %19 {offsets = [0, 0, 0], sizes = [2, 8, 8], strides = [1, 1, 1]} : vector<2x8x32xf32> to vector<2x8x8xf32>
    %30 = arith.truncf %29 : vector<2x8x8xf32> to vector<2x8x8xbf16>
    "tpu.trace_start"() <{level = 10 : i32, message = "bqd,bkd->bqk"}> : () -> ()
    %cst_21 = arith.constant dense<0.000000e+00> : vector<2x8x8xf32>
    %31 = tpu.matmul %26, %28, %cst_21 {dimension_numbers = #tpu.dot_dimension_numbers<[2], [2], [1], [1], [0, 0, 0, 1, 1, 1], [0], [0]>} : vector<2x8x8xbf16>, vector<2x8x8xbf16>, vector<2x8x8xf32> -> vector<2x8x8xf32>
    "tpu.trace_stop"() : () -> ()
    %cst_22 = arith.constant 0.353553385 : f32
    %32 = vector.broadcast %cst_22 : f32 to vector<2x8x8xf32>
    %33 = arith.mulf %31, %32 : vector<2x8x8xf32>
    %34 = arith.addf %33, %20 : vector<2x8x8xf32>
    %cst_23 = arith.constant dense<0xFF800000> : vector<2x8xf32>
    %35 = vector.multi_reduction <maximumf>, %34, %cst_23 [2] : vector<2x8x8xf32> to vector<2x8xf32>
    %36 = vector.shape_cast %35 : vector<2x8xf32> to vector<2x8x1xf32>
    %37 = vector.broadcast %36 : vector<2x8x1xf32> to vector<2x8x8xf32>
    %38 = arith.subf %34, %37 : vector<2x8x8xf32>
    %39 = math.exp %38 : vector<2x8x8xf32>
    %cst_24 = arith.constant dense<0.000000e+00> : vector<2x8xf32>
    %40 = vector.multi_reduction <add>, %39, %cst_24 [2] : vector<2x8x8xf32> to vector<2x8xf32>
    %41 = vector.shape_cast %40 : vector<2x8xf32> to vector<2x8x1xf32>
    %42 = tpu.reciprocal %41 {approx = true} : vector<2x8x1xf32> -> vector<2x8x1xf32>
    %43 = vector.broadcast %42 : vector<2x8x1xf32> to vector<2x8x8xf32>
    %44 = arith.mulf %39, %43 : vector<2x8x8xf32>
    %45 = arith.truncf %44 : vector<2x8x8xf32> to vector<2x8x8xbf16>
    "tpu.trace_start"() <{level = 10 : i32, message = "bqk,bkd->bqd"}> : () -> ()
    %cst_25 = arith.constant dense<0.000000e+00> : vector<2x8x8xf32>
    %46 = tpu.matmul %45, %30, %cst_25 {dimension_numbers = #tpu.dot_dimension_numbers<[2], [1], [1], [2], [0, 0, 0, 1, 1, 2], [0], [0]>} : vector<2x8x8xbf16>, vector<2x8x8xbf16>, vector<2x8x8xf32> -> vector<2x8x8xf32>
    "tpu.trace_stop"() : () -> ()
    %47 = vector.extract_strided_slice %15 {offsets = [0, 0, 8], sizes = [2, 8, 8], strides = [1, 1, 1]} : vector<2x8x32xf32> to vector<2x8x8xf32>
    %48 = arith.truncf %47 : vector<2x8x8xf32> to vector<2x8x8xbf16>
    %49 = vector.extract_strided_slice %17 {offsets = [0, 0, 8], sizes = [2, 8, 8], strides = [1, 1, 1]} : vector<2x8x32xf32> to vector<2x8x8xf32>
    %50 = arith.truncf %49 : vector<2x8x8xf32> to vector<2x8x8xbf16>
    %51 = vector.extract_strided_slice %19 {offsets = [0, 0, 8], sizes = [2, 8, 8], strides = [1, 1, 1]} : vector<2x8x32xf32> to vector<2x8x8xf32>
    %52 = arith.truncf %51 : vector<2x8x8xf32> to vector<2x8x8xbf16>
    "tpu.trace_start"() <{level = 10 : i32, message = "bqd,bkd->bqk"}> : () -> ()
    %cst_26 = arith.constant dense<0.000000e+00> : vector<2x8x8xf32>
    %53 = tpu.matmul %48, %50, %cst_26 {dimension_numbers = #tpu.dot_dimension_numbers<[2], [2], [1], [1], [0, 0, 0, 1, 1, 1], [0], [0]>} : vector<2x8x8xbf16>, vector<2x8x8xbf16>, vector<2x8x8xf32> -> vector<2x8x8xf32>
    "tpu.trace_stop"() : () -> ()
    %cst_27 = arith.constant 0.353553385 : f32
    %54 = vector.broadcast %cst_27 : f32 to vector<2x8x8xf32>
    %55 = arith.mulf %53, %54 : vector<2x8x8xf32>
    %56 = arith.addf %55, %20 : vector<2x8x8xf32>
    %cst_28 = arith.constant dense<0xFF800000> : vector<2x8xf32>
    %57 = vector.multi_reduction <maximumf>, %56, %cst_28 [2] : vector<2x8x8xf32> to vector<2x8xf32>
    %58 = vector.shape_cast %57 : vector<2x8xf32> to vector<2x8x1xf32>
    %59 = vector.broadcast %58 : vector<2x8x1xf32> to vector<2x8x8xf32>
    %60 = arith.subf %56, %59 : vector<2x8x8xf32>
    %61 = math.exp %60 : vector<2x8x8xf32>
    %cst_29 = arith.constant dense<0.000000e+00> : vector<2x8xf32>
    %62 = vector.multi_reduction <add>, %61, %cst_29 [2] : vector<2x8x8xf32> to vector<2x8xf32>
    %63 = vector.shape_cast %62 : vector<2x8xf32> to vector<2x8x1xf32>
    %64 = tpu.reciprocal %63 {approx = true} : vector<2x8x1xf32> -> vector<2x8x1xf32>
    %65 = vector.broadcast %64 : vector<2x8x1xf32> to vector<2x8x8xf32>
    %66 = arith.mulf %61, %65 : vector<2x8x8xf32>
    %67 = arith.truncf %66 : vector<2x8x8xf32> to vector<2x8x8xbf16>
    "tpu.trace_start"() <{level = 10 : i32, message = "bqk,bkd->bqd"}> : () -> ()
    %cst_30 = arith.constant dense<0.000000e+00> : vector<2x8x8xf32>
    %68 = tpu.matmul %67, %52, %cst_30 {dimension_numbers = #tpu.dot_dimension_numbers<[2], [1], [1], [2], [0, 0, 0, 1, 1, 2], [0], [0]>} : vector<2x8x8xbf16>, vector<2x8x8xbf16>, vector<2x8x8xf32> -> vector<2x8x8xf32>
    "tpu.trace_stop"() : () -> ()
    %69 = arith.addf %44, %66 : vector<2x8x8xf32>
    %70 = vector.extract_strided_slice %15 {offsets = [0, 0, 16], sizes = [2, 8, 8], strides = [1, 1, 1]} : vector<2x8x32xf32> to vector<2x8x8xf32>
    %71 = arith.truncf %70 : vector<2x8x8xf32> to vector<2x8x8xbf16>
    %72 = vector.extract_strided_slice %17 {offsets = [0, 0, 16], sizes = [2, 8, 8], strides = [1, 1, 1]} : vector<2x8x32xf32> to vector<2x8x8xf32>
    %73 = arith.truncf %72 : vector<2x8x8xf32> to vector<2x8x8xbf16>
    %74 = vector.extract_strided_slice %19 {offsets = [0, 0, 16], sizes = [2, 8, 8], strides = [1, 1, 1]} : vector<2x8x32xf32> to vector<2x8x8xf32>
    %75 = arith.truncf %74 : vector<2x8x8xf32> to vector<2x8x8xbf16>
    "tpu.trace_start"() <{level = 10 : i32, message = "bqd,bkd->bqk"}> : () -> ()
    %cst_31 = arith.constant dense<0.000000e+00> : vector<2x8x8xf32>
    %76 = tpu.matmul %71, %73, %cst_31 {dimension_numbers = #tpu.dot_dimension_numbers<[2], [2], [1], [1], [0, 0, 0, 1, 1, 1], [0], [0]>} : vector<2x8x8xbf16>, vector<2x8x8xbf16>, vector<2x8x8xf32> -> vector<2x8x8xf32>
    "tpu.trace_stop"() : () -> ()
    %cst_32 = arith.constant 0.353553385 : f32
    %77 = vector.broadcast %cst_32 : f32 to vector<2x8x8xf32>
    %78 = arith.mulf %76, %77 : vector<2x8x8xf32>
    %79 = arith.addf %78, %20 : vector<2x8x8xf32>
    %cst_33 = arith.constant dense<0xFF800000> : vector<2x8xf32>
    %80 = vector.multi_reduction <maximumf>, %79, %cst_33 [2] : vector<2x8x8xf32> to vector<2x8xf32>
    %81 = vector.shape_cast %80 : vector<2x8xf32> to vector<2x8x1xf32>
    %82 = vector.broadcast %81 : vector<2x8x1xf32> to vector<2x8x8xf32>
    %83 = arith.subf %79, %82 : vector<2x8x8xf32>
    %84 = math.exp %83 : vector<2x8x8xf32>
    %cst_34 = arith.constant dense<0.000000e+00> : vector<2x8xf32>
    %85 = vector.multi_reduction <add>, %84, %cst_34 [2] : vector<2x8x8xf32> to vector<2x8xf32>
    %86 = vector.shape_cast %85 : vector<2x8xf32> to vector<2x8x1xf32>
    %87 = tpu.reciprocal %86 {approx = true} : vector<2x8x1xf32> -> vector<2x8x1xf32>
    %88 = vector.broadcast %87 : vector<2x8x1xf32> to vector<2x8x8xf32>
    %89 = arith.mulf %84, %88 : vector<2x8x8xf32>
    %90 = arith.truncf %89 : vector<2x8x8xf32> to vector<2x8x8xbf16>
    "tpu.trace_start"() <{level = 10 : i32, message = "bqk,bkd->bqd"}> : () -> ()
    %cst_35 = arith.constant dense<0.000000e+00> : vector<2x8x8xf32>
    %91 = tpu.matmul %90, %75, %cst_35 {dimension_numbers = #tpu.dot_dimension_numbers<[2], [1], [1], [2], [0, 0, 0, 1, 1, 2], [0], [0]>} : vector<2x8x8xbf16>, vector<2x8x8xbf16>, vector<2x8x8xf32> -> vector<2x8x8xf32>
    "tpu.trace_stop"() : () -> ()
    %92 = arith.addf %69, %89 : vector<2x8x8xf32>
    %93 = vector.extract_strided_slice %15 {offsets = [0, 0, 24], sizes = [2, 8, 8], strides = [1, 1, 1]} : vector<2x8x32xf32> to vector<2x8x8xf32>
    %94 = arith.truncf %93 : vector<2x8x8xf32> to vector<2x8x8xbf16>
    %95 = vector.extract_strided_slice %17 {offsets = [0, 0, 24], sizes = [2, 8, 8], strides = [1, 1, 1]} : vector<2x8x32xf32> to vector<2x8x8xf32>
    %96 = arith.truncf %95 : vector<2x8x8xf32> to vector<2x8x8xbf16>
    %97 = vector.extract_strided_slice %19 {offsets = [0, 0, 24], sizes = [2, 8, 8], strides = [1, 1, 1]} : vector<2x8x32xf32> to vector<2x8x8xf32>
    %98 = arith.truncf %97 : vector<2x8x8xf32> to vector<2x8x8xbf16>
    "tpu.trace_start"() <{level = 10 : i32, message = "bqd,bkd->bqk"}> : () -> ()
    %cst_36 = arith.constant dense<0.000000e+00> : vector<2x8x8xf32>
    %99 = tpu.matmul %94, %96, %cst_36 {dimension_numbers = #tpu.dot_dimension_numbers<[2], [2], [1], [1], [0, 0, 0, 1, 1, 1], [0], [0]>} : vector<2x8x8xbf16>, vector<2x8x8xbf16>, vector<2x8x8xf32> -> vector<2x8x8xf32>
    "tpu.trace_stop"() : () -> ()
    %cst_37 = arith.constant 0.353553385 : f32
    %100 = vector.broadcast %cst_37 : f32 to vector<2x8x8xf32>
    %101 = arith.mulf %99, %100 : vector<2x8x8xf32>
    %102 = arith.addf %101, %20 : vector<2x8x8xf32>
    %cst_38 = arith.constant dense<0xFF800000> : vector<2x8xf32>
    %103 = vector.multi_reduction <maximumf>, %102, %cst_38 [2] : vector<2x8x8xf32> to vector<2x8xf32>
    %104 = vector.shape_cast %103 : vector<2x8xf32> to vector<2x8x1xf32>
    %105 = vector.broadcast %104 : vector<2x8x1xf32> to vector<2x8x8xf32>
    %106 = arith.subf %102, %105 : vector<2x8x8xf32>
    %107 = math.exp %106 : vector<2x8x8xf32>
    %cst_39 = arith.constant dense<0.000000e+00> : vector<2x8xf32>
    %108 = vector.multi_reduction <add>, %107, %cst_39 [2] : vector<2x8x8xf32> to vector<2x8xf32>
    %109 = vector.shape_cast %108 : vector<2x8xf32> to vector<2x8x1xf32>
    %110 = tpu.reciprocal %109 {approx = true} : vector<2x8x1xf32> -> vector<2x8x1xf32>
    %111 = vector.broadcast %110 : vector<2x8x1xf32> to vector<2x8x8xf32>
    %112 = arith.mulf %107, %111 : vector<2x8x8xf32>
    %113 = arith.truncf %112 : vector<2x8x8xf32> to vector<2x8x8xbf16>
    "tpu.trace_start"() <{level = 10 : i32, message = "bqk,bkd->bqd"}> : () -> ()
    %cst_40 = arith.constant dense<0.000000e+00> : vector<2x8x8xf32>
    %114 = tpu.matmul %113, %98, %cst_40 {dimension_numbers = #tpu.dot_dimension_numbers<[2], [1], [1], [2], [0, 0, 0, 1, 1, 2], [0], [0]>} : vector<2x8x8xbf16>, vector<2x8x8xbf16>, vector<2x8x8xf32> -> vector<2x8x8xf32>
    "tpu.trace_stop"() : () -> ()
    %115 = arith.addf %92, %112 : vector<2x8x8xf32>
    %116 = tpu.concatenate %46, %68, %91, %114 in 2 : vector<2x8x8xf32>, vector<2x8x8xf32>, vector<2x8x8xf32>, vector<2x8x8xf32> -> vector<2x8x32xf32>
    %117 = vector.shape_cast %116 : vector<2x8x32xf32> to vector<16x32xf32>
    %118 = arith.truncf %117 : vector<16x32xf32> to vector<16x32xbf16>
    %cst_41 = arith.constant dense<0.000000e+00> : vector<16x32xf32>
    %119 = tpu.matmul %118, %22, %cst_41 {dimension_numbers = #tpu.dot_dimension_numbers<[1], [0], [0], [1], [0, 0, 1, 1], [], []>} : vector<16x32xbf16>, vector<32x32xbf16>, vector<16x32xf32> -> vector<16x32xf32>
    %120 = vector.broadcast %24 : vector<1x32xf32> to vector<16x32xf32>
    %121 = arith.addf %119, %120 : vector<16x32xf32>
    %122 = vector.shape_cast %121 : vector<16x32xf32> to vector<2x8x32xf32>
    %cst_42 = arith.constant 2.500000e-01 : f32
    %123 = vector.broadcast %cst_42 : f32 to vector<2x8x8xf32>
    %124 = arith.mulf %115, %123 : vector<2x8x8xf32>
    %125 = arith.addf %3, %122 : vector<2x8x32xf32>
    %c0_43 = arith.constant 0 : index
    %c0_44 = arith.constant 0 : index
    %c0_45 = arith.constant 0 : index
    %126 = vector.load %arg21[%c0_43, %c0_44, %c0_45] : memref<1x1x32xf32, #tpu.memory_space<vmem>>, vector<1x1x32xf32>
    %127 = vector.shape_cast %126 : vector<1x1x32xf32> to vector<1x32xf32>
    %c0_46 = arith.constant 0 : index
    %c0_47 = arith.constant 0 : index
    %c0_48 = arith.constant 0 : index
    %128 = vector.load %arg22[%c0_46, %c0_47, %c0_48] : memref<1x1x32xf32, #tpu.memory_space<vmem>>, vector<1x1x32xf32>
    %129 = vector.shape_cast %128 : vector<1x1x32xf32> to vector<1x32xf32>
    %cst_49 = arith.constant dense<0.000000e+00> : vector<2x8xf32>
    %130 = vector.multi_reduction <add>, %125, %cst_49 [2] : vector<2x8x32xf32> to vector<2x8xf32>
    %131 = vector.shape_cast %130 : vector<2x8xf32> to vector<2x8x1xf32>
    %cst_50 = arith.constant 3.200000e+01 : f32
    %132 = vector.broadcast %cst_50 : f32 to vector<2x8x1xf32>
    %133 = arith.divf %131, %132 : vector<2x8x1xf32>
    %134 = vector.broadcast %133 : vector<2x8x1xf32> to vector<2x8x32xf32>
    %135 = arith.subf %125, %134 : vector<2x8x32xf32>
    %136 = arith.mulf %135, %135 : vector<2x8x32xf32>
    %cst_51 = arith.constant dense<0.000000e+00> : vector<2x8xf32>
    %137 = vector.multi_reduction <add>, %136, %cst_51 [2] : vector<2x8x32xf32> to vector<2x8xf32>
    %138 = vector.shape_cast %137 : vector<2x8xf32> to vector<2x8x1xf32>
    %cst_52 = arith.constant 3.200000e+01 : f32
    %139 = vector.broadcast %cst_52 : f32 to vector<2x8x1xf32>
    %140 = arith.divf %138, %139 : vector<2x8x1xf32>
    %141 = vector.broadcast %133 : vector<2x8x1xf32> to vector<2x8x32xf32>
    %142 = arith.subf %125, %141 : vector<2x8x32xf32>
    %cst_53 = arith.constant 9.99999974E-6 : f32
    %143 = vector.broadcast %cst_53 : f32 to vector<2x8x1xf32>
    %144 = arith.addf %140, %143 : vector<2x8x1xf32>
    %145 = math.rsqrt %144 : vector<2x8x1xf32>
    %146 = vector.broadcast %145 : vector<2x8x1xf32> to vector<2x8x32xf32>
    %147 = arith.mulf %142, %146 : vector<2x8x32xf32>
    %148 = vector.shape_cast %127 : vector<1x32xf32> to vector<1x1x32xf32>
    %149 = vector.broadcast %148 : vector<1x1x32xf32> to vector<2x8x32xf32>
    %150 = arith.mulf %147, %149 : vector<2x8x32xf32>
    %151 = vector.shape_cast %129 : vector<1x32xf32> to vector<1x1x32xf32>
    %152 = vector.broadcast %151 : vector<1x1x32xf32> to vector<2x8x32xf32>
    %153 = arith.addf %150, %152 : vector<2x8x32xf32>
    %154 = vector.shape_cast %153 : vector<2x8x32xf32> to vector<16x32xf32>
    %155 = arith.truncf %154 : vector<16x32xf32> to vector<16x32xbf16>
    %c0_54 = arith.constant 0 : index
    %c0_55 = arith.constant 0 : index
    %c0_56 = arith.constant 0 : index
    %156 = vector.load %arg11[%c0_54, %c0_55, %c0_56] : memref<1x32x32xbf16, #tpu.memory_space<vmem>>, vector<1x32x32xbf16>
    %157 = vector.shape_cast %156 : vector<1x32x32xbf16> to vector<32x32xbf16>
    %cst_57 = arith.constant dense<0.000000e+00> : vector<16x32xf32>
    %158 = tpu.matmul %155, %157, %cst_57 {dimension_numbers = #tpu.dot_dimension_numbers<[1], [0], [0], [1], [0, 0, 1, 1], [], []>} : vector<16x32xbf16>, vector<32x32xbf16>, vector<16x32xf32> -> vector<16x32xf32>
    %c0_58 = arith.constant 0 : index
    %c0_59 = arith.constant 0 : index
    %c0_60 = arith.constant 0 : index
    %159 = vector.load %arg12[%c0_58, %c0_59, %c0_60] : memref<1x1x32xf32, #tpu.memory_space<vmem>>, vector<1x1x32xf32>
    %160 = vector.shape_cast %159 : vector<1x1x32xf32> to vector<1x32xf32>
    %161 = vector.broadcast %160 : vector<1x32xf32> to vector<16x32xf32>
    %162 = arith.addf %158, %161 : vector<16x32xf32>
    %163 = vector.shape_cast %162 : vector<16x32xf32> to vector<2x8x32xf32>
    %164 = vector.shape_cast %4 : vector<2x8x32xf32> to vector<16x32xf32>
    %165 = arith.truncf %164 : vector<16x32xf32> to vector<16x32xbf16>
    %c0_61 = arith.constant 0 : index
    %c0_62 = arith.constant 0 : index
    %c0_63 = arith.constant 0 : index
    %166 = vector.load %arg13[%c0_61, %c0_62, %c0_63] : memref<1x32x64xbf16, #tpu.memory_space<vmem>>, vector<1x32x64xbf16>
    %167 = vector.shape_cast %166 : vector<1x32x64xbf16> to vector<32x64xbf16>
    %cst_64 = arith.constant dense<0.000000e+00> : vector<16x64xf32>
    %168 = tpu.matmul %165, %167, %cst_64 {dimension_numbers = #tpu.dot_dimension_numbers<[1], [0], [0], [1], [0, 0, 1, 1], [], []>} : vector<16x32xbf16>, vector<32x64xbf16>, vector<16x64xf32> -> vector<16x64xf32>
    %c0_65 = arith.constant 0 : index
    %c0_66 = arith.constant 0 : index
    %c0_67 = arith.constant 0 : index
    %169 = vector.load %arg14[%c0_65, %c0_66, %c0_67] : memref<1x1x64xf32, #tpu.memory_space<vmem>>, vector<1x1x64xf32>
    %170 = vector.shape_cast %169 : vector<1x1x64xf32> to vector<1x64xf32>
    %171 = vector.broadcast %170 : vector<1x64xf32> to vector<16x64xf32>
    %172 = arith.addf %168, %171 : vector<16x64xf32>
    %173 = vector.extract_strided_slice %172 {offsets = [0, 0], sizes = [16, 32], strides = [1, 1]} : vector<16x64xf32> to vector<16x32xf32>
    %174 = vector.shape_cast %173 : vector<16x32xf32> to vector<2x8x32xf32>
    %175 = vector.extract_strided_slice %172 {offsets = [0, 32], sizes = [16, 32], strides = [1, 1]} : vector<16x64xf32> to vector<16x32xf32>
    %176 = vector.shape_cast %175 : vector<16x32xf32> to vector<2x8x32xf32>
    %c0_68 = arith.constant 0 : index
    %c0_69 = arith.constant 0 : index
    %c0_70 = arith.constant 0 : index
    %177 = vector.load %arg5[%c0_68, %c0_69, %c0_70] : memref<2x8x8xf32, #tpu.memory_space<vmem>>, vector<2x8x8xf32>
    %c0_71 = arith.constant 0 : index
    %c0_72 = arith.constant 0 : index
    %c0_73 = arith.constant 0 : index
    %178 = vector.load %arg15[%c0_71, %c0_72, %c0_73] : memref<1x32x32xbf16, #tpu.memory_space<vmem>>, vector<1x32x32xbf16>
    %179 = vector.shape_cast %178 : vector<1x32x32xbf16> to vector<32x32xbf16>
    %c0_74 = arith.constant 0 : index
    %c0_75 = arith.constant 0 : index
    %c0_76 = arith.constant 0 : index
    %180 = vector.load %arg16[%c0_74, %c0_75, %c0_76] : memref<1x1x32xf32, #tpu.memory_space<vmem>>, vector<1x1x32xf32>
    %181 = vector.shape_cast %180 : vector<1x1x32xf32> to vector<1x32xf32>
    %182 = vector.extract_strided_slice %163 {offsets = [0, 0, 0], sizes = [2, 8, 8], strides = [1, 1, 1]} : vector<2x8x32xf32> to vector<2x8x8xf32>
    %183 = arith.truncf %182 : vector<2x8x8xf32> to vector<2x8x8xbf16>
    %184 = vector.extract_strided_slice %174 {offsets = [0, 0, 0], sizes = [2, 8, 8], strides = [1, 1, 1]} : vector<2x8x32xf32> to vector<2x8x8xf32>
    %185 = arith.truncf %184 : vector<2x8x8xf32> to vector<2x8x8xbf16>
    %186 = vector.extract_strided_slice %176 {offsets = [0, 0, 0], sizes = [2, 8, 8], strides = [1, 1, 1]} : vector<2x8x32xf32> to vector<2x8x8xf32>
    %187 = arith.truncf %186 : vector<2x8x8xf32> to vector<2x8x8xbf16>
    "tpu.trace_start"() <{level = 10 : i32, message = "bqd,bkd->bqk"}> : () -> ()
    %cst_77 = arith.constant dense<0.000000e+00> : vector<2x8x8xf32>
    %188 = tpu.matmul %183, %185, %cst_77 {dimension_numbers = #tpu.dot_dimension_numbers<[2], [2], [1], [1], [0, 0, 0, 1, 1, 1], [0], [0]>} : vector<2x8x8xbf16>, vector<2x8x8xbf16>, vector<2x8x8xf32> -> vector<2x8x8xf32>
    "tpu.trace_stop"() : () -> ()
    %cst_78 = arith.constant 0.353553385 : f32
    %189 = vector.broadcast %cst_78 : f32 to vector<2x8x8xf32>
    %190 = arith.mulf %188, %189 : vector<2x8x8xf32>
    %191 = arith.addf %190, %177 : vector<2x8x8xf32>
    %cst_79 = arith.constant dense<0xFF800000> : vector<2x8xf32>
    %192 = vector.multi_reduction <maximumf>, %191, %cst_79 [2] : vector<2x8x8xf32> to vector<2x8xf32>
    %193 = vector.shape_cast %192 : vector<2x8xf32> to vector<2x8x1xf32>
    %194 = vector.broadcast %193 : vector<2x8x1xf32> to vector<2x8x8xf32>
    %195 = arith.subf %191, %194 : vector<2x8x8xf32>
    %196 = math.exp %195 : vector<2x8x8xf32>
    %cst_80 = arith.constant dense<0.000000e+00> : vector<2x8xf32>
    %197 = vector.multi_reduction <add>, %196, %cst_80 [2] : vector<2x8x8xf32> to vector<2x8xf32>
    %198 = vector.shape_cast %197 : vector<2x8xf32> to vector<2x8x1xf32>
    %199 = tpu.reciprocal %198 {approx = true} : vector<2x8x1xf32> -> vector<2x8x1xf32>
    %200 = vector.broadcast %199 : vector<2x8x1xf32> to vector<2x8x8xf32>
    %201 = arith.mulf %196, %200 : vector<2x8x8xf32>
    %202 = arith.truncf %201 : vector<2x8x8xf32> to vector<2x8x8xbf16>
    "tpu.trace_start"() <{level = 10 : i32, message = "bqk,bkd->bqd"}> : () -> ()
    %cst_81 = arith.constant dense<0.000000e+00> : vector<2x8x8xf32>
    %203 = tpu.matmul %202, %187, %cst_81 {dimension_numbers = #tpu.dot_dimension_numbers<[2], [1], [1], [2], [0, 0, 0, 1, 1, 2], [0], [0]>} : vector<2x8x8xbf16>, vector<2x8x8xbf16>, vector<2x8x8xf32> -> vector<2x8x8xf32>
    "tpu.trace_stop"() : () -> ()
    %204 = vector.extract_strided_slice %163 {offsets = [0, 0, 8], sizes = [2, 8, 8], strides = [1, 1, 1]} : vector<2x8x32xf32> to vector<2x8x8xf32>
    %205 = arith.truncf %204 : vector<2x8x8xf32> to vector<2x8x8xbf16>
    %206 = vector.extract_strided_slice %174 {offsets = [0, 0, 8], sizes = [2, 8, 8], strides = [1, 1, 1]} : vector<2x8x32xf32> to vector<2x8x8xf32>
    %207 = arith.truncf %206 : vector<2x8x8xf32> to vector<2x8x8xbf16>
    %208 = vector.extract_strided_slice %176 {offsets = [0, 0, 8], sizes = [2, 8, 8], strides = [1, 1, 1]} : vector<2x8x32xf32> to vector<2x8x8xf32>
    %209 = arith.truncf %208 : vector<2x8x8xf32> to vector<2x8x8xbf16>
    "tpu.trace_start"() <{level = 10 : i32, message = "bqd,bkd->bqk"}> : () -> ()
    %cst_82 = arith.constant dense<0.000000e+00> : vector<2x8x8xf32>
    %210 = tpu.matmul %205, %207, %cst_82 {dimension_numbers = #tpu.dot_dimension_numbers<[2], [2], [1], [1], [0, 0, 0, 1, 1, 1], [0], [0]>} : vector<2x8x8xbf16>, vector<2x8x8xbf16>, vector<2x8x8xf32> -> vector<2x8x8xf32>
    "tpu.trace_stop"() : () -> ()
    %cst_83 = arith.constant 0.353553385 : f32
    %211 = vector.broadcast %cst_83 : f32 to vector<2x8x8xf32>
    %212 = arith.mulf %210, %211 : vector<2x8x8xf32>
    %213 = arith.addf %212, %177 : vector<2x8x8xf32>
    %cst_84 = arith.constant dense<0xFF800000> : vector<2x8xf32>
    %214 = vector.multi_reduction <maximumf>, %213, %cst_84 [2] : vector<2x8x8xf32> to vector<2x8xf32>
    %215 = vector.shape_cast %214 : vector<2x8xf32> to vector<2x8x1xf32>
    %216 = vector.broadcast %215 : vector<2x8x1xf32> to vector<2x8x8xf32>
    %217 = arith.subf %213, %216 : vector<2x8x8xf32>
    %218 = math.exp %217 : vector<2x8x8xf32>
    %cst_85 = arith.constant dense<0.000000e+00> : vector<2x8xf32>
    %219 = vector.multi_reduction <add>, %218, %cst_85 [2] : vector<2x8x8xf32> to vector<2x8xf32>
    %220 = vector.shape_cast %219 : vector<2x8xf32> to vector<2x8x1xf32>
    %221 = tpu.reciprocal %220 {approx = true} : vector<2x8x1xf32> -> vector<2x8x1xf32>
    %222 = vector.broadcast %221 : vector<2x8x1xf32> to vector<2x8x8xf32>
    %223 = arith.mulf %218, %222 : vector<2x8x8xf32>
    %224 = arith.truncf %223 : vector<2x8x8xf32> to vector<2x8x8xbf16>
    "tpu.trace_start"() <{level = 10 : i32, message = "bqk,bkd->bqd"}> : () -> ()
    %cst_86 = arith.constant dense<0.000000e+00> : vector<2x8x8xf32>
    %225 = tpu.matmul %224, %209, %cst_86 {dimension_numbers = #tpu.dot_dimension_numbers<[2], [1], [1], [2], [0, 0, 0, 1, 1, 2], [0], [0]>} : vector<2x8x8xbf16>, vector<2x8x8xbf16>, vector<2x8x8xf32> -> vector<2x8x8xf32>
    "tpu.trace_stop"() : () -> ()
    %226 = arith.addf %201, %223 : vector<2x8x8xf32>
    %227 = vector.extract_strided_slice %163 {offsets = [0, 0, 16], sizes = [2, 8, 8], strides = [1, 1, 1]} : vector<2x8x32xf32> to vector<2x8x8xf32>
    %228 = arith.truncf %227 : vector<2x8x8xf32> to vector<2x8x8xbf16>
    %229 = vector.extract_strided_slice %174 {offsets = [0, 0, 16], sizes = [2, 8, 8], strides = [1, 1, 1]} : vector<2x8x32xf32> to vector<2x8x8xf32>
    %230 = arith.truncf %229 : vector<2x8x8xf32> to vector<2x8x8xbf16>
    %231 = vector.extract_strided_slice %176 {offsets = [0, 0, 16], sizes = [2, 8, 8], strides = [1, 1, 1]} : vector<2x8x32xf32> to vector<2x8x8xf32>
    %232 = arith.truncf %231 : vector<2x8x8xf32> to vector<2x8x8xbf16>
    "tpu.trace_start"() <{level = 10 : i32, message = "bqd,bkd->bqk"}> : () -> ()
    %cst_87 = arith.constant dense<0.000000e+00> : vector<2x8x8xf32>
    %233 = tpu.matmul %228, %230, %cst_87 {dimension_numbers = #tpu.dot_dimension_numbers<[2], [2], [1], [1], [0, 0, 0, 1, 1, 1], [0], [0]>} : vector<2x8x8xbf16>, vector<2x8x8xbf16>, vector<2x8x8xf32> -> vector<2x8x8xf32>
    "tpu.trace_stop"() : () -> ()
    %cst_88 = arith.constant 0.353553385 : f32
    %234 = vector.broadcast %cst_88 : f32 to vector<2x8x8xf32>
    %235 = arith.mulf %233, %234 : vector<2x8x8xf32>
    %236 = arith.addf %235, %177 : vector<2x8x8xf32>
    %cst_89 = arith.constant dense<0xFF800000> : vector<2x8xf32>
    %237 = vector.multi_reduction <maximumf>, %236, %cst_89 [2] : vector<2x8x8xf32> to vector<2x8xf32>
    %238 = vector.shape_cast %237 : vector<2x8xf32> to vector<2x8x1xf32>
    %239 = vector.broadcast %238 : vector<2x8x1xf32> to vector<2x8x8xf32>
    %240 = arith.subf %236, %239 : vector<2x8x8xf32>
    %241 = math.exp %240 : vector<2x8x8xf32>
    %cst_90 = arith.constant dense<0.000000e+00> : vector<2x8xf32>
    %242 = vector.multi_reduction <add>, %241, %cst_90 [2] : vector<2x8x8xf32> to vector<2x8xf32>
    %243 = vector.shape_cast %242 : vector<2x8xf32> to vector<2x8x1xf32>
    %244 = tpu.reciprocal %243 {approx = true} : vector<2x8x1xf32> -> vector<2x8x1xf32>
    %245 = vector.broadcast %244 : vector<2x8x1xf32> to vector<2x8x8xf32>
    %246 = arith.mulf %241, %245 : vector<2x8x8xf32>
    %247 = arith.truncf %246 : vector<2x8x8xf32> to vector<2x8x8xbf16>
    "tpu.trace_start"() <{level = 10 : i32, message = "bqk,bkd->bqd"}> : () -> ()
    %cst_91 = arith.constant dense<0.000000e+00> : vector<2x8x8xf32>
    %248 = tpu.matmul %247, %232, %cst_91 {dimension_numbers = #tpu.dot_dimension_numbers<[2], [1], [1], [2], [0, 0, 0, 1, 1, 2], [0], [0]>} : vector<2x8x8xbf16>, vector<2x8x8xbf16>, vector<2x8x8xf32> -> vector<2x8x8xf32>
    "tpu.trace_stop"() : () -> ()
    %249 = arith.addf %226, %246 : vector<2x8x8xf32>
    %250 = vector.extract_strided_slice %163 {offsets = [0, 0, 24], sizes = [2, 8, 8], strides = [1, 1, 1]} : vector<2x8x32xf32> to vector<2x8x8xf32>
    %251 = arith.truncf %250 : vector<2x8x8xf32> to vector<2x8x8xbf16>
    %252 = vector.extract_strided_slice %174 {offsets = [0, 0, 24], sizes = [2, 8, 8], strides = [1, 1, 1]} : vector<2x8x32xf32> to vector<2x8x8xf32>
    %253 = arith.truncf %252 : vector<2x8x8xf32> to vector<2x8x8xbf16>
    %254 = vector.extract_strided_slice %176 {offsets = [0, 0, 24], sizes = [2, 8, 8], strides = [1, 1, 1]} : vector<2x8x32xf32> to vector<2x8x8xf32>
    %255 = arith.truncf %254 : vector<2x8x8xf32> to vector<2x8x8xbf16>
    "tpu.trace_start"() <{level = 10 : i32, message = "bqd,bkd->bqk"}> : () -> ()
    %cst_92 = arith.constant dense<0.000000e+00> : vector<2x8x8xf32>
    %256 = tpu.matmul %251, %253, %cst_92 {dimension_numbers = #tpu.dot_dimension_numbers<[2], [2], [1], [1], [0, 0, 0, 1, 1, 1], [0], [0]>} : vector<2x8x8xbf16>, vector<2x8x8xbf16>, vector<2x8x8xf32> -> vector<2x8x8xf32>
    "tpu.trace_stop"() : () -> ()
    %cst_93 = arith.constant 0.353553385 : f32
    %257 = vector.broadcast %cst_93 : f32 to vector<2x8x8xf32>
    %258 = arith.mulf %256, %257 : vector<2x8x8xf32>
    %259 = arith.addf %258, %177 : vector<2x8x8xf32>
    %cst_94 = arith.constant dense<0xFF800000> : vector<2x8xf32>
    %260 = vector.multi_reduction <maximumf>, %259, %cst_94 [2] : vector<2x8x8xf32> to vector<2x8xf32>
    %261 = vector.shape_cast %260 : vector<2x8xf32> to vector<2x8x1xf32>
    %262 = vector.broadcast %261 : vector<2x8x1xf32> to vector<2x8x8xf32>
    %263 = arith.subf %259, %262 : vector<2x8x8xf32>
    %264 = math.exp %263 : vector<2x8x8xf32>
    %cst_95 = arith.constant dense<0.000000e+00> : vector<2x8xf32>
    %265 = vector.multi_reduction <add>, %264, %cst_95 [2] : vector<2x8x8xf32> to vector<2x8xf32>
    %266 = vector.shape_cast %265 : vector<2x8xf32> to vector<2x8x1xf32>
    %267 = tpu.reciprocal %266 {approx = true} : vector<2x8x1xf32> -> vector<2x8x1xf32>
    %268 = vector.broadcast %267 : vector<2x8x1xf32> to vector<2x8x8xf32>
    %269 = arith.mulf %264, %268 : vector<2x8x8xf32>
    %270 = arith.truncf %269 : vector<2x8x8xf32> to vector<2x8x8xbf16>
    "tpu.trace_start"() <{level = 10 : i32, message = "bqk,bkd->bqd"}> : () -> ()
    %cst_96 = arith.constant dense<0.000000e+00> : vector<2x8x8xf32>
    %271 = tpu.matmul %270, %255, %cst_96 {dimension_numbers = #tpu.dot_dimension_numbers<[2], [1], [1], [2], [0, 0, 0, 1, 1, 2], [0], [0]>} : vector<2x8x8xbf16>, vector<2x8x8xbf16>, vector<2x8x8xf32> -> vector<2x8x8xf32>
    "tpu.trace_stop"() : () -> ()
    %272 = arith.addf %249, %269 : vector<2x8x8xf32>
    %273 = tpu.concatenate %203, %225, %248, %271 in 2 : vector<2x8x8xf32>, vector<2x8x8xf32>, vector<2x8x8xf32>, vector<2x8x8xf32> -> vector<2x8x32xf32>
    %274 = vector.shape_cast %273 : vector<2x8x32xf32> to vector<16x32xf32>
    %275 = arith.truncf %274 : vector<16x32xf32> to vector<16x32xbf16>
    %cst_97 = arith.constant dense<0.000000e+00> : vector<16x32xf32>
    %276 = tpu.matmul %275, %179, %cst_97 {dimension_numbers = #tpu.dot_dimension_numbers<[1], [0], [0], [1], [0, 0, 1, 1], [], []>} : vector<16x32xbf16>, vector<32x32xbf16>, vector<16x32xf32> -> vector<16x32xf32>
    %277 = vector.broadcast %181 : vector<1x32xf32> to vector<16x32xf32>
    %278 = arith.addf %276, %277 : vector<16x32xf32>
    %279 = vector.shape_cast %278 : vector<16x32xf32> to vector<2x8x32xf32>
    %cst_98 = arith.constant 2.500000e-01 : f32
    %280 = vector.broadcast %cst_98 : f32 to vector<2x8x8xf32>
    %281 = arith.mulf %272, %280 : vector<2x8x8xf32>
    %282 = arith.addf %153, %279 : vector<2x8x32xf32>
    %c0_99 = arith.constant 0 : index
    %c0_100 = arith.constant 0 : index
    %c0_101 = arith.constant 0 : index
    %283 = vector.load %arg23[%c0_99, %c0_100, %c0_101] : memref<1x1x32xf32, #tpu.memory_space<vmem>>, vector<1x1x32xf32>
    %284 = vector.shape_cast %283 : vector<1x1x32xf32> to vector<1x32xf32>
    %c0_102 = arith.constant 0 : index
    %c0_103 = arith.constant 0 : index
    %c0_104 = arith.constant 0 : index
    %285 = vector.load %arg24[%c0_102, %c0_103, %c0_104] : memref<1x1x32xf32, #tpu.memory_space<vmem>>, vector<1x1x32xf32>
    %286 = vector.shape_cast %285 : vector<1x1x32xf32> to vector<1x32xf32>
    %cst_105 = arith.constant dense<0.000000e+00> : vector<2x8xf32>
    %287 = vector.multi_reduction <add>, %282, %cst_105 [2] : vector<2x8x32xf32> to vector<2x8xf32>
    %288 = vector.shape_cast %287 : vector<2x8xf32> to vector<2x8x1xf32>
    %cst_106 = arith.constant 3.200000e+01 : f32
    %289 = vector.broadcast %cst_106 : f32 to vector<2x8x1xf32>
    %290 = arith.divf %288, %289 : vector<2x8x1xf32>
    %291 = vector.broadcast %290 : vector<2x8x1xf32> to vector<2x8x32xf32>
    %292 = arith.subf %282, %291 : vector<2x8x32xf32>
    %293 = arith.mulf %292, %292 : vector<2x8x32xf32>
    %cst_107 = arith.constant dense<0.000000e+00> : vector<2x8xf32>
    %294 = vector.multi_reduction <add>, %293, %cst_107 [2] : vector<2x8x32xf32> to vector<2x8xf32>
    %295 = vector.shape_cast %294 : vector<2x8xf32> to vector<2x8x1xf32>
    %cst_108 = arith.constant 3.200000e+01 : f32
    %296 = vector.broadcast %cst_108 : f32 to vector<2x8x1xf32>
    %297 = arith.divf %295, %296 : vector<2x8x1xf32>
    %298 = vector.broadcast %290 : vector<2x8x1xf32> to vector<2x8x32xf32>
    %299 = arith.subf %282, %298 : vector<2x8x32xf32>
    %cst_109 = arith.constant 9.99999974E-6 : f32
    %300 = vector.broadcast %cst_109 : f32 to vector<2x8x1xf32>
    %301 = arith.addf %297, %300 : vector<2x8x1xf32>
    %302 = math.rsqrt %301 : vector<2x8x1xf32>
    %303 = vector.broadcast %302 : vector<2x8x1xf32> to vector<2x8x32xf32>
    %304 = arith.mulf %299, %303 : vector<2x8x32xf32>
    %305 = vector.shape_cast %284 : vector<1x32xf32> to vector<1x1x32xf32>
    %306 = vector.broadcast %305 : vector<1x1x32xf32> to vector<2x8x32xf32>
    %307 = arith.mulf %304, %306 : vector<2x8x32xf32>
    %308 = vector.shape_cast %286 : vector<1x32xf32> to vector<1x1x32xf32>
    %309 = vector.broadcast %308 : vector<1x1x32xf32> to vector<2x8x32xf32>
    %310 = arith.addf %307, %309 : vector<2x8x32xf32>
    %311 = vector.shape_cast %310 : vector<2x8x32xf32> to vector<16x32xf32>
    %312 = arith.truncf %311 : vector<16x32xf32> to vector<16x32xbf16>
    %c0_110 = arith.constant 0 : index
    %c0_111 = arith.constant 0 : index
    %c0_112 = arith.constant 0 : index
    %313 = vector.load %arg17[%c0_110, %c0_111, %c0_112] : memref<1x32x64xbf16, #tpu.memory_space<vmem>>, vector<1x32x64xbf16>
    %314 = vector.shape_cast %313 : vector<1x32x64xbf16> to vector<32x64xbf16>
    %cst_113 = arith.constant dense<0.000000e+00> : vector<16x64xf32>
    %315 = tpu.matmul %312, %314, %cst_113 {dimension_numbers = #tpu.dot_dimension_numbers<[1], [0], [0], [1], [0, 0, 1, 1], [], []>} : vector<16x32xbf16>, vector<32x64xbf16>, vector<16x64xf32> -> vector<16x64xf32>
    %c0_114 = arith.constant 0 : index
    %c0_115 = arith.constant 0 : index
    %c0_116 = arith.constant 0 : index
    %316 = vector.load %arg18[%c0_114, %c0_115, %c0_116] : memref<1x1x64xf32, #tpu.memory_space<vmem>>, vector<1x1x64xf32>
    %317 = vector.shape_cast %316 : vector<1x1x64xf32> to vector<1x64xf32>
    %318 = vector.broadcast %317 : vector<1x64xf32> to vector<16x64xf32>
    %319 = arith.addf %315, %318 : vector<16x64xf32>
    %cst_117 = arith.constant 0.000000e+00 : f32
    %320 = vector.broadcast %cst_117 : f32 to vector<16x64xf32>
    %321 = arith.maximumf %319, %320 : vector<16x64xf32>
    %322 = arith.truncf %321 : vector<16x64xf32> to vector<16x64xbf16>
    %c0_118 = arith.constant 0 : index
    %c0_119 = arith.constant 0 : index
    %c0_120 = arith.constant 0 : index
    %323 = vector.load %arg19[%c0_118, %c0_119, %c0_120] : memref<1x64x32xbf16, #tpu.memory_space<vmem>>, vector<1x64x32xbf16>
    %324 = vector.shape_cast %323 : vector<1x64x32xbf16> to vector<64x32xbf16>
    %cst_121 = arith.constant dense<0.000000e+00> : vector<16x32xf32>
    %325 = tpu.matmul %322, %324, %cst_121 {dimension_numbers = #tpu.dot_dimension_numbers<[1], [0], [0], [1], [0, 0, 1, 1], [], []>} : vector<16x64xbf16>, vector<64x32xbf16>, vector<16x32xf32> -> vector<16x32xf32>
    %c0_122 = arith.constant 0 : index
    %c0_123 = arith.constant 0 : index
    %c0_124 = arith.constant 0 : index
    %326 = vector.load %arg20[%c0_122, %c0_123, %c0_124] : memref<1x1x32xf32, #tpu.memory_space<vmem>>, vector<1x1x32xf32>
    %327 = vector.shape_cast %326 : vector<1x1x32xf32> to vector<1x32xf32>
    %328 = vector.broadcast %327 : vector<1x32xf32> to vector<16x32xf32>
    %329 = arith.addf %325, %328 : vector<16x32xf32>
    %330 = vector.shape_cast %329 : vector<16x32xf32> to vector<2x8x32xf32>
    %331 = arith.addf %310, %330 : vector<2x8x32xf32>
    %c0_125 = arith.constant 0 : index
    %c0_126 = arith.constant 0 : index
    %c0_127 = arith.constant 0 : index
    %332 = vector.load %arg25[%c0_125, %c0_126, %c0_127] : memref<1x1x32xf32, #tpu.memory_space<vmem>>, vector<1x1x32xf32>
    %333 = vector.shape_cast %332 : vector<1x1x32xf32> to vector<1x32xf32>
    %c0_128 = arith.constant 0 : index
    %c0_129 = arith.constant 0 : index
    %c0_130 = arith.constant 0 : index
    %334 = vector.load %arg26[%c0_128, %c0_129, %c0_130] : memref<1x1x32xf32, #tpu.memory_space<vmem>>, vector<1x1x32xf32>
    %335 = vector.shape_cast %334 : vector<1x1x32xf32> to vector<1x32xf32>
    %cst_131 = arith.constant dense<0.000000e+00> : vector<2x8xf32>
    %336 = vector.multi_reduction <add>, %331, %cst_131 [2] : vector<2x8x32xf32> to vector<2x8xf32>
    %337 = vector.shape_cast %336 : vector<2x8xf32> to vector<2x8x1xf32>
    %cst_132 = arith.constant 3.200000e+01 : f32
    %338 = vector.broadcast %cst_132 : f32 to vector<2x8x1xf32>
    %339 = arith.divf %337, %338 : vector<2x8x1xf32>
    %340 = vector.broadcast %339 : vector<2x8x1xf32> to vector<2x8x32xf32>
    %341 = arith.subf %331, %340 : vector<2x8x32xf32>
    %342 = arith.mulf %341, %341 : vector<2x8x32xf32>
    %cst_133 = arith.constant dense<0.000000e+00> : vector<2x8xf32>
    %343 = vector.multi_reduction <add>, %342, %cst_133 [2] : vector<2x8x32xf32> to vector<2x8xf32>
    %344 = vector.shape_cast %343 : vector<2x8xf32> to vector<2x8x1xf32>
    %cst_134 = arith.constant 3.200000e+01 : f32
    %345 = vector.broadcast %cst_134 : f32 to vector<2x8x1xf32>
    %346 = arith.divf %344, %345 : vector<2x8x1xf32>
    %347 = vector.broadcast %339 : vector<2x8x1xf32> to vector<2x8x32xf32>
    %348 = arith.subf %331, %347 : vector<2x8x32xf32>
    %cst_135 = arith.constant 9.99999974E-6 : f32
    %349 = vector.broadcast %cst_135 : f32 to vector<2x8x1xf32>
    %350 = arith.addf %346, %349 : vector<2x8x1xf32>
    %351 = math.rsqrt %350 : vector<2x8x1xf32>
    %352 = vector.broadcast %351 : vector<2x8x1xf32> to vector<2x8x32xf32>
    %353 = arith.mulf %348, %352 : vector<2x8x32xf32>
    %354 = vector.shape_cast %333 : vector<1x32xf32> to vector<1x1x32xf32>
    %355 = vector.broadcast %354 : vector<1x1x32xf32> to vector<2x8x32xf32>
    %356 = arith.mulf %353, %355 : vector<2x8x32xf32>
    %357 = vector.shape_cast %335 : vector<1x32xf32> to vector<1x1x32xf32>
    %358 = vector.broadcast %357 : vector<1x1x32xf32> to vector<2x8x32xf32>
    %359 = arith.addf %356, %358 : vector<2x8x32xf32>
    %c0_136 = arith.constant 0 : index
    %c0_137 = arith.constant 0 : index
    %c0_138 = arith.constant 0 : index
    %360 = vector.load %arg27[%c0_136, %c0_137, %c0_138] : memref<2x8x32xf32, #tpu.memory_space<vmem>>, vector<2x8x32xf32>
    tpu.vector_store %arg27[%c0_136, %c0_137, %c0_138], %359 {strides = array<i32>} : memref<2x8x32xf32, #tpu.memory_space<vmem>>, vector<2x8x32xf32>,
    %c0_139 = arith.constant 0 : index
    %c0_140 = arith.constant 0 : index
    %c0_141 = arith.constant 0 : index
    %c0_142 = arith.constant 0 : index
    %361 = vector.load %arg28[%c0_139, %c0_140, %c0_141, %c0_142] : memref<1x2x8x8xf32, #tpu.memory_space<vmem>>, vector<1x2x8x8xf32>
    %362 = vector.shape_cast %361 : vector<1x2x8x8xf32> to vector<2x8x8xf32>
    %363 = vector.shape_cast %281 : vector<2x8x8xf32> to vector<1x2x8x8xf32>
    tpu.vector_store %arg28[%c0_139, %c0_140, %c0_141, %c0_142], %363 {strides = array<i32>} : memref<1x2x8x8xf32, #tpu.memory_space<vmem>>, vector<1x2x8x8xf32>,
    %c0_143 = arith.constant 0 : index
    %c0_144 = arith.constant 0 : index
    %c0_145 = arith.constant 0 : index
    %c0_146 = arith.constant 0 : index
    %364 = vector.load %arg29[%c0_143, %c0_144, %c0_145, %c0_146] : memref<1x2x8x8xf32, #tpu.memory_space<vmem>>, vector<1x2x8x8xf32>
    %365 = vector.shape_cast %364 : vector<1x2x8x8xf32> to vector<2x8x8xf32>
    %366 = vector.shape_cast %124 : vector<2x8x8xf32> to vector<1x2x8x8xf32>
    tpu.vector_store %arg29[%c0_143, %c0_144, %c0_145, %c0_146], %366 {strides = array<i32>} : memref<1x2x8x8xf32, #tpu.memory_space<vmem>>, vector<1x2x8x8xf32>,
    %c0_147 = arith.constant 0 : index
    %c0_148 = arith.constant 0 : index
    %c0_149 = arith.constant 0 : index
    %367 = vector.load %arg6[%c0_147, %c0_148, %c0_149] : memref<2x8x8xf32, #tpu.memory_space<vmem>>, vector<2x8x8xf32>
    %368 = arith.mulf %281, %367 : vector<2x8x8xf32>
    %369 = vector.shape_cast %368 : vector<2x8x8xf32> to vector<1x2x8x8xf32>
    %cst_150 = arith.constant dense<0.000000e+00> : vector<1xf32>
    %370 = vector.multi_reduction <add>, %369, %cst_150 [1, 2, 3] : vector<1x2x8x8xf32> to vector<1xf32>
    %371 = vector.shape_cast %370 : vector<1xf32> to vector<1x1x1x1xf32>
    %372 = vector.extract %371[0, 0, 0, 0] : f32 from vector<1x1x1x1xf32>
    %c2_i32 = arith.constant 2 : i32
    %373 = arith.cmpi slt, %arg1, %c2_i32 : i32
    %374 = arith.extui %373 : i1 to i32
    %c0_i32_151 = arith.constant 0 : i32
    %375 = arith.cmpi ne, %374, %c0_i32_151 : i32
    scf.if %375 {
      %c0_152 = arith.constant 0 : index
      %c0_153 = arith.constant 0 : index
      %c0_154 = arith.constant 0 : index
      %376 = vector.load %arg30[%c0_152, %c0_153, %c0_154] : memref<1x1x1xf32, #tpu.memory_space<vmem>>, vector<1x1x1xf32>
      %377 = vector.broadcast %372 : f32 to vector<1x1x1xf32>
      %378 = arith.addf %376, %377 : vector<1x1x1xf32>
      %c0_155 = arith.constant 0 : index
      %c0_156 = arith.constant 0 : index
      %c0_157 = arith.constant 0 : index
      %379 = vector.load %arg30[%c0_155, %c0_156, %c0_157] : memref<1x1x1xf32, #tpu.memory_space<vmem>>, vector<1x1x1xf32>
      tpu.vector_store %arg30[%c0_155, %c0_156, %c0_157], %378 {strides = array<i32>} : memref<1x1x1xf32, #tpu.memory_space<vmem>>, vector<1x1x1xf32>,
    } else {
    }
    return
  }
  func.func @transform_0(%arg0: i32, %arg1: i32) -> (i32, i32, i32) {
    %c0_i32 = arith.constant 0 : i32
    %c0_i32_0 = arith.constant 0 : i32
    %c0_i32_1 = arith.constant 0 : i32
    return %arg0, %c0_i32, %c0_i32_0 : i32, i32, i32
  }
  func.func @transform_1(%arg0: i32, %arg1: i32) -> (i32, i32, i32) {
    %c0_i32 = arith.constant 0 : i32
    %c0_i32_0 = arith.constant 0 : i32
    %c0_i32_1 = arith.constant 0 : i32
    return %arg0, %c0_i32, %c0_i32_0 : i32, i32, i32
  }
  func.func @transform_2(%arg0: i32, %arg1: i32) -> (i32, i32, i32) {
    %c0_i32 = arith.constant 0 : i32
    %c0_i32_0 = arith.constant 0 : i32
    %c0_i32_1 = arith.constant 0 : i32
    return %arg0, %c0_i32, %c0_i32_0 : i32, i32, i32
  }
  func.func @transform_3(%arg0: i32, %arg1: i32) -> (i32, i32, i32) {
    %c0_i32 = arith.constant 0 : i32
    %c0_i32_0 = arith.constant 0 : i32
    %c0_i32_1 = arith.constant 0 : i32
    return %arg0, %c0_i32, %c0_i32_0 : i32, i32, i32
  }
  func.func @transform_4(%arg0: i32, %arg1: i32) -> (i32, i32, i32) {
    %c0_i32 = arith.constant 0 : i32
    %c0_i32_0 = arith.constant 0 : i32
    %c0_i32_1 = arith.constant 0 : i32
    return %arg0, %c0_i32, %c0_i32_0 : i32, i32, i32
  }
  func.func @transform_5(%arg0: i32, %arg1: i32) -> (i32, i32, i32) {
    %c0_i32 = arith.constant 0 : i32
    %c0_i32_0 = arith.constant 0 : i32
    %c0_i32_1 = arith.constant 0 : i32
    return %arg1, %c0_i32, %c0_i32_0 : i32, i32, i32
  }
  func.func @transform_6(%arg0: i32, %arg1: i32) -> (i32, i32, i32) {
    %c0_i32 = arith.constant 0 : i32
    %c0_i32_0 = arith.constant 0 : i32
    %c0_i32_1 = arith.constant 0 : i32
    return %arg1, %c0_i32, %c0_i32_0 : i32, i32, i32
  }
  func.func @transform_7(%arg0: i32, %arg1: i32) -> (i32, i32, i32) {
    %c0_i32 = arith.constant 0 : i32
    %c0_i32_0 = arith.constant 0 : i32
    %c0_i32_1 = arith.constant 0 : i32
    return %arg1, %c0_i32, %c0_i32_0 : i32, i32, i32
  }
  func.func @transform_8(%arg0: i32, %arg1: i32) -> (i32, i32, i32) {
    %c0_i32 = arith.constant 0 : i32
    %c0_i32_0 = arith.constant 0 : i32
    %c0_i32_1 = arith.constant 0 : i32
    return %arg1, %c0_i32, %c0_i32_0 : i32, i32, i32
  }
  func.func @transform_9(%arg0: i32, %arg1: i32) -> (i32, i32, i32) {
    %c0_i32 = arith.constant 0 : i32
    %c0_i32_0 = arith.constant 0 : i32
    %c0_i32_1 = arith.constant 0 : i32
    return %arg1, %c0_i32, %c0_i32_0 : i32, i32, i32
  }
  func.func @transform_10(%arg0: i32, %arg1: i32) -> (i32, i32, i32) {
    %c0_i32 = arith.constant 0 : i32
    %c0_i32_0 = arith.constant 0 : i32
    %c0_i32_1 = arith.constant 0 : i32
    return %arg1, %c0_i32, %c0_i32_0 : i32, i32, i32
  }
  func.func @transform_11(%arg0: i32, %arg1: i32) -> (i32, i32, i32) {
    %c0_i32 = arith.constant 0 : i32
    %c0_i32_0 = arith.constant 0 : i32
    %c0_i32_1 = arith.constant 0 : i32
    return %arg1, %c0_i32, %c0_i32_0 : i32, i32, i32
  }
  func.func @transform_12(%arg0: i32, %arg1: i32) -> (i32, i32, i32) {
    %c0_i32 = arith.constant 0 : i32
    %c0_i32_0 = arith.constant 0 : i32
    %c0_i32_1 = arith.constant 0 : i32
    return %arg1, %c0_i32, %c0_i32_0 : i32, i32, i32
  }
  func.func @transform_13(%arg0: i32, %arg1: i32) -> (i32, i32, i32) {
    %c0_i32 = arith.constant 0 : i32
    %c0_i32_0 = arith.constant 0 : i32
    %c0_i32_1 = arith.constant 0 : i32
    return %arg1, %c0_i32, %c0_i32_0 : i32, i32, i32
  }
  func.func @transform_14(%arg0: i32, %arg1: i32) -> (i32, i32, i32) {
    %c0_i32 = arith.constant 0 : i32
    %c0_i32_0 = arith.constant 0 : i32
    %c0_i32_1 = arith.constant 0 : i32
    return %arg1, %c0_i32, %c0_i32_0 : i32, i32, i32
  }
  func.func @transform_15(%arg0: i32, %arg1: i32) -> (i32, i32, i32) {
    %c0_i32 = arith.constant 0 : i32
    %c0_i32_0 = arith.constant 0 : i32
    %c0_i32_1 = arith.constant 0 : i32
    return %arg1, %c0_i32, %c0_i32_0 : i32, i32, i32
  }
  func.func @transform_16(%arg0: i32, %arg1: i32) -> (i32, i32, i32) {
    %c0_i32 = arith.constant 0 : i32
    %c0_i32_0 = arith.constant 0 : i32
    %c0_i32_1 = arith.constant 0 : i32
    return %arg1, %c0_i32, %c0_i32_0 : i32, i32, i32
  }
  func.func @transform_17(%arg0: i32, %arg1: i32) -> (i32, i32, i32) {
    %c0_i32 = arith.constant 0 : i32
    %c0_i32_0 = arith.constant 0 : i32
    %c0_i32_1 = arith.constant 0 : i32
    return %arg1, %c0_i32, %c0_i32_0 : i32, i32, i32
  }
  func.func @transform_18(%arg0: i32, %arg1: i32) -> (i32, i32, i32) {
    %c0_i32 = arith.constant 0 : i32
    %c0_i32_0 = arith.constant 0 : i32
    %c0_i32_1 = arith.constant 0 : i32
    return %arg1, %c0_i32, %c0_i32_0 : i32, i32, i32
  }
  func.func @transform_19(%arg0: i32, %arg1: i32) -> (i32, i32, i32) {
    %c0_i32 = arith.constant 0 : i32
    %c0_i32_0 = arith.constant 0 : i32
    %c0_i32_1 = arith.constant 0 : i32
    return %arg1, %c0_i32, %c0_i32_0 : i32, i32, i32
  }
  func.func @transform_20(%arg0: i32, %arg1: i32) -> (i32, i32, i32) {
    %c0_i32 = arith.constant 0 : i32
    %c0_i32_0 = arith.constant 0 : i32
    %c0_i32_1 = arith.constant 0 : i32
    return %arg1, %c0_i32, %c0_i32_0 : i32, i32, i32
  }
  func.func @transform_21(%arg0: i32, %arg1: i32) -> (i32, i32, i32) {
    %c0_i32 = arith.constant 0 : i32
    %c0_i32_0 = arith.constant 0 : i32
    %c0_i32_1 = arith.constant 0 : i32
    return %arg1, %c0_i32, %c0_i32_0 : i32, i32, i32
  }
  func.func @transform_22(%arg0: i32, %arg1: i32) -> (i32, i32, i32) {
    %c0_i32 = arith.constant 0 : i32
    %c0_i32_0 = arith.constant 0 : i32
    %c0_i32_1 = arith.constant 0 : i32
    return %arg1, %c0_i32, %c0_i32_0 : i32, i32, i32
  }
  func.func @transform_23(%arg0: i32, %arg1: i32) -> (i32, i32, i32) {
    %c0_i32 = arith.constant 0 : i32
    %c0_i32_0 = arith.constant 0 : i32
    %c0_i32_1 = arith.constant 0 : i32
    return %arg1, %c0_i32, %c0_i32_0 : i32, i32, i32
  }
  func.func @transform_24(%arg0: i32, %arg1: i32) -> (i32, i32, i32) {
    %c0_i32 = arith.constant 0 : i32
    %c0_i32_0 = arith.constant 0 : i32
    %c0_i32_1 = arith.constant 0 : i32
    return %arg1, %c0_i32, %c0_i32_0 : i32, i32, i32
  }
  func.func @transform_25(%arg0: i32, %arg1: i32) -> (i32, i32, i32) {
    %c0_i32 = arith.constant 0 : i32
    %c0_i32_0 = arith.constant 0 : i32
    %c0_i32_1 = arith.constant 0 : i32
    return %arg0, %c0_i32, %c0_i32_0 : i32, i32, i32
  }
  func.func @transform_26(%arg0: i32, %arg1: i32) -> (i32, i32, i32, i32) {
    %c0_i32 = arith.constant 0 : i32
    %c0_i32_0 = arith.constant 0 : i32
    %c0_i32_1 = arith.constant 0 : i32
    return %arg1, %arg0, %c0_i32, %c0_i32_0 : i32, i32, i32, i32
  }
  func.func @transform_27(%arg0: i32, %arg1: i32) -> (i32, i32, i32, i32) {
    %c0_i32 = arith.constant 0 : i32
    %c0_i32_0 = arith.constant 0 : i32
    %c0_i32_1 = arith.constant 0 : i32
    return %arg1, %arg0, %c0_i32, %c0_i32_0 : i32, i32, i32, i32
  }
  func.func @transform_28(%arg0: i32, %arg1: i32) -> (i32, i32, i32) {
    %c0_i32 = arith.constant 0 : i32
    %c0_i32_0 = arith.constant 0 : i32
    %c0_i32_1 = arith.constant 0 : i32
    return %arg0, %c0_i32, %c0_i32_0 : i32, i32, i32
  }
}

</mosaic_0001>

<llo_original>
// kernel: tpu_custom_call.1
$region0: #{tpu_custom_call.1}
  #allocation0 [shape = 'u32[]', space=smem, size = 0x4, offset = 0x4, fixed_abs, tag = 'smem constant byte address 0x4 - core index']
  #allocation1 [shape = 'u32[144,128]{1,0:T(1,128)}', space=vmem, size = 0x12000, scoped, tag = 'internal scratch']
  %s0 = inlined_call_operand.hbm [shape: f32[2,8,32], index: 0, kind: input, shape index: {}]
  %s1 = inlined_call_operand.hbm [shape: f32[2,8,32], index: 1, kind: input, shape index: {}]
  %s2 = inlined_call_operand.hbm [shape: f32[2,8,8], index: 2, kind: input, shape index: {}]
  %s3 = inlined_call_operand.hbm [shape: f32[2,8,8], index: 3, kind: input, shape index: {}]
  %s4 = inlined_call_operand.hbm [shape: f32[2,8,8], index: 4, kind: input, shape index: {}]
  %s5 = inlined_call_operand.vmem [shape: bf16[2,32,96], index: 5, kind: input, shape index: {}]
  %s6 = inlined_call_operand.hbm [shape: f32[2,1,96], index: 6, kind: input, shape index: {}]
  %s7 = inlined_call_operand.vmem [shape: bf16[2,32,32], index: 7, kind: input, shape index: {}]
  %s8 = inlined_call_operand.hbm [shape: f32[2,1,32], index: 8, kind: input, shape index: {}]
  %s9 = inlined_call_operand.vmem [shape: bf16[2,32,32], index: 9, kind: input, shape index: {}]
  %s10 = inlined_call_operand.hbm [shape: f32[2,1,32], index: 10, kind: input, shape index: {}]
  %s11 = inlined_call_operand.vmem [shape: bf16[2,32,64], index: 11, kind: input, shape index: {}]
  %s12 = inlined_call_operand.hbm [shape: f32[2,1,64], index: 12, kind: input, shape index: {}]
  %s13 = inlined_call_operand.hbm [shape: bf16[2,32,32], index: 13, kind: input, shape index: {}]
  %s14 = inlined_call_operand.hbm [shape: f32[2,1,32], index: 14, kind: input, shape index: {}]
  %s15 = inlined_call_operand.hbm [shape: bf16[2,32,64], index: 15, kind: input, shape index: {}]
  %s16 = inlined_call_operand.hbm [shape: f32[2,1,64], index: 16, kind: input, shape index: {}]
  %s17 = inlined_call_operand.vmem [shape: bf16[2,64,32], index: 17, kind: input, shape index: {}]
  %s18 = inlined_call_operand.vmem [shape: f32[2,1,32], index: 18, kind: input, shape index: {}]
  %s19 = inlined_call_operand.vmem [shape: f32[2,1,32], index: 19, kind: input, shape index: {}]
  %s20 = inlined_call_operand.vmem [shape: f32[2,1,32], index: 20, kind: input, shape index: {}]
  %s21 = inlined_call_operand.vmem [shape: f32[2,1,32], index: 21, kind: input, shape index: {}]
  %s22 = inlined_call_operand.vmem [shape: f32[2,1,32], index: 22, kind: input, shape index: {}]
  %s23 = inlined_call_operand.vmem [shape: f32[2,1,32], index: 23, kind: input, shape index: {}]
  %s24 = inlined_call_operand.vmem [shape: f32[2,1,32], index: 24, kind: input, shape index: {}]
  %s25 = inlined_call_operand.hbm [shape: f32[2,8,32], index: 25, kind: output, shape index: {0}]
  %s26 = inlined_call_operand.hbm [shape: f32[2,2,8,8], index: 26, kind: output, shape index: {1}]
  %s27 = inlined_call_operand.hbm [shape: f32[2,2,8,8], index: 27, kind: output, shape index: {2}]
  %s28 = inlined_call_operand.hbm [shape: f32[1,1,1], index: 28, kind: output, shape index: {3}]
  %29 = xla_tuple %s25, %s26, %s27, %s28
  %s30 = sld [smem:[#allocation0]]
  $region217: #{tpu_custom_call.1} parent=0
    _
  %s32 = ssub.s32 1, %s30
  %s33 = scalar_select 0, %s32, %s30
  $region1: #{tpu_custom_call.1} parent=0
    #allocation2 [shape = 'u8[8192]{0}', space=vmem, size = 0x2000, scoped, tag = 'input window, operand 0, single buffered']
    #allocation3 [shape = 's32[2]{0}', space=sflag, size = 0x8, scoped, tag = 'scoped memory for tpu_custom_call.1']
    #allocation4 [shape = 's32[2]{0}', space=sflag, size = 0x8, scoped, tag = 'scoped memory for tpu_custom_call.1']
    #allocation5 [shape = 'u8[8192]{0}', space=vmem, size = 0x2000, scoped, tag = 'input window, operand 1, single buffered']
    #allocation6 [shape = 's32[1]{0}', space=sflag, size = 0x4, scoped, tag = 'scoped memory for tpu_custom_call.1']
    #allocation7 [shape = 'u8[8192]{0}', space=vmem, size = 0x2000, scoped, tag = 'input window, operand 2, single buffered']
    #allocation8 [shape = 'u8[8192]{0}', space=vmem, size = 0x2000, scoped, tag = 'input window, operand 3, single buffered']
    #allocation9 [shape = 's32[1]{0}', space=sflag, size = 0x4, scoped, tag = 'scoped memory for tpu_custom_call.1']
    #allocation10 [shape = 'u8[8192]{0}', space=vmem, size = 0x2000, scoped, tag = 'input window, operand 4, single buffered']
    #allocation11 [shape = 'u8[1024]{0}', space=vmem, size = 0x400, scoped, tag = 'input window, operand 6']
    #allocation12 [shape = 's32[2]{0}', space=sflag, size = 0x8, scoped, tag = 'scoped memory for tpu_custom_call.1']
    #allocation13 [shape = 'u8[1024]{0}', space=vmem, size = 0x400, scoped, tag = 'input window, operand 8']
    #allocation14 [shape = 'u8[1024]{0}', space=vmem, size = 0x400, scoped, tag = 'input window, operand 10']
    #allocation15 [shape = 's32[2]{0}', space=sflag, size = 0x8, scoped, tag = 'scoped memory for tpu_custom_call.1']
    #allocation16 [shape = 'u8[1024]{0}', space=vmem, size = 0x400, scoped, tag = 'input window, operand 12']
    #allocation17 [shape = 'u8[16384]{0}', space=vmem, size = 0x4000, scoped, tag = 'input window, operand 13']
    #allocation18 [shape = 's32[2]{0}', space=sflag, size = 0x8, scoped, tag = 'scoped memory for tpu_custom_call.1']
    #allocation19 [shape = 'u8[1024]{0}', space=vmem, size = 0x400, scoped, tag = 'input window, operand 14']
    #allocation20 [shape = 'u8[16384]{0}', space=vmem, size = 0x4000, scoped, tag = 'input window, operand 15']
    #allocation21 [shape = 's32[2]{0}', space=sflag, size = 0x8, scoped, tag = 'scoped memory for tpu_custom_call.1']
    #allocation22 [shape = 'u8[1024]{0}', space=vmem, size = 0x400, scoped, tag = 'input window, operand 16']
    #allocation23 [shape = 'u8[8192]{0}', space=vmem, size = 0x2000, scoped, tag = 'output window, operand 0, single buffered']
    #allocation24 [shape = 'u8[16384]{0}', space=vmem, size = 0x4000, scoped, tag = 'output window, operand 1']
    #allocation25 [shape = 's32[2]{0}', space=sflag, size = 0x8, scoped, tag = 'scoped memory for tpu_custom_call.1']
    #allocation26 [shape = 'u8[16384]{0}', space=vmem, size = 0x4000, scoped, tag = 'output window, operand 2']
    #allocation27 [shape = 'u8[512]{0}', space=vmem, size = 0x400, scoped, tag = 'output window, operand 3, single buffered']
    #allocation28 [shape = 's32[1]{0}', space=sflag, size = 0x4, scoped, tag = 'scoped memory for tpu_custom_call.1']
    %34 = vsyncpa [#allocation3], 0
    %35 = vsyncpa [#allocation6], 0
    %36 = vsyncpa [#allocation9], 0
    %37 = vsyncpa [#allocation12], 0
    %s38 = scalar_lea.sflag [#allocation12], 1
    %39 = vsyncpa %s38, 0
    %40 = vsyncpa [#allocation15], 0
    %s41 = scalar_lea.sflag [#allocation15], 1
    %42 = vsyncpa %s41, 0
    %43 = vsyncpa [#allocation18], 0
    %s44 = scalar_lea.sflag [#allocation18], 1
    %45 = vsyncpa %s44, 0
    %46 = vsyncpa [#allocation21], 0
    %s47 = scalar_lea.sflag [#allocation21], 1
    %48 = vsyncpa %s47, 0
    %49 = vsyncpa [#allocation4], 0
    %50 = vsyncpa [#allocation25], 0
    %s51 = scalar_lea.sflag [#allocation25], 1
    %52 = vsyncpa %s51, 0
    %53 = vsyncpa [#allocation28], 0
    loop: start=0, step=1, limit=4
    $region2: #{tpu_custom_call.1} parent=1 // loop_pre_header
      _
    $region3: #{tpu_custom_call.1} parent=1 // loop_header
      %s55 = sphi 0, %s59
      %p56 = scmp.ge.s32.totalorder %s55, 4
      %s62 = sphi 0, %s74
      %s63 = sphi 0, %s70
      %s64 = sphi 0, %s62
      %s65 = sphi 0, %s63
      %s66 = sphi 0, %s64
      %s67 = sphi 0, %s65
      %s77 = sphi 0, %s79
      %s80 = sphi 0, %s77
      %s81 = sphi 0, %s80
      %s97 = sphi 0, %s81
      %s103 = sphi 0, %s105
      %s106 = sphi 0, %s103
      %s107 = sphi 0, %s106
      %s123 = sphi 0, %s107
      %s129 = sphi 0, %s131
      %s132 = sphi 0, %s129
      %s133 = sphi 0, %s132
      %s149 = sphi 0, %s133
      %s155 = sphi 0, %s157
      %s158 = sphi 0, %s155
      %s159 = sphi 0, %s158
      %s175 = sphi 0, %s159
      %s181 = sphi 0, %s183
      %s184 = sphi 0, %s181
      %s185 = sphi 0, %s184
      %s201 = sphi 0, %s185
      %s207 = sphi 0, %s209
      %s210 = sphi 0, %s207
      %s211 = sphi 0, %s210
      %s227 = sphi 0, %s211
      %s233 = sphi 0, %s235
      %s236 = sphi 0, %s233
      %s237 = sphi 0, %s236
      %s253 = sphi 0, %s237
      %s259 = sphi 0, %s261
      %s262 = sphi 0, %s259
      %s263 = sphi 0, %s262
      %s279 = sphi 0, %s263
      %s285 = sphi 0, %s287
      %s288 = sphi 0, %s285
      %s289 = sphi 0, %s288
      %s305 = sphi 0, %s289
      %s311 = sphi 0, %s313
      %s314 = sphi 0, %s311
      %s315 = sphi 0, %s314
      %s331 = sphi 0, %s315
      %s337 = sphi 0, %s339
      %s340 = sphi 0, %s337
      %s341 = sphi 0, %s340
      %s357 = sphi 0, %s341
      %s363 = sphi 0, %s365
      %s366 = sphi 0, %s363
      %s367 = sphi 0, %s366
      %s383 = sphi 0, %s367
      %s389 = sphi 0, %s391
      %s392 = sphi 0, %s389
      %s393 = sphi 0, %s392
      %s409 = sphi 0, %s393
      %s415 = sphi 0, %s417
      %s418 = sphi 0, %s415
      %s419 = sphi 0, %s418
      %s435 = sphi 0, %s419
      %s441 = sphi 0, %s443
      %s444 = sphi 0, %s441
      %s445 = sphi 0, %s444
      %s461 = sphi 0, %s445
      %s467 = sphi 0, %s469
      %s470 = sphi 0, %s467
      %s471 = sphi 0, %s470
      %s487 = sphi 0, %s471
      %s493 = sphi 0, %s495
      %s496 = sphi 0, %s493
      %s497 = sphi 0, %s496
      %s513 = sphi 0, %s497
      %s519 = sphi 0, %s521
      %s522 = sphi 0, %s519
      %s523 = sphi 0, %s522
      %s539 = sphi 0, %s523
      %s545 = sphi 0, %s547
      %s548 = sphi 0, %s545
      %s549 = sphi 0, %s548
      %s565 = sphi 0, %s549
      %s571 = sphi 0, %s573
      %s574 = sphi 0, %s571
      %s575 = sphi 0, %s574
      %s591 = sphi 0, %s575
      %s597 = sphi 0, %s599
      %s600 = sphi 0, %s597
      %s601 = sphi 0, %s600
      %s617 = sphi 0, %s601
      %s623 = sphi 0, %s625
      %s626 = sphi 0, %s623
      %s627 = sphi 0, %s626
      %s643 = sphi 0, %s627
      %s649 = sphi 0, %s651
      %s652 = sphi 0, %s649
      %s653 = sphi 0, %s652
      %s669 = sphi 0, %s653
      %s675 = sphi 0, %s677
      %s678 = sphi 0, %s675
      %s679 = sphi 0, %s678
      %s695 = sphi 0, %s679
      %s701 = sphi 0, %s703
      %s704 = sphi 0, %s701
      %s705 = sphi 0, %s704
      %s721 = sphi 0, %s705
      %s727 = sphi 0, %s729
      %s730 = sphi 0, %s727
      %s731 = sphi 0, %s730
      %s747 = sphi 0, %s731
      %s755 = sphi 0, %s757
      %s758 = sphi 0, %s755
      %s759 = sphi 0, %s758
      %s775 = sphi 0, %s759
      %s783 = sphi 0, %s785
      %s786 = sphi 0, %s783
      %s787 = sphi 0, %s786
      %s803 = sphi 0, %s787
      %s809 = sphi 0, %s811
      %s812 = sphi 0, %s809
      %s813 = sphi 0, %s812
      %s829 = sphi 0, %s813
    $region4: #{tpu_custom_call.1} parent=1 // loop_header_branch
      %58 = sbr.rel (%p56) target = $region8
    $region5: #{tpu_custom_call.1} parent=1 // loop_body
      %s60 = ssub.s32 %s55, 1
      %s61 = ssub.s32 %s55, 2
      %s68 = sadd.s32 1, %s63
      %p69 = scmp.ge.s32.totalorder %s68, 2
      %s70 = scalar_select %p69, 0, %s68
      %s71 = sadd.s32 1, %s62
      %s72 = scalar_select %p69, %s71, %s62
      %p73 = scmp.ge.s32.totalorder %s72, 1
      %s74 = scalar_select %p73, 0, %s72
      %s75 = ssub.s32 %s62, %s74
      %p76 = scmp.eq.s32.totalorder %s75, 0
      %s78 = sadd.s32 %s77, 1
      %s79 = scalar_select %p76, %s77, %s78
      %p82 = pneg %p76
      %p83 = scmp.eq.s32.totalorder %s55, 1
      %p84 = por %p82, %p83
      %p85 = scmp.ne.s32.totalorder %s77, %s80
      %p86 = scmp.eq.s32.totalorder %s55, 0
      %p87 = por %p85, %p86
      %p88 = scmp.ne.s32.totalorder %s77, %s80
      %p89 = scmp.eq.s32.totalorder %s60, 1
      %p90 = por %p88, %p89
      %p91 = scmp.ne.s32.totalorder %s80, %s81
      %p92 = scmp.eq.s32.totalorder %s60, 0
      %p93 = por %p91, %p92
      %p94 = scmp.ne.s32.totalorder %s80, %s81
      %p95 = scmp.eq.s32.totalorder %s61, 1
      %p96 = por %p94, %p95
      %p98 = scmp.ne.s32.totalorder %s81, %s97
      %p99 = scmp.eq.s32.totalorder %s61, 0
      %p100 = por %p98, %p99
      %s101 = ssub.s32 %s62, %s74
      %p102 = scmp.eq.s32.totalorder %s101, 0
      %s104 = sadd.s32 %s103, 1
      %s105 = scalar_select %p102, %s103, %s104
      %p108 = pneg %p102
      %p109 = scmp.eq.s32.totalorder %s55, 1
      %p110 = por %p108, %p109
      %p111 = scmp.ne.s32.totalorder %s103, %s106
      %p112 = scmp.eq.s32.totalorder %s55, 0
      %p113 = por %p111, %p112
      %p114 = scmp.ne.s32.totalorder %s103, %s106
      %p115 = scmp.eq.s32.totalorder %s60, 1
      %p116 = por %p114, %p115
      %p117 = scmp.ne.s32.totalorder %s106, %s107
      %p118 = scmp.eq.s32.totalorder %s60, 0
      %p119 = por %p117, %p118
      %p120 = scmp.ne.s32.totalorder %s106, %s107
      %p121 = scmp.eq.s32.totalorder %s61, 1
      %p122 = por %p120, %p121
      %p124 = scmp.ne.s32.totalorder %s107, %s123
      %p125 = scmp.eq.s32.totalorder %s61, 0
      %p126 = por %p124, %p125
      %s127 = ssub.s32 %s62, %s74
      %p128 = scmp.eq.s32.totalorder %s127, 0
      %s130 = sadd.s32 %s129, 1
      %s131 = scalar_select %p128, %s129, %s130
      %p134 = pneg %p128
      %p135 = scmp.eq.s32.totalorder %s55, 1
      %p136 = por %p134, %p135
      %p137 = scmp.ne.s32.totalorder %s129, %s132
      %p138 = scmp.eq.s32.totalorder %s55, 0
      %p139 = por %p137, %p138
      %p140 = scmp.ne.s32.totalorder %s129, %s132
      %p141 = scmp.eq.s32.totalorder %s60, 1
      %p142 = por %p140, %p141
      %p143 = scmp.ne.s32.totalorder %s132, %s133
      %p144 = scmp.eq.s32.totalorder %s60, 0
      %p145 = por %p143, %p144
      %p146 = scmp.ne.s32.totalorder %s132, %s133
      %p147 = scmp.eq.s32.totalorder %s61, 1
      %p148 = por %p146, %p147
      %p150 = scmp.ne.s32.totalorder %s133, %s149
      %p151 = scmp.eq.s32.totalorder %s61, 0
      %p152 = por %p150, %p151
      %s153 = ssub.s32 %s62, %s74
      %p154 = scmp.eq.s32.totalorder %s153, 0
      %s156 = sadd.s32 %s155, 1
      %s157 = scalar_select %p154, %s155, %s156
      %p160 = pneg %p154
      %p161 = scmp.eq.s32.totalorder %s55, 1
      %p162 = por %p160, %p161
      %p163 = scmp.ne.s32.totalorder %s155, %s158
      %p164 = scmp.eq.s32.totalorder %s55, 0
      %p165 = por %p163, %p164
      %p166 = scmp.ne.s32.totalorder %s155, %s158
      %p167 = scmp.eq.s32.totalorder %s60, 1
      %p168 = por %p166, %p167
      %p169 = scmp.ne.s32.totalorder %s158, %s159
      %p170 = scmp.eq.s32.totalorder %s60, 0
      %p171 = por %p169, %p170
      %p172 = scmp.ne.s32.totalorder %s158, %s159
      %p173 = scmp.eq.s32.totalorder %s61, 1
      %p174 = por %p172, %p173
      %p176 = scmp.ne.s32.totalorder %s159, %s175
      %p177 = scmp.eq.s32.totalorder %s61, 0
      %p178 = por %p176, %p177
      %s179 = ssub.s32 %s62, %s74
      %p180 = scmp.eq.s32.totalorder %s179, 0
      %s182 = sadd.s32 %s181, 1
      %s183 = scalar_select %p180, %s181, %s182
      %p186 = pneg %p180
      %p187 = scmp.eq.s32.totalorder %s55, 1
      %p188 = por %p186, %p187
      %p189 = scmp.ne.s32.totalorder %s181, %s184
      %p190 = scmp.eq.s32.totalorder %s55, 0
      %p191 = por %p189, %p190
      %p192 = scmp.ne.s32.totalorder %s181, %s184
      %p193 = scmp.eq.s32.totalorder %s60, 1
      %p194 = por %p192, %p193
      %p195 = scmp.ne.s32.totalorder %s184, %s185
      %p196 = scmp.eq.s32.totalorder %s60, 0
      %p197 = por %p195, %p196
      %p198 = scmp.ne.s32.totalorder %s184, %s185
      %p199 = scmp.eq.s32.totalorder %s61, 1
      %p200 = por %p198, %p199
      %p202 = scmp.ne.s32.totalorder %s185, %s201
      %p203 = scmp.eq.s32.totalorder %s61, 0
      %p204 = por %p202, %p203
      %s205 = ssub.s32 %s63, %s70
      %p206 = scmp.eq.s32.totalorder %s205, 0
      %s208 = sadd.s32 %s207, 1
      %s209 = scalar_select %p206, %s207, %s208
      %p212 = pneg %p206
      %p213 = scmp.eq.s32.totalorder %s55, 1
      %p214 = por %p212, %p213
      %p215 = scmp.ne.s32.totalorder %s207, %s210
      %p216 = scmp.eq.s32.totalorder %s55, 0
      %p217 = por %p215, %p216
      %p218 = scmp.ne.s32.totalorder %s207, %s210
      %p219 = scmp.eq.s32.totalorder %s60, 1
      %p220 = por %p218, %p219
      %p221 = scmp.ne.s32.totalorder %s210, %s211
      %p222 = scmp.eq.s32.totalorder %s60, 0
      %p223 = por %p221, %p222
      %p224 = scmp.ne.s32.totalorder %s210, %s211
      %p225 = scmp.eq.s32.totalorder %s61, 1
      %p226 = por %p224, %p225
      %p228 = scmp.ne.s32.totalorder %s211, %s227
      %p229 = scmp.eq.s32.totalorder %s61, 0
      %p230 = por %p228, %p229
      %s231 = ssub.s32 %s63, %s70
      %p232 = scmp.eq.s32.totalorder %s231, 0
      %s234 = sadd.s32 %s233, 1
      %s235 = scalar_select %p232, %s233, %s234
      %p238 = pneg %p232
      %p239 = scmp.eq.s32.totalorder %s55, 1
      %p240 = por %p238, %p239
      %p241 = scmp.ne.s32.totalorder %s233, %s236
      %p242 = scmp.eq.s32.totalorder %s55, 0
      %p243 = por %p241, %p242
      %p244 = scmp.ne.s32.totalorder %s233, %s236
      %p245 = scmp.eq.s32.totalorder %s60, 1
      %p246 = por %p244, %p245
      %p247 = scmp.ne.s32.totalorder %s236, %s237
      %p248 = scmp.eq.s32.totalorder %s60, 0
      %p249 = por %p247, %p248
      %p250 = scmp.ne.s32.totalorder %s236, %s237
      %p251 = scmp.eq.s32.totalorder %s61, 1
      %p252 = por %p250, %p251
      %p254 = scmp.ne.s32.totalorder %s237, %s253
      %p255 = scmp.eq.s32.totalorder %s61, 0
      %p256 = por %p254, %p255
      %s257 = ssub.s32 %s63, %s70
      %p258 = scmp.eq.s32.totalorder %s257, 0
      %s260 = sadd.s32 %s259, 1
      %s261 = scalar_select %p258, %s259, %s260
      %p264 = pneg %p258
      %p265 = scmp.eq.s32.totalorder %s55, 1
      %p266 = por %p264, %p265
      %p267 = scmp.ne.s32.totalorder %s259, %s262
      %p268 = scmp.eq.s32.totalorder %s55, 0
      %p269 = por %p267, %p268
      %p270 = scmp.ne.s32.totalorder %s259, %s262
      %p271 = scmp.eq.s32.totalorder %s60, 1
      %p272 = por %p270, %p271
      %p273 = scmp.ne.s32.totalorder %s262, %s263
      %p274 = scmp.eq.s32.totalorder %s60, 0
      %p275 = por %p273, %p274
      %p276 = scmp.ne.s32.totalorder %s262, %s263
      %p277 = scmp.eq.s32.totalorder %s61, 1
      %p278 = por %p276, %p277
      %p280 = scmp.ne.s32.totalorder %s263, %s279
      %p281 = scmp.eq.s32.totalorder %s61, 0
      %p282 = por %p280, %p281
      %s283 = ssub.s32 %s63, %s70
      %p284 = scmp.eq.s32.totalorder %s283, 0
      %s286 = sadd.s32 %s285, 1
      %s287 = scalar_select %p284, %s285, %s286
      %p290 = pneg %p284
      %p291 = scmp.eq.s32.totalorder %s55, 1
      %p292 = por %p290, %p291
      %p293 = scmp.ne.s32.totalorder %s285, %s288
      %p294 = scmp.eq.s32.totalorder %s55, 0
      %p295 = por %p293, %p294
      %p296 = scmp.ne.s32.totalorder %s285, %s288
      %p297 = scmp.eq.s32.totalorder %s60, 1
      %p298 = por %p296, %p297
      %p299 = scmp.ne.s32.totalorder %s288, %s289
      %p300 = scmp.eq.s32.totalorder %s60, 0
      %p301 = por %p299, %p300
      %p302 = scmp.ne.s32.totalorder %s288, %s289
      %p303 = scmp.eq.s32.totalorder %s61, 1
      %p304 = por %p302, %p303
      %p306 = scmp.ne.s32.totalorder %s289, %s305
      %p307 = scmp.eq.s32.totalorder %s61, 0
      %p308 = por %p306, %p307
      %s309 = ssub.s32 %s63, %s70
      %p310 = scmp.eq.s32.totalorder %s309, 0
      %s312 = sadd.s32 %s311, 1
      %s313 = scalar_select %p310, %s311, %s312
      %p316 = pneg %p310
      %p317 = scmp.eq.s32.totalorder %s55, 1
      %p318 = por %p316, %p317
      %p319 = scmp.ne.s32.totalorder %s311, %s314
      %p320 = scmp.eq.s32.totalorder %s55, 0
      %p321 = por %p319, %p320
      %p322 = scmp.ne.s32.totalorder %s311, %s314
      %p323 = scmp.eq.s32.totalorder %s60, 1
      %p324 = por %p322, %p323
      %p325 = scmp.ne.s32.totalorder %s314, %s315
      %p326 = scmp.eq.s32.totalorder %s60, 0
      %p327 = por %p325, %p326
      %p328 = scmp.ne.s32.totalorder %s314, %s315
      %p329 = scmp.eq.s32.totalorder %s61, 1
      %p330 = por %p328, %p329
      %p332 = scmp.ne.s32.totalorder %s315, %s331
      %p333 = scmp.eq.s32.totalorder %s61, 0
      %p334 = por %p332, %p333
      %s335 = ssub.s32 %s63, %s70
      %p336 = scmp.eq.s32.totalorder %s335, 0
      %s338 = sadd.s32 %s337, 1
      %s339 = scalar_select %p336, %s337, %s338
      %p342 = pneg %p336
      %p343 = scmp.eq.s32.totalorder %s55, 1
      %p344 = por %p342, %p343
      %p345 = scmp.ne.s32.totalorder %s337, %s340
      %p346 = scmp.eq.s32.totalorder %s55, 0
      %p347 = por %p345, %p346
      %p348 = scmp.ne.s32.totalorder %s337, %s340
      %p349 = scmp.eq.s32.totalorder %s60, 1
      %p350 = por %p348, %p349
      %p351 = scmp.ne.s32.totalorder %s340, %s341
      %p352 = scmp.eq.s32.totalorder %s60, 0
      %p353 = por %p351, %p352
      %p354 = scmp.ne.s32.totalorder %s340, %s341
      %p355 = scmp.eq.s32.totalorder %s61, 1
      %p356 = por %p354, %p355
      %p358 = scmp.ne.s32.totalorder %s341, %s357
      %p359 = scmp.eq.s32.totalorder %s61, 0
      %p360 = por %p358, %p359
      %s361 = ssub.s32 %s63, %s70
      %p362 = scmp.eq.s32.totalorder %s361, 0
      %s364 = sadd.s32 %s363, 1
      %s365 = scalar_select %p362, %s363, %s364
      %p368 = pneg %p362
      %p369 = scmp.eq.s32.totalorder %s55, 1
      %p370 = por %p368, %p369
      %p371 = scmp.ne.s32.totalorder %s363, %s366
      %p372 = scmp.eq.s32.totalorder %s55, 0
      %p373 = por %p371, %p372
      %p374 = scmp.ne.s32.totalorder %s363, %s366
      %p375 = scmp.eq.s32.totalorder %s60, 1
      %p376 = por %p374, %p375
      %p377 = scmp.ne.s32.totalorder %s366, %s367
      %p378 = scmp.eq.s32.totalorder %s60, 0
      %p379 = por %p377, %p378
      %p380 = scmp.ne.s32.totalorder %s366, %s367
      %p381 = scmp.eq.s32.totalorder %s61, 1
      %p382 = por %p380, %p381
      %p384 = scmp.ne.s32.totalorder %s367, %s383
      %p385 = scmp.eq.s32.totalorder %s61, 0
      %p386 = por %p384, %p385
      %s387 = ssub.s32 %s63, %s70
      %p388 = scmp.eq.s32.totalorder %s387, 0
      %s390 = sadd.s32 %s389, 1
      %s391 = scalar_select %p388, %s389, %s390
      %p394 = pneg %p388
      %p395 = scmp.eq.s32.totalorder %s55, 1
      %p396 = por %p394, %p395
      %p397 = scmp.ne.s32.totalorder %s389, %s392
      %p398 = scmp.eq.s32.totalorder %s55, 0
      %p399 = por %p397, %p398
      %p400 = scmp.ne.s32.totalorder %s389, %s392
      %p401 = scmp.eq.s32.totalorder %s60, 1
      %p402 = por %p400, %p401
      %p403 = scmp.ne.s32.totalorder %s392, %s393
      %p404 = scmp.eq.s32.totalorder %s60, 0
      %p405 = por %p403, %p404
      %p406 = scmp.ne.s32.totalorder %s392, %s393
      %p407 = scmp.eq.s32.totalorder %s61, 1
      %p408 = por %p406, %p407
      %p410 = scmp.ne.s32.totalorder %s393, %s409
      %p411 = scmp.eq.s32.totalorder %s61, 0
      %p412 = por %p410, %p411
      %s413 = ssub.s32 %s63, %s70
      %p414 = scmp.eq.s32.totalorder %s413, 0
      %s416 = sadd.s32 %s415, 1
      %s417 = scalar_select %p414, %s415, %s416
      %p420 = pneg %p414
      %p421 = scmp.eq.s32.totalorder %s55, 1
      %p422 = por %p420, %p421
      %p423 = scmp.ne.s32.totalorder %s415, %s418
      %p424 = scmp.eq.s32.totalorder %s55, 0
      %p425 = por %p423, %p424
      %p426 = scmp.ne.s32.totalorder %s415, %s418
      %p427 = scmp.eq.s32.totalorder %s60, 1
      %p428 = por %p426, %p427
      %p429 = scmp.ne.s32.totalorder %s418, %s419
      %p430 = scmp.eq.s32.totalorder %s60, 0
      %p431 = por %p429, %p430
      %p432 = scmp.ne.s32.totalorder %s418, %s419
      %p433 = scmp.eq.s32.totalorder %s61, 1
      %p434 = por %p432, %p433
      %p436 = scmp.ne.s32.totalorder %s419, %s435
      %p437 = scmp.eq.s32.totalorder %s61, 0
      %p438 = por %p436, %p437
      %s439 = ssub.s32 %s63, %s70
      %p440 = scmp.eq.s32.totalorder %s439, 0
      %s442 = sadd.s32 %s441, 1
      %s443 = scalar_select %p440, %s441, %s442
      %p446 = pneg %p440
      %p447 = scmp.eq.s32.totalorder %s55, 1
      %p448 = por %p446, %p447
      %p449 = scmp.ne.s32.totalorder %s441, %s444
      %p450 = scmp.eq.s32.totalorder %s55, 0
      %p451 = por %p449, %p450
      %p452 = scmp.ne.s32.totalorder %s441, %s444
      %p453 = scmp.eq.s32.totalorder %s60, 1
      %p454 = por %p452, %p453
      %p455 = scmp.ne.s32.totalorder %s444, %s445
      %p456 = scmp.eq.s32.totalorder %s60, 0
      %p457 = por %p455, %p456
      %p458 = scmp.ne.s32.totalorder %s444, %s445
      %p459 = scmp.eq.s32.totalorder %s61, 1
      %p460 = por %p458, %p459
      %p462 = scmp.ne.s32.totalorder %s445, %s461
      %p463 = scmp.eq.s32.totalorder %s61, 0
      %p464 = por %p462, %p463
      %s465 = ssub.s32 %s63, %s70
      %p466 = scmp.eq.s32.totalorder %s465, 0
      %s468 = sadd.s32 %s467, 1
      %s469 = scalar_select %p466, %s467, %s468
      %p472 = pneg %p466
      %p473 = scmp.eq.s32.totalorder %s55, 1
      %p474 = por %p472, %p473
      %p475 = scmp.ne.s32.totalorder %s467, %s470
      %p476 = scmp.eq.s32.totalorder %s55, 0
      %p477 = por %p475, %p476
      %p478 = scmp.ne.s32.totalorder %s467, %s470
      %p479 = scmp.eq.s32.totalorder %s60, 1
      %p480 = por %p478, %p479
      %p481 = scmp.ne.s32.totalorder %s470, %s471
      %p482 = scmp.eq.s32.totalorder %s60, 0
      %p483 = por %p481, %p482
      %p484 = scmp.ne.s32.totalorder %s470, %s471
      %p485 = scmp.eq.s32.totalorder %s61, 1
      %p486 = por %p484, %p485
      %p488 = scmp.ne.s32.totalorder %s471, %s487
      %p489 = scmp.eq.s32.totalorder %s61, 0
      %p490 = por %p488, %p489
      %s491 = ssub.s32 %s63, %s70
      %p492 = scmp.eq.s32.totalorder %s491, 0
      %s494 = sadd.s32 %s493, 1
      %s495 = scalar_select %p492, %s493, %s494
      %p498 = pneg %p492
      %p499 = scmp.eq.s32.totalorder %s55, 1
      %p500 = por %p498, %p499
      %p501 = scmp.ne.s32.totalorder %s493, %s496
      %p502 = scmp.eq.s32.totalorder %s55, 0
      %p503 = por %p501, %p502
      %p504 = scmp.ne.s32.totalorder %s493, %s496
      %p505 = scmp.eq.s32.totalorder %s60, 1
      %p506 = por %p504, %p505
      %p507 = scmp.ne.s32.totalorder %s496, %s497
      %p508 = scmp.eq.s32.totalorder %s60, 0
      %p509 = por %p507, %p508
      %p510 = scmp.ne.s32.totalorder %s496, %s497
      %p511 = scmp.eq.s32.totalorder %s61, 1
      %p512 = por %p510, %p511
      %p514 = scmp.ne.s32.totalorder %s497, %s513
      %p515 = scmp.eq.s32.totalorder %s61, 0
      %p516 = por %p514, %p515
      %s517 = ssub.s32 %s63, %s70
      %p518 = scmp.eq.s32.totalorder %s517, 0
      %s520 = sadd.s32 %s519, 1
      %s521 = scalar_select %p518, %s519, %s520
      %p524 = pneg %p518
      %p525 = scmp.eq.s32.totalorder %s55, 1
      %p526 = por %p524, %p525
      %p527 = scmp.ne.s32.totalorder %s519, %s522
      %p528 = scmp.eq.s32.totalorder %s55, 0
      %p529 = por %p527, %p528
      %p530 = scmp.ne.s32.totalorder %s519, %s522
      %p531 = scmp.eq.s32.totalorder %s60, 1
      %p532 = por %p530, %p531
      %p533 = scmp.ne.s32.totalorder %s522, %s523
      %p534 = scmp.eq.s32.totalorder %s60, 0
      %p535 = por %p533, %p534
      %p536 = scmp.ne.s32.totalorder %s522, %s523
      %p537 = scmp.eq.s32.totalorder %s61, 1
      %p538 = por %p536, %p537
      %p540 = scmp.ne.s32.totalorder %s523, %s539
      %p541 = scmp.eq.s32.totalorder %s61, 0
      %p542 = por %p540, %p541
      %s543 = ssub.s32 %s63, %s70
      %p544 = scmp.eq.s32.totalorder %s543, 0
      %s546 = sadd.s32 %s545, 1
      %s547 = scalar_select %p544, %s545, %s546
      %p550 = pneg %p544
      %p551 = scmp.eq.s32.totalorder %s55, 1
      %p552 = por %p550, %p551
      %p553 = scmp.ne.s32.totalorder %s545, %s548
      %p554 = scmp.eq.s32.totalorder %s55, 0
      %p555 = por %p553, %p554
      %p556 = scmp.ne.s32.totalorder %s545, %s548
      %p557 = scmp.eq.s32.totalorder %s60, 1
      %p558 = por %p556, %p557
      %p559 = scmp.ne.s32.totalorder %s548, %s549
      %p560 = scmp.eq.s32.totalorder %s60, 0
      %p561 = por %p559, %p560
      %p562 = scmp.ne.s32.totalorder %s548, %s549
      %p563 = scmp.eq.s32.totalorder %s61, 1
      %p564 = por %p562, %p563
      %p566 = scmp.ne.s32.totalorder %s549, %s565
      %p567 = scmp.eq.s32.totalorder %s61, 0
      %p568 = por %p566, %p567
      %s569 = ssub.s32 %s63, %s70
      %p570 = scmp.eq.s32.totalorder %s569, 0
      %s572 = sadd.s32 %s571, 1
      %s573 = scalar_select %p570, %s571, %s572
      %p576 = pneg %p570
      %p577 = scmp.eq.s32.totalorder %s55, 1
      %p578 = por %p576, %p577
      %p579 = scmp.ne.s32.totalorder %s571, %s574
      %p580 = scmp.eq.s32.totalorder %s55, 0
      %p581 = por %p579, %p580
      %p582 = scmp.ne.s32.totalorder %s571, %s574
      %p583 = scmp.eq.s32.totalorder %s60, 1
      %p584 = por %p582, %p583
      %p585 = scmp.ne.s32.totalorder %s574, %s575
      %p586 = scmp.eq.s32.totalorder %s60, 0
      %p587 = por %p585, %p586
      %p588 = scmp.ne.s32.totalorder %s574, %s575
      %p589 = scmp.eq.s32.totalorder %s61, 1
      %p590 = por %p588, %p589
      %p592 = scmp.ne.s32.totalorder %s575, %s591
      %p593 = scmp.eq.s32.totalorder %s61, 0
      %p594 = por %p592, %p593
      %s595 = ssub.s32 %s63, %s70
      %p596 = scmp.eq.s32.totalorder %s595, 0
      %s598 = sadd.s32 %s597, 1
      %s599 = scalar_select %p596, %s597, %s598
      %p602 = pneg %p596
      %p603 = scmp.eq.s32.totalorder %s55, 1
      %p604 = por %p602, %p603
      %p605 = scmp.ne.s32.totalorder %s597, %s600
      %p606 = scmp.eq.s32.totalorder %s55, 0
      %p607 = por %p605, %p606
      %p608 = scmp.ne.s32.totalorder %s597, %s600
      %p609 = scmp.eq.s32.totalorder %s60, 1
      %p610 = por %p608, %p609
      %p611 = scmp.ne.s32.totalorder %s600, %s601
      %p612 = scmp.eq.s32.totalorder %s60, 0
      %p613 = por %p611, %p612
      %p614 = scmp.ne.s32.totalorder %s600, %s601
      %p615 = scmp.eq.s32.totalorder %s61, 1
      %p616 = por %p614, %p615
      %p618 = scmp.ne.s32.totalorder %s601, %s617
      %p619 = scmp.eq.s32.totalorder %s61, 0
      %p620 = por %p618, %p619
      %s621 = ssub.s32 %s63, %s70
      %p622 = scmp.eq.s32.totalorder %s621, 0
      %s624 = sadd.s32 %s623, 1
      %s625 = scalar_select %p622, %s623, %s624
      %p628 = pneg %p622
      %p629 = scmp.eq.s32.totalorder %s55, 1
      %p630 = por %p628, %p629
      %p631 = scmp.ne.s32.totalorder %s623, %s626
      %p632 = scmp.eq.s32.totalorder %s55, 0
      %p633 = por %p631, %p632
      %p634 = scmp.ne.s32.totalorder %s623, %s626
      %p635 = scmp.eq.s32.totalorder %s60, 1
      %p636 = por %p634, %p635
      %p637 = scmp.ne.s32.totalorder %s626, %s627
      %p638 = scmp.eq.s32.totalorder %s60, 0
      %p639 = por %p637, %p638
      %p640 = scmp.ne.s32.totalorder %s626, %s627
      %p641 = scmp.eq.s32.totalorder %s61, 1
      %p642 = por %p640, %p641
      %p644 = scmp.ne.s32.totalorder %s627, %s643
      %p645 = scmp.eq.s32.totalorder %s61, 0
      %p646 = por %p644, %p645
      %s647 = ssub.s32 %s63, %s70
      %p648 = scmp.eq.s32.totalorder %s647, 0
      %s650 = sadd.s32 %s649, 1
      %s651 = scalar_select %p648, %s649, %s650
      %p654 = pneg %p648
      %p655 = scmp.eq.s32.totalorder %s55, 1
      %p656 = por %p654, %p655
      %p657 = scmp.ne.s32.totalorder %s649, %s652
      %p658 = scmp.eq.s32.totalorder %s55, 0
      %p659 = por %p657, %p658
      %p660 = scmp.ne.s32.totalorder %s649, %s652
      %p661 = scmp.eq.s32.totalorder %s60, 1
      %p662 = por %p660, %p661
      %p663 = scmp.ne.s32.totalorder %s652, %s653
      %p664 = scmp.eq.s32.totalorder %s60, 0
      %p665 = por %p663, %p664
      %p666 = scmp.ne.s32.totalorder %s652, %s653
      %p667 = scmp.eq.s32.totalorder %s61, 1
      %p668 = por %p666, %p667
      %p670 = scmp.ne.s32.totalorder %s653, %s669
      %p671 = scmp.eq.s32.totalorder %s61, 0
      %p672 = por %p670, %p671
      %s673 = ssub.s32 %s63, %s70
      %p674 = scmp.eq.s32.totalorder %s673, 0
      %s676 = sadd.s32 %s675, 1
      %s677 = scalar_select %p674, %s675, %s676
      %p680 = pneg %p674
      %p681 = scmp.eq.s32.totalorder %s55, 1
      %p682 = por %p680, %p681
      %p683 = scmp.ne.s32.totalorder %s675, %s678
      %p684 = scmp.eq.s32.totalorder %s55, 0
      %p685 = por %p683, %p684
      %p686 = scmp.ne.s32.totalorder %s675, %s678
      %p687 = scmp.eq.s32.totalorder %s60, 1
      %p688 = por %p686, %p687
      %p689 = scmp.ne.s32.totalorder %s678, %s679
      %p690 = scmp.eq.s32.totalorder %s60, 0
      %p691 = por %p689, %p690
      %p692 = scmp.ne.s32.totalorder %s678, %s679
      %p693 = scmp.eq.s32.totalorder %s61, 1
      %p694 = por %p692, %p693
      %p696 = scmp.ne.s32.totalorder %s679, %s695
      %p697 = scmp.eq.s32.totalorder %s61, 0
      %p698 = por %p696, %p697
      %s699 = ssub.s32 %s63, %s70
      %p700 = scmp.eq.s32.totalorder %s699, 0
      %s702 = sadd.s32 %s701, 1
      %s703 = scalar_select %p700, %s701, %s702
      %p706 = pneg %p700
      %p707 = scmp.eq.s32.totalorder %s55, 1
      %p708 = por %p706, %p707
      %p709 = scmp.ne.s32.totalorder %s701, %s704
      %p710 = scmp.eq.s32.totalorder %s55, 0
      %p711 = por %p709, %p710
      %p712 = scmp.ne.s32.totalorder %s701, %s704
      %p713 = scmp.eq.s32.totalorder %s60, 1
      %p714 = por %p712, %p713
      %p715 = scmp.ne.s32.totalorder %s704, %s705
      %p716 = scmp.eq.s32.totalorder %s60, 0
      %p717 = por %p715, %p716
      %p718 = scmp.ne.s32.totalorder %s704, %s705
      %p719 = scmp.eq.s32.totalorder %s61, 1
      %p720 = por %p718, %p719
      %p722 = scmp.ne.s32.totalorder %s705, %s721
      %p723 = scmp.eq.s32.totalorder %s61, 0
      %p724 = por %p722, %p723
      %s725 = ssub.s32 %s62, %s74
      %p726 = scmp.eq.s32.totalorder %s725, 0
      %s728 = sadd.s32 %s727, 1
      %s729 = scalar_select %p726, %s727, %s728
      %p732 = pneg %p726
      %p733 = scmp.eq.s32.totalorder %s55, 1
      %p734 = por %p732, %p733
      %p735 = scmp.ne.s32.totalorder %s727, %s730
      %p736 = scmp.eq.s32.totalorder %s55, 0
      %p737 = por %p735, %p736
      %p738 = scmp.ne.s32.totalorder %s727, %s730
      %p739 = scmp.eq.s32.totalorder %s60, 1
      %p740 = por %p738, %p739
      %p741 = scmp.ne.s32.totalorder %s730, %s731
      %p742 = scmp.eq.s32.totalorder %s60, 0
      %p743 = por %p741, %p742
      %p744 = scmp.ne.s32.totalorder %s730, %s731
      %p745 = scmp.eq.s32.totalorder %s61, 1
      %p746 = por %p744, %p745
      %p748 = scmp.ne.s32.totalorder %s731, %s747
      %p749 = scmp.eq.s32.totalorder %s61, 0
      %p750 = por %p748, %p749
      %s751 = ssub.s32 %s63, %s70
      %s752 = ssub.s32 %s62, %s74
      %s753 = sor.u32 %s751, %s752
      %p754 = scmp.eq.s32.totalorder %s753, 0
      %s756 = sadd.s32 %s755, 1
      %s757 = scalar_select %p754, %s755, %s756
      %p760 = pneg %p754
      %p761 = scmp.eq.s32.totalorder %s55, 1
      %p762 = por %p760, %p761
      %p763 = scmp.ne.s32.totalorder %s755, %s758
      %p764 = scmp.eq.s32.totalorder %s55, 0
      %p765 = por %p763, %p764
      %p766 = scmp.ne.s32.totalorder %s755, %s758
      %p767 = scmp.eq.s32.totalorder %s60, 1
      %p768 = por %p766, %p767
      %p769 = scmp.ne.s32.totalorder %s758, %s759
      %p770 = scmp.eq.s32.totalorder %s60, 0
      %p771 = por %p769, %p770
      %p772 = scmp.ne.s32.totalorder %s758, %s759
      %p773 = scmp.eq.s32.totalorder %s61, 1
      %p774 = por %p772, %p773
      %p776 = scmp.ne.s32.totalorder %s759, %s775
      %p777 = scmp.eq.s32.totalorder %s61, 0
      %p778 = por %p776, %p777
      %s779 = ssub.s32 %s63, %s70
      %s780 = ssub.s32 %s62, %s74
      %s781 = sor.u32 %s779, %s780
      %p782 = scmp.eq.s32.totalorder %s781, 0
      %s784 = sadd.s32 %s783, 1
      %s785 = scalar_select %p782, %s783, %s784
      %p788 = pneg %p782
      %p789 = scmp.eq.s32.totalorder %s55, 1
      %p790 = por %p788, %p789
      %p791 = scmp.ne.s32.totalorder %s783, %s786
      %p792 = scmp.eq.s32.totalorder %s55, 0
      %p793 = por %p791, %p792
      %p794 = scmp.ne.s32.totalorder %s783, %s786
      %p795 = scmp.eq.s32.totalorder %s60, 1
      %p796 = por %p794, %p795
      %p797 = scmp.ne.s32.totalorder %s786, %s787
      %p798 = scmp.eq.s32.totalorder %s60, 0
      %p799 = por %p797, %p798
      %p800 = scmp.ne.s32.totalorder %s786, %s787
      %p801 = scmp.eq.s32.totalorder %s61, 1
      %p802 = por %p800, %p801
      %p804 = scmp.ne.s32.totalorder %s787, %s803
      %p805 = scmp.eq.s32.totalorder %s61, 0
      %p806 = por %p804, %p805
      %s807 = ssub.s32 %s62, %s74
      %p808 = scmp.eq.s32.totalorder %s807, 0
      %s810 = sadd.s32 %s809, 1
      %s811 = scalar_select %p808, %s809, %s810
      %p814 = pneg %p808
      %p815 = scmp.eq.s32.totalorder %s55, 1
      %p816 = por %p814, %p815
      %p817 = scmp.ne.s32.totalorder %s809, %s812
      %p818 = scmp.eq.s32.totalorder %s55, 0
      %p819 = por %p817, %p818
      %p820 = scmp.ne.s32.totalorder %s809, %s812
      %p821 = scmp.eq.s32.totalorder %s60, 1
      %p822 = por %p820, %p821
      %p823 = scmp.ne.s32.totalorder %s812, %s813
      %p824 = scmp.eq.s32.totalorder %s60, 0
      %p825 = por %p823, %p824
      %p826 = scmp.ne.s32.totalorder %s812, %s813
      %p827 = scmp.eq.s32.totalorder %s61, 1
      %p828 = por %p826, %p827
      %p830 = scmp.ne.s32.totalorder %s813, %s829
      %p831 = scmp.eq.s32.totalorder %s61, 0
      %p832 = por %p830, %p831
      %p833 = scmp.le.s32.totalorder 1, %s55
      %p834 = scmp.lt.s32.totalorder %s55, 3
      %p835 = pnand %p833, %p834
      %p836 = pneg %p835
      // Predicated region
      $region9: #{tpu_custom_call.1} parent=5 // pred_check
        _
      $region10: #{tpu_custom_call.1} parent=5 // pred_check_branch
        %838 = sbr.rel (%p835) target = $region12
      $region11: #{tpu_custom_call.1} parent=5 // pred_region
        %s839 = ssub.s32 %s55, 1
        // Predicated region
        $region13: #{tpu_custom_call.1} parent=11 // pred_check
          %p840 = pneg %p93
        $region14: #{tpu_custom_call.1} parent=11 // pred_check_branch
          %842 = sbr.rel (%p840) target = $region16
        $region15: #{tpu_custom_call.1} parent=11 // pred_region
          %s843 = smul.u32 2, %s64
          %s845 = ssub.s32 256, 256
          %846 = vsyncadd [#allocation3], %s845
          %s847 = smul.addr %s843, 128
          %s848 = scalar_lea.hbm %s0, %s847
          %s849 = sshll.u32 [#allocation2], 4
          %s850 = int_to_ptr.vmem [resolvable:$true] %s849
          %855 = dma.hbm_to_vmem [thread:$0]  %s848, 256, %s850, [#allocation3], 128, 128, 8
        $region16: #{tpu_custom_call.1} parent=11 // pred_fallthru
          _
        // Predicated region
        $region17: #{tpu_custom_call.1} parent=11 // pred_check
          %p856 = pneg %p119
        $region18: #{tpu_custom_call.1} parent=11 // pred_check_branch
          %858 = sbr.rel (%p856) target = $region20
        $region19: #{tpu_custom_call.1} parent=11 // pred_region
          %s859 = smul.u32 2, %s64
          %s861 = ssub.s32 256, 256
          %862 = vsyncadd [#allocation6], %s861
          %s863 = smul.addr %s859, 128
          %s864 = scalar_lea.hbm %s1, %s863
          %s865 = sshll.u32 [#allocation5], 4
          %s866 = int_to_ptr.vmem [resolvable:$true] %s865
          %871 = dma.hbm_to_vmem [thread:$0]  %s864, 256, %s866, [#allocation6], 128, 128, 8
        $region20: #{tpu_custom_call.1} parent=11 // pred_fallthru
          _
        // Predicated region
        $region21: #{tpu_custom_call.1} parent=11 // pred_check
          %p872 = pneg %p145
        $region22: #{tpu_custom_call.1} parent=11 // pred_check_branch
          %874 = sbr.rel (%p872) target = $region24
        $region23: #{tpu_custom_call.1} parent=11 // pred_region
          %s875 = smul.u32 2, %s64
          %s877 = ssub.s32 256, 256
          %878 = vsyncadd [#allocation6], %s877
          %s879 = smul.addr %s875, 128
          %s880 = scalar_lea.hbm %s2, %s879
          %s881 = sshll.u32 [#allocation7], 4
          %s882 = int_to_ptr.vmem [resolvable:$true] %s881
          %887 = dma.hbm_to_vmem [thread:$0]  %s880, 256, %s882, [#allocation6], 128, 128, 8
        $region24: #{tpu_custom_call.1} parent=11 // pred_fallthru
          _
        // Predicated region
        $region25: #{tpu_custom_call.1} parent=11 // pred_check
          %p888 = pneg %p171
        $region26: #{tpu_custom_call.1} parent=11 // pred_check_branch
          %890 = sbr.rel (%p888) target = $region28
        $region27: #{tpu_custom_call.1} parent=11 // pred_region
          %s891 = smul.u32 2, %s64
          %s893 = ssub.s32 256, 256
          %894 = vsyncadd [#allocation9], %s893
          %s895 = smul.addr %s891, 128
          %s896 = scalar_lea.hbm %s3, %s895
          %s897 = sshll.u32 [#allocation8], 4
          %s898 = int_to_ptr.vmem [resolvable:$true] %s897
          %903 = dma.hbm_to_vmem [thread:$0]  %s896, 256, %s898, [#allocation9], 128, 128, 8
        $region28: #{tpu_custom_call.1} parent=11 // pred_fallthru
          _
        // Predicated region
        $region29: #{tpu_custom_call.1} parent=11 // pred_check
          %p904 = pneg %p197
        $region30: #{tpu_custom_call.1} parent=11 // pred_check_branch
          %906 = sbr.rel (%p904) target = $region32
        $region31: #{tpu_custom_call.1} parent=11 // pred_region
          %s907 = smul.u32 2, %s64
          %s909 = ssub.s32 256, 256
          %910 = vsyncadd [#allocation9], %s909
          %s911 = smul.addr %s907, 128
          %s912 = scalar_lea.hbm %s4, %s911
          %s913 = sshll.u32 [#allocation10], 4
          %s914 = int_to_ptr.vmem [resolvable:$true] %s913
          %919 = dma.hbm_to_vmem [thread:$0]  %s912, 256, %s914, [#allocation9], 128, 128, 8
        $region32: #{tpu_custom_call.1} parent=11 // pred_fallthru
          _
      $region12: #{tpu_custom_call.1} parent=5 // pred_fallthru
        _
      %p920 = scmp.lt.s32.totalorder %s55, 2
      // Predicated region
      $region33: #{tpu_custom_call.1} parent=5 // pred_check
        %p921 = pneg %p920
      $region34: #{tpu_custom_call.1} parent=5 // pred_check_branch
        %923 = sbr.rel (%p921) target = $region36
      $region35: #{tpu_custom_call.1} parent=5 // pred_region
        // Predicated region
        $region37: #{tpu_custom_call.1} parent=35 // pred_check
          %p924 = pneg %p217
        $region38: #{tpu_custom_call.1} parent=35 // pred_check_branch
          %926 = sbr.rel (%p924) target = $region40
        $region39: #{tpu_custom_call.1} parent=35 // pred_region
          %p927 = scmp.lt.s32.totalorder %s63, 1
          %s928 = scalar_select %p927, %s63, 1
          %s929 = smul.addr %s928, 4
          %s930 = smul.addr %s929, 4
          %s931 = scalar_lea.vmem %s5, %s930
        $region40: #{tpu_custom_call.1} parent=35 // pred_fallthru
          _
        // Predicated region
        $region41: #{tpu_custom_call.1} parent=35 // pred_check
          %p932 = pneg %p243
        $region42: #{tpu_custom_call.1} parent=35 // pred_check_branch
          %934 = sbr.rel (%p932) target = $region44
        $region43: #{tpu_custom_call.1} parent=35 // pred_region
          %s935 = sand.u32 %s55, 1
          %s936 = scalar_lea.sflag [#allocation12], %s935
          %s937 = sand.u32 %s233, 1
          %s938 = scalar_lea.vmem [#allocation11], %s937
          %s940 = ssub.s32 16, 16
          %941 = vsyncadd %s936, %s940
          %s942 = smul.addr %s63, 16
          %s943 = scalar_lea.hbm %s6, %s942
          %s945 = sshll.u32 %s938, 4
          %s946 = int_to_ptr.vmem [resolvable:$true] %s945
          %948 = dma.hbm_to_vmem [thread:$0]  %s943, 16, %s946, %s936
        $region44: #{tpu_custom_call.1} parent=35 // pred_fallthru
          _
        // Predicated region
        $region45: #{tpu_custom_call.1} parent=35 // pred_check
          %p949 = pneg %p269
        $region46: #{tpu_custom_call.1} parent=35 // pred_check_branch
          %951 = sbr.rel (%p949) target = $region48
        $region47: #{tpu_custom_call.1} parent=35 // pred_region
          %p952 = scmp.lt.s32.totalorder %s63, 1
          %s953 = scalar_select %p952, %s63, 1
          %s954 = smul.addr %s953, 4
          %s955 = smul.addr %s954, 4
          %s956 = scalar_lea.vmem %s7, %s955
        $region48: #{tpu_custom_call.1} parent=35 // pred_fallthru
          _
        // Predicated region
        $region49: #{tpu_custom_call.1} parent=35 // pred_check
          %p957 = pneg %p295
        $region50: #{tpu_custom_call.1} parent=35 // pred_check_branch
          %959 = sbr.rel (%p957) target = $region52
        $region51: #{tpu_custom_call.1} parent=35 // pred_region
          %s960 = sand.u32 %s55, 1
          %s961 = scalar_lea.sflag [#allocation12], %s960
          %s962 = sand.u32 %s285, 1
          %s963 = scalar_lea.vmem [#allocation13], %s962
          %s965 = ssub.s32 16, 16
          %966 = vsyncadd %s961, %s965
          %s967 = smul.addr %s63, 16
          %s968 = scalar_lea.hbm %s8, %s967
          %s970 = sshll.u32 %s963, 4
          %s971 = int_to_ptr.vmem [resolvable:$true] %s970
          %973 = dma.hbm_to_vmem [thread:$0]  %s968, 16, %s971, %s961
        $region52: #{tpu_custom_call.1} parent=35 // pred_fallthru
          _
        // Predicated region
        $region53: #{tpu_custom_call.1} parent=35 // pred_check
          %p974 = pneg %p321
        $region54: #{tpu_custom_call.1} parent=35 // pred_check_branch
          %976 = sbr.rel (%p974) target = $region56
        $region55: #{tpu_custom_call.1} parent=35 // pred_region
          %p977 = scmp.lt.s32.totalorder %s63, 1
          %s978 = scalar_select %p977, %s63, 1
          %s979 = smul.addr %s978, 4
          %s980 = smul.addr %s979, 4
          %s981 = scalar_lea.vmem %s9, %s980
        $region56: #{tpu_custom_call.1} parent=35 // pred_fallthru
          _
        // Predicated region
        $region57: #{tpu_custom_call.1} parent=35 // pred_check
          %p982 = pneg %p347
        $region58: #{tpu_custom_call.1} parent=35 // pred_check_branch
          %984 = sbr.rel (%p982) target = $region60
        $region59: #{tpu_custom_call.1} parent=35 // pred_region
          %s985 = sand.u32 %s55, 1
          %s986 = scalar_lea.sflag [#allocation15], %s985
          %s987 = sand.u32 %s337, 1
          %s988 = scalar_lea.vmem [#allocation14], %s987
          %s990 = ssub.s32 16, 16
          %991 = vsyncadd %s986, %s990
          %s992 = smul.addr %s63, 16
          %s993 = scalar_lea.hbm %s10, %s992
          %s995 = sshll.u32 %s988, 4
          %s996 = int_to_ptr.vmem [resolvable:$true] %s995
          %998 = dma.hbm_to_vmem [thread:$0]  %s993, 16, %s996, %s986
        $region60: #{tpu_custom_call.1} parent=35 // pred_fallthru
          _
        // Predicated region
        $region61: #{tpu_custom_call.1} parent=35 // pred_check
          %p999 = pneg %p373
        $region62: #{tpu_custom_call.1} parent=35 // pred_check_branch
          %1001 = sbr.rel (%p999) target = $region64
        $region63: #{tpu_custom_call.1} parent=35 // pred_region
          %p1002 = scmp.lt.s32.totalorder %s63, 1
          %s1003 = scalar_select %p1002, %s63, 1
          %s1004 = smul.addr %s1003, 4
          %s1005 = smul.addr %s1004, 4
          %s1006 = scalar_lea.vmem %s11, %s1005
        $region64: #{tpu_custom_call.1} parent=35 // pred_fallthru
          _
        // Predicated region
        $region65: #{tpu_custom_call.1} parent=35 // pred_check
          %p1007 = pneg %p399
        $region66: #{tpu_custom_call.1} parent=35 // pred_check_branch
          %1009 = sbr.rel (%p1007) target = $region68
        $region67: #{tpu_custom_call.1} parent=35 // pred_region
          %s1010 = sand.u32 %s55, 1
          %s1011 = scalar_lea.sflag [#allocation15], %s1010
          %s1012 = sand.u32 %s389, 1
          %s1013 = scalar_lea.vmem [#allocation16], %s1012
          %s1015 = ssub.s32 16, 16
          %1016 = vsyncadd %s1011, %s1015
          %s1017 = smul.addr %s63, 16
          %s1018 = scalar_lea.hbm %s12, %s1017
          %s1020 = sshll.u32 %s1013, 4
          %s1021 = int_to_ptr.vmem [resolvable:$true] %s1020
          %1023 = dma.hbm_to_vmem [thread:$0]  %s1018, 16, %s1021, %s1011
        $region68: #{tpu_custom_call.1} parent=35 // pred_fallthru
          _
        // Predicated region
        $region69: #{tpu_custom_call.1} parent=35 // pred_check
          %p1024 = pneg %p425
        $region70: #{tpu_custom_call.1} parent=35 // pred_check_branch
          %1026 = sbr.rel (%p1024) target = $region72
        $region71: #{tpu_custom_call.1} parent=35 // pred_region
          %s1027 = sand.u32 %s55, 1
          %s1028 = scalar_lea.sflag [#allocation18], %s1027
          %s1029 = sand.u32 %s415, 1
          %s1030 = smul.addr %s1029, 16
          %s1031 = scalar_lea.vmem [#allocation17], %s1030
          %s1033 = ssub.s32 256, 256
          %1034 = vsyncadd %s1028, %s1033
          %s1035 = smul.addr %s63, 4
          %s1036 = smul.addr %s1035, 64
          %s1037 = scalar_lea.hbm %s13, %s1036
          %s1038 = sshll.u32 %s1031, 4
          %s1039 = int_to_ptr.vmem [resolvable:$true] %s1038
          %1044 = dma.hbm_to_vmem [thread:$0]  %s1037, 256, %s1039, %s1028, 64, 64, 4
        $region72: #{tpu_custom_call.1} parent=35 // pred_fallthru
          _
        // Predicated region
        $region73: #{tpu_custom_call.1} parent=35 // pred_check
          %p1045 = pneg %p451
        $region74: #{tpu_custom_call.1} parent=35 // pred_check_branch
          %1047 = sbr.rel (%p1045) target = $region76
        $region75: #{tpu_custom_call.1} parent=35 // pred_region
          %s1048 = sand.u32 %s55, 1
          %s1049 = scalar_lea.sflag [#allocation18], %s1048
          %s1050 = sand.u32 %s441, 1
          %s1051 = scalar_lea.vmem [#allocation19], %s1050
          %s1053 = ssub.s32 16, 16
          %1054 = vsyncadd %s1049, %s1053
          %s1055 = smul.addr %s63, 16
          %s1056 = scalar_lea.hbm %s14, %s1055
          %s1058 = sshll.u32 %s1051, 4
          %s1059 = int_to_ptr.vmem [resolvable:$true] %s1058
          %1061 = dma.hbm_to_vmem [thread:$0]  %s1056, 16, %s1059, %s1049
        $region76: #{tpu_custom_call.1} parent=35 // pred_fallthru
          _
        // Predicated region
        $region77: #{tpu_custom_call.1} parent=35 // pred_check
          %p1062 = pneg %p477
        $region78: #{tpu_custom_call.1} parent=35 // pred_check_branch
          %1064 = sbr.rel (%p1062) target = $region80
        $region79: #{tpu_custom_call.1} parent=35 // pred_region
          %s1065 = sand.u32 %s55, 1
          %s1066 = scalar_lea.sflag [#allocation21], %s1065
          %s1067 = sand.u32 %s467, 1
          %s1068 = smul.addr %s1067, 16
          %s1069 = scalar_lea.vmem [#allocation20], %s1068
          %s1071 = ssub.s32 256, 256
          %1072 = vsyncadd %s1066, %s1071
          %s1073 = smul.addr %s63, 4
          %s1074 = smul.addr %s1073, 64
          %s1075 = scalar_lea.hbm %s15, %s1074
          %s1076 = sshll.u32 %s1069, 4
          %s1077 = int_to_ptr.vmem [resolvable:$true] %s1076
          %1082 = dma.hbm_to_vmem [thread:$0]  %s1075, 256, %s1077, %s1066, 64, 64, 4
        $region80: #{tpu_custom_call.1} parent=35 // pred_fallthru
          _
        // Predicated region
        $region81: #{tpu_custom_call.1} parent=35 // pred_check
          %p1083 = pneg %p503
        $region82: #{tpu_custom_call.1} parent=35 // pred_check_branch
          %1085 = sbr.rel (%p1083) target = $region84
        $region83: #{tpu_custom_call.1} parent=35 // pred_region
          %s1086 = sand.u32 %s55, 1
          %s1087 = scalar_lea.sflag [#allocation21], %s1086
          %s1088 = sand.u32 %s493, 1
          %s1089 = scalar_lea.vmem [#allocation22], %s1088
          %s1091 = ssub.s32 16, 16
          %1092 = vsyncadd %s1087, %s1091
          %s1093 = smul.addr %s63, 16
          %s1094 = scalar_lea.hbm %s16, %s1093
          %s1096 = sshll.u32 %s1089, 4
          %s1097 = int_to_ptr.vmem [resolvable:$true] %s1096
          %1099 = dma.hbm_to_vmem [thread:$0]  %s1094, 16, %s1097, %s1087
        $region84: #{tpu_custom_call.1} parent=35 // pred_fallthru
          _
        // Predicated region
        $region85: #{tpu_custom_call.1} parent=35 // pred_check
          %p1100 = pneg %p529
        $region86: #{tpu_custom_call.1} parent=35 // pred_check_branch
          %1102 = sbr.rel (%p1100) target = $region88
        $region87: #{tpu_custom_call.1} parent=35 // pred_region
          %p1103 = scmp.lt.s32.totalorder %s63, 1
          %s1104 = scalar_select %p1103, %s63, 1
          %s1105 = smul.addr %s1104, 8
          %s1106 = smul.addr %s1105, 4
          %s1107 = scalar_lea.vmem %s17, %s1106
        $region88: #{tpu_custom_call.1} parent=35 // pred_fallthru
          _
        // Predicated region
        $region89: #{tpu_custom_call.1} parent=35 // pred_check
          %p1108 = pneg %p555
        $region90: #{tpu_custom_call.1} parent=35 // pred_check_branch
          %1110 = sbr.rel (%p1108) target = $region92
        $region91: #{tpu_custom_call.1} parent=35 // pred_region
          %p1111 = scmp.lt.s32.totalorder %s63, 1
          %s1112 = scalar_select %p1111, %s63, 1
          %s1113 = scalar_lea.vmem %s18, %s1112
        $region92: #{tpu_custom_call.1} parent=35 // pred_fallthru
          _
        // Predicated region
        $region93: #{tpu_custom_call.1} parent=35 // pred_check
          %p1114 = pneg %p581
        $region94: #{tpu_custom_call.1} parent=35 // pred_check_branch
          %1116 = sbr.rel (%p1114) target = $region96
        $region95: #{tpu_custom_call.1} parent=35 // pred_region
          %p1117 = scmp.lt.s32.totalorder %s63, 1
          %s1118 = scalar_select %p1117, %s63, 1
          %s1119 = scalar_lea.vmem %s19, %s1118
        $region96: #{tpu_custom_call.1} parent=35 // pred_fallthru
          _
        // Predicated region
        $region97: #{tpu_custom_call.1} parent=35 // pred_check
          %p1120 = pneg %p607
        $region98: #{tpu_custom_call.1} parent=35 // pred_check_branch
          %1122 = sbr.rel (%p1120) target = $region100
        $region99: #{tpu_custom_call.1} parent=35 // pred_region
          %p1123 = scmp.lt.s32.totalorder %s63, 1
          %s1124 = scalar_select %p1123, %s63, 1
          %s1125 = scalar_lea.vmem %s20, %s1124
        $region100: #{tpu_custom_call.1} parent=35 // pred_fallthru
          _
        // Predicated region
        $region101: #{tpu_custom_call.1} parent=35 // pred_check
          %p1126 = pneg %p633
        $region102: #{tpu_custom_call.1} parent=35 // pred_check_branch
          %1128 = sbr.rel (%p1126) target = $region104
        $region103: #{tpu_custom_call.1} parent=35 // pred_region
          %p1129 = scmp.lt.s32.totalorder %s63, 1
          %s1130 = scalar_select %p1129, %s63, 1
          %s1131 = scalar_lea.vmem %s21, %s1130
        $region104: #{tpu_custom_call.1} parent=35 // pred_fallthru
          _
        // Predicated region
        $region105: #{tpu_custom_call.1} parent=35 // pred_check
          %p1132 = pneg %p659
        $region106: #{tpu_custom_call.1} parent=35 // pred_check_branch
          %1134 = sbr.rel (%p1132) target = $region108
        $region107: #{tpu_custom_call.1} parent=35 // pred_region
          %p1135 = scmp.lt.s32.totalorder %s63, 1
          %s1136 = scalar_select %p1135, %s63, 1
          %s1137 = scalar_lea.vmem %s22, %s1136
        $region108: #{tpu_custom_call.1} parent=35 // pred_fallthru
          _
        // Predicated region
        $region109: #{tpu_custom_call.1} parent=35 // pred_check
          %p1138 = pneg %p685
        $region110: #{tpu_custom_call.1} parent=35 // pred_check_branch
          %1140 = sbr.rel (%p1138) target = $region112
        $region111: #{tpu_custom_call.1} parent=35 // pred_region
          %p1141 = scmp.lt.s32.totalorder %s63, 1
          %s1142 = scalar_select %p1141, %s63, 1
          %s1143 = scalar_lea.vmem %s23, %s1142
        $region112: #{tpu_custom_call.1} parent=35 // pred_fallthru
          _
        // Predicated region
        $region113: #{tpu_custom_call.1} parent=35 // pred_check
          %p1144 = pneg %p711
        $region114: #{tpu_custom_call.1} parent=35 // pred_check_branch
          %1146 = sbr.rel (%p1144) target = $region116
        $region115: #{tpu_custom_call.1} parent=35 // pred_region
          %p1147 = scmp.lt.s32.totalorder %s63, 1
          %s1148 = scalar_select %p1147, %s63, 1
          %s1149 = scalar_lea.vmem %s24, %s1148
        $region116: #{tpu_custom_call.1} parent=35 // pred_fallthru
          _
      $region36: #{tpu_custom_call.1} parent=5 // pred_fallthru
        _
      %p1150 = scmp.le.s32.totalorder 1, %s55
      %p1151 = scmp.lt.s32.totalorder %s55, 3
      %p1152 = pnand %p1150, %p1151
      %p1153 = pneg %p1152
      // Predicated region
      $region117: #{tpu_custom_call.1} parent=5 // pred_check
        _
      $region118: #{tpu_custom_call.1} parent=5 // pred_check_branch
        %1155 = sbr.rel (%p1152) target = $region120
      $region119: #{tpu_custom_call.1} parent=5 // pred_region
        %s1156 = ssub.s32 %s55, 1
        // Predicated region
        $region121: #{tpu_custom_call.1} parent=119 // pred_check
          %p1157 = pneg %p93
        $region122: #{tpu_custom_call.1} parent=119 // pred_check_branch
          %1159 = sbr.rel (%p1157) target = $region124
        $region123: #{tpu_custom_call.1} parent=119 // pred_region
          %1160 = dma.done [#allocation3], 256
        $region124: #{tpu_custom_call.1} parent=119 // pred_fallthru
          _
        // Predicated region
        $region125: #{tpu_custom_call.1} parent=119 // pred_check
          %p1161 = pneg %p119
        $region126: #{tpu_custom_call.1} parent=119 // pred_check_branch
          %1163 = sbr.rel (%p1161) target = $region128
        $region127: #{tpu_custom_call.1} parent=119 // pred_region
          %1164 = dma.done [#allocation6], 256
        $region128: #{tpu_custom_call.1} parent=119 // pred_fallthru
          _
        // Predicated region
        $region129: #{tpu_custom_call.1} parent=119 // pred_check
          %p1165 = pneg %p145
        $region130: #{tpu_custom_call.1} parent=119 // pred_check_branch
          %1167 = sbr.rel (%p1165) target = $region132
        $region131: #{tpu_custom_call.1} parent=119 // pred_region
          %1168 = dma.done [#allocation6], 256
        $region132: #{tpu_custom_call.1} parent=119 // pred_fallthru
          _
        // Predicated region
        $region133: #{tpu_custom_call.1} parent=119 // pred_check
          %p1169 = pneg %p171
        $region134: #{tpu_custom_call.1} parent=119 // pred_check_branch
          %1171 = sbr.rel (%p1169) target = $region136
        $region135: #{tpu_custom_call.1} parent=119 // pred_region
          %1172 = dma.done [#allocation9], 256
        $region136: #{tpu_custom_call.1} parent=119 // pred_fallthru
          _
        // Predicated region
        $region137: #{tpu_custom_call.1} parent=119 // pred_check
          %p1173 = pneg %p197
        $region138: #{tpu_custom_call.1} parent=119 // pred_check_branch
          %1175 = sbr.rel (%p1173) target = $region140
        $region139: #{tpu_custom_call.1} parent=119 // pred_region
          %1176 = dma.done [#allocation9], 256
        $region140: #{tpu_custom_call.1} parent=119 // pred_fallthru
          _
        %s1177 = sand.u32 %s60, 1
        %s1178 = scalar_lea.sflag [#allocation12], %s1177
        %s1179 = sand.u32 %s236, 1
        %s1180 = scalar_lea.vmem [#allocation11], %s1179
        // Predicated region
        $region141: #{tpu_custom_call.1} parent=119 // pred_check
          %p1181 = pneg %p249
        $region142: #{tpu_custom_call.1} parent=119 // pred_check_branch
          %1183 = sbr.rel (%p1181) target = $region144
        $region143: #{tpu_custom_call.1} parent=119 // pred_region
          %1184 = dma.done %s1178, 16
        $region144: #{tpu_custom_call.1} parent=119 // pred_fallthru
          _
        %s1185 = sand.u32 %s60, 1
        %s1186 = scalar_lea.sflag [#allocation12], %s1185
        %s1187 = sand.u32 %s288, 1
        %s1188 = scalar_lea.vmem [#allocation13], %s1187
        // Predicated region
        $region145: #{tpu_custom_call.1} parent=119 // pred_check
          %p1189 = pneg %p301
        $region146: #{tpu_custom_call.1} parent=119 // pred_check_branch
          %1191 = sbr.rel (%p1189) target = $region148
        $region147: #{tpu_custom_call.1} parent=119 // pred_region
          %1192 = dma.done %s1186, 16
        $region148: #{tpu_custom_call.1} parent=119 // pred_fallthru
          _
        %s1193 = sand.u32 %s60, 1
        %s1194 = scalar_lea.sflag [#allocation15], %s1193
        %s1195 = sand.u32 %s340, 1
        %s1196 = scalar_lea.vmem [#allocation14], %s1195
        // Predicated region
        $region149: #{tpu_custom_call.1} parent=119 // pred_check
          %p1197 = pneg %p353
        $region150: #{tpu_custom_call.1} parent=119 // pred_check_branch
          %1199 = sbr.rel (%p1197) target = $region152
        $region151: #{tpu_custom_call.1} parent=119 // pred_region
          %1200 = dma.done %s1194, 16
        $region152: #{tpu_custom_call.1} parent=119 // pred_fallthru
          _
        %s1201 = sand.u32 %s60, 1
        %s1202 = scalar_lea.sflag [#allocation15], %s1201
        %s1203 = sand.u32 %s392, 1
        %s1204 = scalar_lea.vmem [#allocation16], %s1203
        // Predicated region
        $region153: #{tpu_custom_call.1} parent=119 // pred_check
          %p1205 = pneg %p405
        $region154: #{tpu_custom_call.1} parent=119 // pred_check_branch
          %1207 = sbr.rel (%p1205) target = $region156
        $region155: #{tpu_custom_call.1} parent=119 // pred_region
          %1208 = dma.done %s1202, 16
        $region156: #{tpu_custom_call.1} parent=119 // pred_fallthru
          _
        %s1209 = sand.u32 %s60, 1
        %s1210 = scalar_lea.sflag [#allocation18], %s1209
        %s1211 = sand.u32 %s418, 1
        %s1212 = smul.addr %s1211, 16
        %s1213 = scalar_lea.vmem [#allocation17], %s1212
        // Predicated region
        $region157: #{tpu_custom_call.1} parent=119 // pred_check
          %p1214 = pneg %p431
        $region158: #{tpu_custom_call.1} parent=119 // pred_check_branch
          %1216 = sbr.rel (%p1214) target = $region160
        $region159: #{tpu_custom_call.1} parent=119 // pred_region
          %1217 = dma.done %s1210, 256
        $region160: #{tpu_custom_call.1} parent=119 // pred_fallthru
          _
        %s1218 = sand.u32 %s60, 1
        %s1219 = scalar_lea.sflag [#allocation18], %s1218
        %s1220 = sand.u32 %s444, 1
        %s1221 = scalar_lea.vmem [#allocation19], %s1220
        // Predicated region
        $region161: #{tpu_custom_call.1} parent=119 // pred_check
          %p1222 = pneg %p457
        $region162: #{tpu_custom_call.1} parent=119 // pred_check_branch
          %1224 = sbr.rel (%p1222) target = $region164
        $region163: #{tpu_custom_call.1} parent=119 // pred_region
          %1225 = dma.done %s1219, 16
        $region164: #{tpu_custom_call.1} parent=119 // pred_fallthru
          _
        %s1226 = sand.u32 %s60, 1
        %s1227 = scalar_lea.sflag [#allocation21], %s1226
        %s1228 = sand.u32 %s470, 1
        %s1229 = smul.addr %s1228, 16
        %s1230 = scalar_lea.vmem [#allocation20], %s1229
        // Predicated region
        $region165: #{tpu_custom_call.1} parent=119 // pred_check
          %p1231 = pneg %p483
        $region166: #{tpu_custom_call.1} parent=119 // pred_check_branch
          %1233 = sbr.rel (%p1231) target = $region168
        $region167: #{tpu_custom_call.1} parent=119 // pred_region
          %1234 = dma.done %s1227, 256
        $region168: #{tpu_custom_call.1} parent=119 // pred_fallthru
          _
        %s1235 = sand.u32 %s60, 1
        %s1236 = scalar_lea.sflag [#allocation21], %s1235
        %s1237 = sand.u32 %s496, 1
        %s1238 = scalar_lea.vmem [#allocation22], %s1237
        // Predicated region
        $region169: #{tpu_custom_call.1} parent=119 // pred_check
          %p1239 = pneg %p509
        $region170: #{tpu_custom_call.1} parent=119 // pred_check_branch
          %1241 = sbr.rel (%p1239) target = $region172
        $region171: #{tpu_custom_call.1} parent=119 // pred_region
          %1242 = dma.done %s1236, 16
        $region172: #{tpu_custom_call.1} parent=119 // pred_fallthru
          _
        %p1243 = pneg %p93
        %p1244 = pneg %p90
        %p1245 = pneg %p119
        %p1246 = pneg %p116
        %p1247 = pneg %p145
        %p1248 = pneg %p142
        %p1249 = pneg %p171
        %p1250 = pneg %p168
        %p1251 = pneg %p197
        %p1252 = pneg %p194
        %p1253 = scmp.lt.s32.totalorder %s65, 1
        %s1254 = scalar_select %p1253, %s65, 1
        %s1255 = smul.addr %s1254, 4
        %s1256 = smul.addr %s1255, 4
        %s1257 = scalar_lea.vmem %s5, %s1256
        %p1258 = pneg %p223
        %p1259 = pneg %p220
        %s1260 = sand.u32 %s60, 1
        %s1261 = scalar_lea.sflag [#allocation12], %s1260
        %s1262 = sand.u32 %s236, 1
        %s1263 = scalar_lea.vmem [#allocation11], %s1262
        %p1264 = pneg %p249
        %p1265 = pneg %p246
        %p1266 = scmp.lt.s32.totalorder %s65, 1
        %s1267 = scalar_select %p1266, %s65, 1
        %s1268 = smul.addr %s1267, 4
        %s1269 = smul.addr %s1268, 4
        %s1270 = scalar_lea.vmem %s7, %s1269
        %p1271 = pneg %p275
        %p1272 = pneg %p272
        %s1273 = sand.u32 %s60, 1
        %s1274 = scalar_lea.sflag [#allocation12], %s1273
        %s1275 = sand.u32 %s288, 1
        %s1276 = scalar_lea.vmem [#allocation13], %s1275
        %p1277 = pneg %p301
        %p1278 = pneg %p298
        %p1279 = scmp.lt.s32.totalorder %s65, 1
        %s1280 = scalar_select %p1279, %s65, 1
        %s1281 = smul.addr %s1280, 4
        %s1282 = smul.addr %s1281, 4
        %s1283 = scalar_lea.vmem %s9, %s1282
        %p1284 = pneg %p327
        %p1285 = pneg %p324
        %s1286 = sand.u32 %s60, 1
        %s1287 = scalar_lea.sflag [#allocation15], %s1286
        %s1288 = sand.u32 %s340, 1
        %s1289 = scalar_lea.vmem [#allocation14], %s1288
        %p1290 = pneg %p353
        %p1291 = pneg %p350
        %p1292 = scmp.lt.s32.totalorder %s65, 1
        %s1293 = scalar_select %p1292, %s65, 1
        %s1294 = smul.addr %s1293, 4
        %s1295 = smul.addr %s1294, 4
        %s1296 = scalar_lea.vmem %s11, %s1295
        %p1297 = pneg %p379
        %p1298 = pneg %p376
        %s1299 = sand.u32 %s60, 1
        %s1300 = scalar_lea.sflag [#allocation15], %s1299
        %s1301 = sand.u32 %s392, 1
        %s1302 = scalar_lea.vmem [#allocation16], %s1301
        %p1303 = pneg %p405
        %p1304 = pneg %p402
        %s1305 = sand.u32 %s60, 1
        %s1306 = scalar_lea.sflag [#allocation18], %s1305
        %s1307 = sand.u32 %s418, 1
        %s1308 = smul.addr %s1307, 16
        %s1309 = scalar_lea.vmem [#allocation17], %s1308
        %p1310 = pneg %p431
        %p1311 = pneg %p428
        %s1312 = sand.u32 %s60, 1
        %s1313 = scalar_lea.sflag [#allocation18], %s1312
        %s1314 = sand.u32 %s444, 1
        %s1315 = scalar_lea.vmem [#allocation19], %s1314
        %p1316 = pneg %p457
        %p1317 = pneg %p454
        %s1318 = sand.u32 %s60, 1
        %s1319 = scalar_lea.sflag [#allocation21], %s1318
        %s1320 = sand.u32 %s470, 1
        %s1321 = smul.addr %s1320, 16
        %s1322 = scalar_lea.vmem [#allocation20], %s1321
        %p1323 = pneg %p483
        %p1324 = pneg %p480
        %s1325 = sand.u32 %s60, 1
        %s1326 = scalar_lea.sflag [#allocation21], %s1325
        %s1327 = sand.u32 %s496, 1
        %s1328 = scalar_lea.vmem [#allocation22], %s1327
        %p1329 = pneg %p509
        %p1330 = pneg %p506
        %p1331 = scmp.lt.s32.totalorder %s65, 1
        %s1332 = scalar_select %p1331, %s65, 1
        %s1333 = smul.addr %s1332, 8
        %s1334 = smul.addr %s1333, 4
        %s1335 = scalar_lea.vmem %s17, %s1334
        %p1336 = pneg %p535
        %p1337 = pneg %p532
        %p1338 = scmp.lt.s32.totalorder %s65, 1
        %s1339 = scalar_select %p1338, %s65, 1
        %s1340 = scalar_lea.vmem %s18, %s1339
        %p1341 = pneg %p561
        %p1342 = pneg %p558
        %p1343 = scmp.lt.s32.totalorder %s65, 1
        %s1344 = scalar_select %p1343, %s65, 1
        %s1345 = scalar_lea.vmem %s19, %s1344
        %p1346 = pneg %p587
        %p1347 = pneg %p584
        %p1348 = scmp.lt.s32.totalorder %s65, 1
        %s1349 = scalar_select %p1348, %s65, 1
        %s1350 = scalar_lea.vmem %s20, %s1349
        %p1351 = pneg %p613
        %p1352 = pneg %p610
        %p1353 = scmp.lt.s32.totalorder %s65, 1
        %s1354 = scalar_select %p1353, %s65, 1
        %s1355 = scalar_lea.vmem %s21, %s1354
        %p1356 = pneg %p639
        %p1357 = pneg %p636
        %p1358 = scmp.lt.s32.totalorder %s65, 1
        %s1359 = scalar_select %p1358, %s65, 1
        %s1360 = scalar_lea.vmem %s22, %s1359
        %p1361 = pneg %p665
        %p1362 = pneg %p662
        %p1363 = scmp.lt.s32.totalorder %s65, 1
        %s1364 = scalar_select %p1363, %s65, 1
        %s1365 = scalar_lea.vmem %s23, %s1364
        %p1366 = pneg %p691
        %p1367 = pneg %p688
        %p1368 = scmp.lt.s32.totalorder %s65, 1
        %s1369 = scalar_select %p1368, %s65, 1
        %s1370 = scalar_lea.vmem %s24, %s1369
        %p1371 = pneg %p717
        %p1372 = pneg %p714
        %p1373 = pneg %p743
        %p1374 = pneg %p740
        %p1375 = pneg %p771
        %p1376 = pneg %p768
        %s1377 = sand.u32 %s60, 1
        %s1378 = scalar_lea.sflag [#allocation25], %s1377
        %s1379 = sand.u32 %s758, 1
        %s1380 = smul.addr %s1379, 16
        %s1381 = scalar_lea.vmem [#allocation24], %s1380
        %p1382 = pneg %p799
        %p1383 = pneg %p796
        %s1384 = sand.u32 %s60, 1
        %s1385 = scalar_lea.sflag [#allocation25], %s1384
        %s1386 = sand.u32 %s786, 1
        %s1387 = smul.addr %s1386, 16
        %s1388 = scalar_lea.vmem [#allocation26], %s1387
        %p1389 = pneg %p825
        %p1390 = pneg %p822
        %s1391 = smul.u32 2, %s64
        %s1392 = smul.u32 2, %s64
        %s1393 = smul.u32 2, %s64
        %s1394 = smul.u32 2, %s64
        %s1395 = smul.u32 2, %s64
        %p1396 = scmp.lt.s32.totalorder %s65, 1
        %s1397 = scalar_select %p1396, %s65, 1
        %s1398 = smul.addr %s1397, 4
        %s1399 = smul.addr %s1398, 4
        %s1400 = scalar_lea.vmem %s5, %s1399
        %p1401 = scmp.lt.s32.totalorder %s65, 1
        %s1402 = scalar_select %p1401, %s65, 1
        %s1403 = smul.addr %s1402, 4
        %s1404 = smul.addr %s1403, 4
        %s1405 = scalar_lea.vmem %s7, %s1404
        %p1406 = scmp.lt.s32.totalorder %s65, 1
        %s1407 = scalar_select %p1406, %s65, 1
        %s1408 = smul.addr %s1407, 4
        %s1409 = smul.addr %s1408, 4
        %s1410 = scalar_lea.vmem %s9, %s1409
        %p1411 = scmp.lt.s32.totalorder %s65, 1
        %s1412 = scalar_select %p1411, %s65, 1
        %s1413 = smul.addr %s1412, 4
        %s1414 = smul.addr %s1413, 4
        %s1415 = scalar_lea.vmem %s11, %s1414
        %p1416 = scmp.lt.s32.totalorder %s65, 1
        %s1417 = scalar_select %p1416, %s65, 1
        %s1418 = smul.addr %s1417, 8
        %s1419 = smul.addr %s1418, 4
        %s1420 = scalar_lea.vmem %s17, %s1419
        %p1421 = scmp.lt.s32.totalorder %s65, 1
        %s1422 = scalar_select %p1421, %s65, 1
        %s1423 = scalar_lea.vmem %s18, %s1422
        %p1424 = scmp.lt.s32.totalorder %s65, 1
        %s1425 = scalar_select %p1424, %s65, 1
        %s1426 = scalar_lea.vmem %s19, %s1425
        %p1427 = scmp.lt.s32.totalorder %s65, 1
        %s1428 = scalar_select %p1427, %s65, 1
        %s1429 = scalar_lea.vmem %s20, %s1428
        %p1430 = scmp.lt.s32.totalorder %s65, 1
        %s1431 = scalar_select %p1430, %s65, 1
        %s1432 = scalar_lea.vmem %s21, %s1431
        %p1433 = scmp.lt.s32.totalorder %s65, 1
        %s1434 = scalar_select %p1433, %s65, 1
        %s1435 = scalar_lea.vmem %s22, %s1434
        %p1436 = scmp.lt.s32.totalorder %s65, 1
        %s1437 = scalar_select %p1436, %s65, 1
        %s1438 = scalar_lea.vmem %s23, %s1437
        %p1439 = scmp.lt.s32.totalorder %s65, 1
        %s1440 = scalar_select %p1439, %s65, 1
        %s1441 = scalar_lea.vmem %s24, %s1440
        %s1442 = smul.u32 2, %s64
        %s1443 = smul.u32 2, %s64
        %s1444 = smul.u32 2, %s64
        %p1446 = scmp.eq.s32.totalorder %s65, 0
        // Predicated region
        $region173: #{tpu_custom_call.1} parent=119 // pred_check
          %p1447 = pneg %p1446
        $region174: #{tpu_custom_call.1} parent=119 // pred_check_branch
          %1449 = sbr.rel (%p1447) target = $region176
        $region175: #{tpu_custom_call.1} parent=119 // pred_region
          %v1450 = vld [vmem:[#allocation2] sm:$0xff]
          %v1451 = vld [vmem:[#allocation2 + $0x8] sm:$0xff]
          %vm1452 = vcmask 261120
          %1453 = vst.msk [vmem:[#allocation23] sm:$0xff] %vm1452, %v1450
          %1454 = vst.msk [vmem:[#allocation23 + $0x8] sm:$0xff] %vm1452, %v1451
          %vm1455 = vcmask 0
          %1456 = vst.msk [vmem:[#allocation27] sm:$0x1] %vm1455, 0.0
        $region176: #{tpu_custom_call.1} parent=119 // pred_fallthru
          _
        %v1457 = vld [vmem:[#allocation23] sm:$0xff]
        %v1458 = vld [vmem:[#allocation23 + $0x8] sm:$0xff]
        %v1459 = vld [vmem:[#allocation5] sm:$0xff]
        %v1460 = vld [vmem:[#allocation5 + $0x8] sm:$0xff]
        %v1461 = vpack.c.bf16 %v1458, %v1457
        %v1462 = vld [vmem:[%s1400] sm:$0xf]
        %v1463 = vld [vmem:[%s1400 + $0x4] sm:$0xf]
        %v1464 = vld [vmem:[%s1400 + $0x8] sm:$0xf]
        %v1465 = vld [vmem:[%s1400 + $0xc] sm:$0xf]
        %v1466 = vld [vmem:[%s1180] sm:$0x1]
        %v1468 = vlaneseq
        %v1469 = vshrl.u32 %v1468, 7
        %v1470 = vsub.s32 0, %v1469
        %v1471 = vrot.slane %v1466, %v1470
        %v1477 = vunpack.c.l.b16 %v1462
        %v1478 = vunpack.c.l.b16 %v1463
        %v1479 = vunpack.c.l.b16 %v1464
        %v1480 = vunpack.c.l.b16 %v1465
        %v1481 = vpack.c.b16 %v1478, %v1477
        %v1482 = vpack.c.b16 %v1480, %v1479
        %vm1485 = vcmask 261120
        %v1487 = vsel %vm1485, %v1461, 0
        %1489 = vmatprep.subr.bf16.mxu0 0
        %1490 = vmatpush1.bf16.msra.mxu0 %v1481
        %1491 = vmatprep.subr.bf16.mxu0 0
        %1492 = vmatpush1.bf16.msra.mxu0 %v1482
        %1493 = vmatprep.subr.bf16.mxu0 0
        %1494 = vmatpush1.bf16.msra.mxu0 0
        %1495 = vmatprep.subr.bf16.mxu0 0
        %1496 = vmatpush1.bf16.msra.mxu0 0
        %1497 = vmatprep.subr.bf16.mxu0 0
        %1498 = vmatpush1.bf16.msra.mxu0 0
        %1499 = vmatprep.subr.bf16.mxu0 0
        %1500 = vmatpush1.bf16.msra.mxu0 0
        %1501 = vmatprep.subr.bf16.mxu0 0
        %1502 = vmatpush1.bf16.msra.mxu0 0
        %1503 = vmatprep.subr.bf16.mxu0 0
        %1504 = vmatpush1.bf16.msra.mxu0 0
        %1505 = vmatprep.subr.bf16.mxu0 0
        %1506 = vmatpush1.bf16.msra.mxu0 0
        %1507 = vmatprep.subr.bf16.mxu0 0
        %1508 = vmatpush1.bf16.msra.mxu0 0
        %1509 = vmatprep.subr.bf16.mxu0 0
        %1510 = vmatpush1.bf16.msra.mxu0 0
        %1511 = vmatprep.subr.bf16.mxu0 0
        %1512 = vmatpush1.bf16.msra.mxu0 0
        %1513 = vmatprep.subr.bf16.mxu0 0
        %1514 = vmatpush1.bf16.msra.mxu0 0
        %1515 = vmatprep.subr.bf16.mxu0 0
        %1516 = vmatpush1.bf16.msra.mxu0 0
        %1517 = vmatprep.subr.bf16.mxu0 0
        %1518 = vmatpush1.bf16.msra.mxu0 0
        %1519 = vmatprep.subr.bf16.mxu0 0
        %1520 = vmatpush1.bf16.msra.mxu0 0
        %1521 = vmatprep.mubr.bf16.mxu0 0
        %1522 = vmatmul.mubr.bf16.gmra.mrb[0].mxu0 %v1487
        %v1523 = vpop.f32.mrb[0].mxu0
        %v1524 = vadd.f32 %v1471, %v1523
        %v1525 = vpop.f32.mrb[0].mxu0
        %v1526 = vpop.f32.mrb[0].mxu0
        %v1527 = vadd.f32 %v1471, %v1526
        %v1528 = vpop.f32.mrb[0].mxu0
        %1529 = vdwg.mxu0
        %v1530 = vld [vmem:[#allocation7] sm:$0xff]
        %v1531 = vld [vmem:[#allocation7 + $0x8] sm:$0xff]
        %v1532 = vld [vmem:[%s1405] sm:$0xf]
        %v1533 = vld [vmem:[%s1405 + $0x4] sm:$0xf]
        %v1534 = vld [vmem:[%s1405 + $0x8] sm:$0xf]
        %v1535 = vld [vmem:[%s1405 + $0xc] sm:$0xf]
        %v1536 = vld [vmem:[%s1188] sm:$0x1]
        %v1537 = vpack.c.bf16 %v1524, %v1524
        %v1538 = vpack.c.bf16 %v1527, %v1527
        %1540 = vrot.lane.b32.xlu0 %v1537, 96
        %v1541 = vpop.permute.xlu0 %1540
        %vm1542 = vcmask 64512
        %v1544 = vsel %vm1542, %v1537, 0
        %v1547 = vsel %vm1542, %v1541, 0
        %1549 = vmatprep.subr.bf16.mxu0 0
        %1550 = vmatpush1.bf16.xpose.msra.mxu0 %v1547
        %1551 = vmatprep.subr.bf16.mxu0 0
        %1552 = vmatpush1.bf16.xpose.msra.mxu0 0
        %1553 = vmatprep.subr.bf16.mxu0 0
        %1554 = vmatpush1.bf16.xpose.msra.mxu0 0
        %1555 = vmatprep.subr.bf16.mxu0 0
        %1556 = vmatpush1.bf16.xpose.msra.mxu0 0
        %1557 = vmatprep.subr.bf16.mxu0 0
        %1558 = vmatpush1.bf16.xpose.msra.mxu0 0
        %1559 = vmatprep.subr.bf16.mxu0 0
        %1560 = vmatpush1.bf16.xpose.msra.mxu0 0
        %1561 = vmatprep.subr.bf16.mxu0 0
        %1562 = vmatpush1.bf16.xpose.msra.mxu0 0
        %1563 = vmatprep.subr.bf16.mxu0 0
        %1564 = vmatpush1.bf16.xpose.msra.mxu0 0
        %1565 = vmatprep.subr.bf16.mxu0 0
        %1566 = vmatpush1.bf16.xpose.msra.mxu0 0
        %1567 = vmatprep.subr.bf16.mxu0 0
        %1568 = vmatpush1.bf16.xpose.msra.mxu0 0
        %1569 = vmatprep.subr.bf16.mxu0 0
        %1570 = vmatpush1.bf16.xpose.msra.mxu0 0
        %1571 = vmatprep.subr.bf16.mxu0 0
        %1572 = vmatpush1.bf16.xpose.msra.mxu0 0
        %1573 = vmatprep.subr.bf16.mxu0 0
        %1574 = vmatpush1.bf16.xpose.msra.mxu0 0
        %1575 = vmatprep.subr.bf16.mxu0 0
        %1576 = vmatpush1.bf16.xpose.msra.mxu0 0
        %1577 = vmatprep.subr.bf16.mxu0 0
        %1578 = vmatpush1.bf16.xpose.msra.mxu0 0
        %1579 = vmatprep.subr.bf16.mxu0 0
        %1580 = vmatpush1.bf16.xpose.msra.mxu0 0
        %1581 = vmatprep.mubr.bf16.mxu0 0
        %1582 = vmatmul.mubr.bf16.gmra.mrb[0].mxu0 %v1544
        %v1583 = vpop.f32.mrb[0].mxu0
        %v1584 = vadd.f32 0.0, %v1583
        %v1585 = vpop.f32.mrb[0].mxu0
        %v1586 = vpop.f32.mrb[0].mxu0
        %v1587 = vpop.f32.mrb[0].mxu0
        %1588 = vdwg.mxu0
        %1590 = vrot.lane.b32.xlu0 %v1538, 96
        %v1591 = vpop.permute.xlu0 %1590
        %v1593 = vsel %vm1542, %v1538, 0
        %v1596 = vsel %vm1542, %v1591, 0
        %1598 = vmatprep.subr.bf16.mxu0 0
        %1599 = vmatpush1.bf16.xpose.msra.mxu0 %v1596
        %1600 = vmatprep.subr.bf16.mxu0 0
        %1601 = vmatpush1.bf16.xpose.msra.mxu0 0
        %1602 = vmatprep.subr.bf16.mxu0 0
        %1603 = vmatpush1.bf16.xpose.msra.mxu0 0
        %1604 = vmatprep.subr.bf16.mxu0 0
        %1605 = vmatpush1.bf16.xpose.msra.mxu0 0
        %1606 = vmatprep.subr.bf16.mxu0 0
        %1607 = vmatpush1.bf16.xpose.msra.mxu0 0
        %1608 = vmatprep.subr.bf16.mxu0 0
        %1609 = vmatpush1.bf16.xpose.msra.mxu0 0
        %1610 = vmatprep.subr.bf16.mxu0 0
        %1611 = vmatpush1.bf16.xpose.msra.mxu0 0
        %1612 = vmatprep.subr.bf16.mxu0 0
        %1613 = vmatpush1.bf16.xpose.msra.mxu0 0
        %1614 = vmatprep.subr.bf16.mxu0 0
        %1615 = vmatpush1.bf16.xpose.msra.mxu0 0
        %1616 = vmatprep.subr.bf16.mxu0 0
        %1617 = vmatpush1.bf16.xpose.msra.mxu0 0
        %1618 = vmatprep.subr.bf16.mxu0 0
        %1619 = vmatpush1.bf16.xpose.msra.mxu0 0
        %1620 = vmatprep.subr.bf16.mxu0 0
        %1621 = vmatpush1.bf16.xpose.msra.mxu0 0
        %1622 = vmatprep.subr.bf16.mxu0 0
        %1623 = vmatpush1.bf16.xpose.msra.mxu0 0
        %1624 = vmatprep.subr.bf16.mxu0 0
        %1625 = vmatpush1.bf16.xpose.msra.mxu0 0
        %1626 = vmatprep.subr.bf16.mxu0 0
        %1627 = vmatpush1.bf16.xpose.msra.mxu0 0
        %1628 = vmatprep.subr.bf16.mxu0 0
        %1629 = vmatpush1.bf16.xpose.msra.mxu0 0
        %1630 = vmatprep.mubr.bf16.mxu0 0
        %1631 = vmatmul.mubr.bf16.gmra.mrb[0].mxu0 %v1593
        %v1632 = vpop.f32.mrb[0].mxu0
        %v1633 = vadd.f32 0.0, %v1632
        %v1634 = vpop.f32.mrb[0].mxu0
        %v1635 = vpop.f32.mrb[0].mxu0
        %v1636 = vpop.f32.mrb[0].mxu0
        %1637 = vdwg.mxu0
        %v1638 = vmul.f32 %v1584, 0.35355338
        %v1639 = vmul.f32 %v1633, 0.35355338
        %v1640 = vadd.f32 %v1638, %v1530
        %v1641 = vadd.f32 %v1639, %v1531
        %v1642 = vsel %vm1542, %v1640, -inf
        %1643 = vmax.xlane.f32.xlu0 %v1642
        %v1644 = vpop.xlane.xlu0 %1643
        %v1645 = vsel %vm1542, %v1641, -inf
        %1646 = vmax.xlane.f32.xlu0 %v1645
        %v1647 = vpop.xlane.xlu0 %1646
        %v1648 = vsub.f32 %v1640, %v1644
        %v1649 = vsub.f32 %v1641, %v1647
        %v1650 = vmul.f32 %v1648, 1.442695
        %v1651 = vpow.pop %v1650
        %v1652 = vmul.f32 %v1649, 1.442695
        %v1653 = vpow.pop %v1652
        %v1654 = vsel %vm1542, %v1651, 0.0
        %1655 = vadd.xlane.f32.xlu0 %v1654
        %v1656 = vpop.xlane.xlu0 %1655
        %v1657 = vsel %vm1542, %v1653, 0.0
        %1658 = vadd.xlane.f32.xlu0 %v1657
        %v1659 = vpop.xlane.xlu0 %1658
        %v1660 = vrcp.pop %v1656
        %v1661 = vrcp.pop %v1659
        %v1662 = vmul.f32 %v1651, %v1660
        %v1663 = vmul.f32 %v1653, %v1661
        %v1664 = vpack.c.bf16 %v1662, %v1662
        %v1665 = vpack.c.bf16 %v1663, %v1663
        %1666 = vrot.lane.b32.xlu0 %v1537, 64
        %v1667 = vpop.permute.xlu0 %1666
        %v1669 = vsel %vm1542, %v1664, 0
        %vm1671 = vcmask 1043456
        %v1673 = vsel %vm1671, %v1667, 0
        %1675 = vmatprep.subr.bf16.mxu0 0
        %1676 = vmatpush1.bf16.msra.mxu0 %v1673
        %1677 = vmatprep.subr.bf16.mxu0 0
        %1678 = vmatpush1.bf16.msra.mxu0 0
        %1679 = vmatprep.subr.bf16.mxu0 0
        %1680 = vmatpush1.bf16.msra.mxu0 0
        %1681 = vmatprep.subr.bf16.mxu0 0
        %1682 = vmatpush1.bf16.msra.mxu0 0
        %1683 = vmatprep.subr.bf16.mxu0 0
        %1684 = vmatpush1.bf16.msra.mxu0 0
        %1685 = vmatprep.subr.bf16.mxu0 0
        %1686 = vmatpush1.bf16.msra.mxu0 0
        %1687 = vmatprep.subr.bf16.mxu0 0
        %1688 = vmatpush1.bf16.msra.mxu0 0
        %1689 = vmatprep.subr.bf16.mxu0 0
        %1690 = vmatpush1.bf16.msra.mxu0 0
        %1691 = vmatprep.subr.bf16.mxu0 0
        %1692 = vmatpush1.bf16.msra.mxu0 0
        %1693 = vmatprep.subr.bf16.mxu0 0
        %1694 = vmatpush1.bf16.msra.mxu0 0
        %1695 = vmatprep.subr.bf16.mxu0 0
        %1696 = vmatpush1.bf16.msra.mxu0 0
        %1697 = vmatprep.subr.bf16.mxu0 0
        %1698 = vmatpush1.bf16.msra.mxu0 0
        %1699 = vmatprep.subr.bf16.mxu0 0
        %1700 = vmatpush1.bf16.msra.mxu0 0
        %1701 = vmatprep.subr.bf16.mxu0 0
        %1702 = vmatpush1.bf16.msra.mxu0 0
        %1703 = vmatprep.subr.bf16.mxu0 0
        %1704 = vmatpush1.bf16.msra.mxu0 0
        %1705 = vmatprep.subr.bf16.mxu0 0
        %1706 = vmatpush1.bf16.msra.mxu0 0
        %1707 = vmatprep.mubr.bf16.mxu0 0
        %1708 = vmatmul.mubr.bf16.gmra.mrb[0].mxu0 %v1669
        %v1709 = vpop.f32.mrb[0].mxu0
        %v1710 = vadd.f32 0.0, %v1709
        %v1711 = vpop.f32.mrb[0].mxu0
        %v1712 = vpop.f32.mrb[0].mxu0
        %v1713 = vpop.f32.mrb[0].mxu0
        %1714 = vdwg.mxu0
        %1715 = vrot.lane.b32.xlu0 %v1538, 64
        %v1716 = vpop.permute.xlu0 %1715
        %v1718 = vsel %vm1542, %v1665, 0
        %v1721 = vsel %vm1671, %v1716, 0
        %1723 = vmatprep.subr.bf16.mxu0 0
        %1724 = vmatpush1.bf16.msra.mxu0 %v1721
        %1725 = vmatprep.subr.bf16.mxu0 0
        %1726 = vmatpush1.bf16.msra.mxu0 0
        %1727 = vmatprep.subr.bf16.mxu0 0
        %1728 = vmatpush1.bf16.msra.mxu0 0
        %1729 = vmatprep.subr.bf16.mxu0 0
        %1730 = vmatpush1.bf16.msra.mxu0 0
        %1731 = vmatprep.subr.bf16.mxu0 0
        %1732 = vmatpush1.bf16.msra.mxu0 0
        %1733 = vmatprep.subr.bf16.mxu0 0
        %1734 = vmatpush1.bf16.msra.mxu0 0
        %1735 = vmatprep.subr.bf16.mxu0 0
        %1736 = vmatpush1.bf16.msra.mxu0 0
        %1737 = vmatprep.subr.bf16.mxu0 0
        %1738 = vmatpush1.bf16.msra.mxu0 0
        %1739 = vmatprep.subr.bf16.mxu0 0
        %1740 = vmatpush1.bf16.msra.mxu0 0
        %1741 = vmatprep.subr.bf16.mxu0 0
        %1742 = vmatpush1.bf16.msra.mxu0 0
        %1743 = vmatprep.subr.bf16.mxu0 0
        %1744 = vmatpush1.bf16.msra.mxu0 0
        %1745 = vmatprep.subr.bf16.mxu0 0
        %1746 = vmatpush1.bf16.msra.mxu0 0
        %1747 = vmatprep.subr.bf16.mxu0 0
        %1748 = vmatpush1.bf16.msra.mxu0 0
        %1749 = vmatprep.subr.bf16.mxu0 0
        %1750 = vmatpush1.bf16.msra.mxu0 0
        %1751 = vmatprep.subr.bf16.mxu0 0
        %1752 = vmatpush1.bf16.msra.mxu0 0
        %1753 = vmatprep.subr.bf16.mxu0 0
        %1754 = vmatpush1.bf16.msra.mxu0 0
        %1755 = vmatprep.mubr.bf16.mxu0 0
        %1756 = vmatmul.mubr.bf16.gmra.mrb[0].mxu0 %v1718
        %v1757 = vpop.f32.mrb[0].mxu0
        %v1758 = vadd.f32 0.0, %v1757
        %v1759 = vpop.f32.mrb[0].mxu0
        %v1760 = vpop.f32.mrb[0].mxu0
        %v1761 = vpop.f32.mrb[0].mxu0
        %1762 = vdwg.mxu0
        %1763 = vrot.lane.b32.xlu0 %v1537, 120
        %v1764 = vpop.permute.xlu0 %1763
        %1765 = vrot.lane.b32.xlu0 %v1537, 88
        %v1766 = vpop.permute.xlu0 %1765
        %v1768 = vsel %vm1542, %v1764, 0
        %v1771 = vsel %vm1542, %v1766, 0
        %1773 = vmatprep.subr.bf16.mxu0 0
        %1774 = vmatpush1.bf16.xpose.msra.mxu0 %v1771
        %1775 = vmatprep.subr.bf16.mxu0 0
        %1776 = vmatpush1.bf16.xpose.msra.mxu0 0
        %1777 = vmatprep.subr.bf16.mxu0 0
        %1778 = vmatpush1.bf16.xpose.msra.mxu0 0
        %1779 = vmatprep.subr.bf16.mxu0 0
        %1780 = vmatpush1.bf16.xpose.msra.mxu0 0
        %1781 = vmatprep.subr.bf16.mxu0 0
        %1782 = vmatpush1.bf16.xpose.msra.mxu0 0
        %1783 = vmatprep.subr.bf16.mxu0 0
        %1784 = vmatpush1.bf16.xpose.msra.mxu0 0
        %1785 = vmatprep.subr.bf16.mxu0 0
        %1786 = vmatpush1.bf16.xpose.msra.mxu0 0
        %1787 = vmatprep.subr.bf16.mxu0 0
        %1788 = vmatpush1.bf16.xpose.msra.mxu0 0
        %1789 = vmatprep.subr.bf16.mxu0 0
        %1790 = vmatpush1.bf16.xpose.msra.mxu0 0
        %1791 = vmatprep.subr.bf16.mxu0 0
        %1792 = vmatpush1.bf16.xpose.msra.mxu0 0
        %1793 = vmatprep.subr.bf16.mxu0 0
        %1794 = vmatpush1.bf16.xpose.msra.mxu0 0
        %1795 = vmatprep.subr.bf16.mxu0 0
        %1796 = vmatpush1.bf16.xpose.msra.mxu0 0
        %1797 = vmatprep.subr.bf16.mxu0 0
        %1798 = vmatpush1.bf16.xpose.msra.mxu0 0
        %1799 = vmatprep.subr.bf16.mxu0 0
        %1800 = vmatpush1.bf16.xpose.msra.mxu0 0
        %1801 = vmatprep.subr.bf16.mxu0 0
        %1802 = vmatpush1.bf16.xpose.msra.mxu0 0
        %1803 = vmatprep.subr.bf16.mxu0 0
        %1804 = vmatpush1.bf16.xpose.msra.mxu0 0
        %1805 = vmatprep.mubr.bf16.mxu0 0
        %1806 = vmatmul.mubr.bf16.gmra.mrb[0].mxu0 %v1768
        %v1807 = vpop.f32.mrb[0].mxu0
        %v1808 = vadd.f32 0.0, %v1807
        %v1809 = vpop.f32.mrb[0].mxu0
        %v1810 = vpop.f32.mrb[0].mxu0
        %v1811 = vpop.f32.mrb[0].mxu0
        %1812 = vdwg.mxu0
        %1813 = vrot.lane.b32.xlu0 %v1538, 120
        %v1814 = vpop.permute.xlu0 %1813
        %1815 = vrot.lane.b32.xlu0 %v1538, 88
        %v1816 = vpop.permute.xlu0 %1815
        %v1818 = vsel %vm1542, %v1814, 0
        %v1821 = vsel %vm1542, %v1816, 0
        %1823 = vmatprep.subr.bf16.mxu0 0
        %1824 = vmatpush1.bf16.xpose.msra.mxu0 %v1821
        %1825 = vmatprep.subr.bf16.mxu0 0
        %1826 = vmatpush1.bf16.xpose.msra.mxu0 0
        %1827 = vmatprep.subr.bf16.mxu0 0
        %1828 = vmatpush1.bf16.xpose.msra.mxu0 0
        %1829 = vmatprep.subr.bf16.mxu0 0
        %1830 = vmatpush1.bf16.xpose.msra.mxu0 0
        %1831 = vmatprep.subr.bf16.mxu0 0
        %1832 = vmatpush1.bf16.xpose.msra.mxu0 0
        %1833 = vmatprep.subr.bf16.mxu0 0
        %1834 = vmatpush1.bf16.xpose.msra.mxu0 0
        %1835 = vmatprep.subr.bf16.mxu0 0
        %1836 = vmatpush1.bf16.xpose.msra.mxu0 0
        %1837 = vmatprep.subr.bf16.mxu0 0
        %1838 = vmatpush1.bf16.xpose.msra.mxu0 0
        %1839 = vmatprep.subr.bf16.mxu0 0
        %1840 = vmatpush1.bf16.xpose.msra.mxu0 0
        %1841 = vmatprep.subr.bf16.mxu0 0
        %1842 = vmatpush1.bf16.xpose.msra.mxu0 0
        %1843 = vmatprep.subr.bf16.mxu0 0
        %1844 = vmatpush1.bf16.xpose.msra.mxu0 0
        %1845 = vmatprep.subr.bf16.mxu0 0
        %1846 = vmatpush1.bf16.xpose.msra.mxu0 0
        %1847 = vmatprep.subr.bf16.mxu0 0
        %1848 = vmatpush1.bf16.xpose.msra.mxu0 0
        %1849 = vmatprep.subr.bf16.mxu0 0
        %1850 = vmatpush1.bf16.xpose.msra.mxu0 0
        %1851 = vmatprep.subr.bf16.mxu0 0
        %1852 = vmatpush1.bf16.xpose.msra.mxu0 0
        %1853 = vmatprep.subr.bf16.mxu0 0
        %1854 = vmatpush1.bf16.xpose.msra.mxu0 0
        %1855 = vmatprep.mubr.bf16.mxu0 0
        %1856 = vmatmul.mubr.bf16.gmra.mrb[0].mxu0 %v1818
        %v1857 = vpop.f32.mrb[0].mxu0
        %v1858 = vadd.f32 0.0, %v1857
        %v1859 = vpop.f32.mrb[0].mxu0
        %v1860 = vpop.f32.mrb[0].mxu0
        %v1861 = vpop.f32.mrb[0].mxu0
        %1862 = vdwg.mxu0
        %v1863 = vmul.f32 %v1808, 0.35355338
        %v1864 = vmul.f32 %v1858, 0.35355338
        %v1865 = vadd.f32 %v1863, %v1530
        %v1866 = vadd.f32 %v1864, %v1531
        %v1867 = vsel %vm1542, %v1865, -inf
        %1868 = vmax.xlane.f32.xlu0 %v1867
        %v1869 = vpop.xlane.xlu0 %1868
        %v1870 = vsel %vm1542, %v1866, -inf
        %1871 = vmax.xlane.f32.xlu0 %v1870
        %v1872 = vpop.xlane.xlu0 %1871
        %v1873 = vsub.f32 %v1865, %v1869
        %v1874 = vsub.f32 %v1866, %v1872
        %v1875 = vmul.f32 %v1873, 1.442695
        %v1876 = vpow.pop %v1875
        %v1877 = vmul.f32 %v1874, 1.442695
        %v1878 = vpow.pop %v1877
        %v1879 = vsel %vm1542, %v1876, 0.0
        %1880 = vadd.xlane.f32.xlu0 %v1879
        %v1881 = vpop.xlane.xlu0 %1880
        %v1882 = vsel %vm1542, %v1878, 0.0
        %1883 = vadd.xlane.f32.xlu0 %v1882
        %v1884 = vpop.xlane.xlu0 %1883
        %v1885 = vrcp.pop %v1881
        %v1886 = vrcp.pop %v1884
        %v1887 = vmul.f32 %v1876, %v1885
        %v1888 = vmul.f32 %v1878, %v1886
        %v1889 = vpack.c.bf16 %v1887, %v1887
        %v1890 = vpack.c.bf16 %v1888, %v1888
        %1891 = vrot.lane.b32.xlu0 %v1537, 56
        %v1892 = vpop.permute.xlu0 %1891
        %v1894 = vsel %vm1542, %v1889, 0
        %v1897 = vsel %vm1671, %v1892, 0
        %1899 = vmatprep.subr.bf16.mxu0 0
        %1900 = vmatpush1.bf16.msra.mxu0 %v1897
        %1901 = vmatprep.subr.bf16.mxu0 0
        %1902 = vmatpush1.bf16.msra.mxu0 0
        %1903 = vmatprep.subr.bf16.mxu0 0
        %1904 = vmatpush1.bf16.msra.mxu0 0
        %1905 = vmatprep.subr.bf16.mxu0 0
        %1906 = vmatpush1.bf16.msra.mxu0 0
        %1907 = vmatprep.subr.bf16.mxu0 0
        %1908 = vmatpush1.bf16.msra.mxu0 0
        %1909 = vmatprep.subr.bf16.mxu0 0
        %1910 = vmatpush1.bf16.msra.mxu0 0
        %1911 = vmatprep.subr.bf16.mxu0 0
        %1912 = vmatpush1.bf16.msra.mxu0 0
        %1913 = vmatprep.subr.bf16.mxu0 0
        %1914 = vmatpush1.bf16.msra.mxu0 0
        %1915 = vmatprep.subr.bf16.mxu0 0
        %1916 = vmatpush1.bf16.msra.mxu0 0
        %1917 = vmatprep.subr.bf16.mxu0 0
        %1918 = vmatpush1.bf16.msra.mxu0 0
        %1919 = vmatprep.subr.bf16.mxu0 0
        %1920 = vmatpush1.bf16.msra.mxu0 0
        %1921 = vmatprep.subr.bf16.mxu0 0
        %1922 = vmatpush1.bf16.msra.mxu0 0
        %1923 = vmatprep.subr.bf16.mxu0 0
        %1924 = vmatpush1.bf16.msra.mxu0 0
        %1925 = vmatprep.subr.bf16.mxu0 0
        %1926 = vmatpush1.bf16.msra.mxu0 0
        %1927 = vmatprep.subr.bf16.mxu0 0
        %1928 = vmatpush1.bf16.msra.mxu0 0
        %1929 = vmatprep.subr.bf16.mxu0 0
        %1930 = vmatpush1.bf16.msra.mxu0 0
        %1931 = vmatprep.mubr.bf16.mxu0 0
        %1932 = vmatmul.mubr.bf16.gmra.mrb[0].mxu0 %v1894
        %v1933 = vpop.f32.mrb[0].mxu0
        %v1934 = vadd.f32 0.0, %v1933
        %v1935 = vpop.f32.mrb[0].mxu0
        %v1936 = vpop.f32.mrb[0].mxu0
        %v1937 = vpop.f32.mrb[0].mxu0
        %1938 = vdwg.mxu0
        %1939 = vrot.lane.b32.xlu0 %v1538, 56
        %v1940 = vpop.permute.xlu0 %1939
        %v1942 = vsel %vm1542, %v1890, 0
        %v1945 = vsel %vm1671, %v1940, 0
        %1947 = vmatprep.subr.bf16.mxu0 0
        %1948 = vmatpush1.bf16.msra.mxu0 %v1945
        %1949 = vmatprep.subr.bf16.mxu0 0
        %1950 = vmatpush1.bf16.msra.mxu0 0
        %1951 = vmatprep.subr.bf16.mxu0 0
        %1952 = vmatpush1.bf16.msra.mxu0 0
        %1953 = vmatprep.subr.bf16.mxu0 0
        %1954 = vmatpush1.bf16.msra.mxu0 0
        %1955 = vmatprep.subr.bf16.mxu0 0
        %1956 = vmatpush1.bf16.msra.mxu0 0
        %1957 = vmatprep.subr.bf16.mxu0 0
        %1958 = vmatpush1.bf16.msra.mxu0 0
        %1959 = vmatprep.subr.bf16.mxu0 0
        %1960 = vmatpush1.bf16.msra.mxu0 0
        %1961 = vmatprep.subr.bf16.mxu0 0
        %1962 = vmatpush1.bf16.msra.mxu0 0
        %1963 = vmatprep.subr.bf16.mxu0 0
        %1964 = vmatpush1.bf16.msra.mxu0 0
        %1965 = vmatprep.subr.bf16.mxu0 0
        %1966 = vmatpush1.bf16.msra.mxu0 0
        %1967 = vmatprep.subr.bf16.mxu0 0
        %1968 = vmatpush1.bf16.msra.mxu0 0
        %1969 = vmatprep.subr.bf16.mxu0 0
        %1970 = vmatpush1.bf16.msra.mxu0 0
        %1971 = vmatprep.subr.bf16.mxu0 0
        %1972 = vmatpush1.bf16.msra.mxu0 0
        %1973 = vmatprep.subr.bf16.mxu0 0
        %1974 = vmatpush1.bf16.msra.mxu0 0
        %1975 = vmatprep.subr.bf16.mxu0 0
        %1976 = vmatpush1.bf16.msra.mxu0 0
        %1977 = vmatprep.subr.bf16.mxu0 0
        %1978 = vmatpush1.bf16.msra.mxu0 0
        %1979 = vmatprep.mubr.bf16.mxu0 0
        %1980 = vmatmul.mubr.bf16.gmra.mrb[0].mxu0 %v1942
        %v1981 = vpop.f32.mrb[0].mxu0
        %v1982 = vadd.f32 0.0, %v1981
        %v1983 = vpop.f32.mrb[0].mxu0
        %v1984 = vpop.f32.mrb[0].mxu0
        %v1985 = vpop.f32.mrb[0].mxu0
        %1986 = vdwg.mxu0
        %v1987 = vadd.f32 %v1662, %v1887
        %v1988 = vadd.f32 %v1663, %v1888
        %1989 = vrot.lane.b32.xlu0 %v1537, 112
        %v1990 = vpop.permute.xlu0 %1989
        %1991 = vrot.lane.b32.xlu0 %v1537, 80
        %v1992 = vpop.permute.xlu0 %1991
        %v1994 = vsel %vm1542, %v1990, 0
        %v1997 = vsel %vm1542, %v1992, 0
        %1999 = vmatprep.subr.bf16.mxu0 0
        %2000 = vmatpush1.bf16.xpose.msra.mxu0 %v1997
        %2001 = vmatprep.subr.bf16.mxu0 0
        %2002 = vmatpush1.bf16.xpose.msra.mxu0 0
        %2003 = vmatprep.subr.bf16.mxu0 0
        %2004 = vmatpush1.bf16.xpose.msra.mxu0 0
        %2005 = vmatprep.subr.bf16.mxu0 0
        %2006 = vmatpush1.bf16.xpose.msra.mxu0 0
        %2007 = vmatprep.subr.bf16.mxu0 0
        %2008 = vmatpush1.bf16.xpose.msra.mxu0 0
        %2009 = vmatprep.subr.bf16.mxu0 0
        %2010 = vmatpush1.bf16.xpose.msra.mxu0 0
        %2011 = vmatprep.subr.bf16.mxu0 0
        %2012 = vmatpush1.bf16.xpose.msra.mxu0 0
        %2013 = vmatprep.subr.bf16.mxu0 0
        %2014 = vmatpush1.bf16.xpose.msra.mxu0 0
        %2015 = vmatprep.subr.bf16.mxu0 0
        %2016 = vmatpush1.bf16.xpose.msra.mxu0 0
        %2017 = vmatprep.subr.bf16.mxu0 0
        %2018 = vmatpush1.bf16.xpose.msra.mxu0 0
        %2019 = vmatprep.subr.bf16.mxu0 0
        %2020 = vmatpush1.bf16.xpose.msra.mxu0 0
        %2021 = vmatprep.subr.bf16.mxu0 0
        %2022 = vmatpush1.bf16.xpose.msra.mxu0 0
        %2023 = vmatprep.subr.bf16.mxu0 0
        %2024 = vmatpush1.bf16.xpose.msra.mxu0 0
        %2025 = vmatprep.subr.bf16.mxu0 0
        %2026 = vmatpush1.bf16.xpose.msra.mxu0 0
        %2027 = vmatprep.subr.bf16.mxu0 0
        %2028 = vmatpush1.bf16.xpose.msra.mxu0 0
        %2029 = vmatprep.subr.bf16.mxu0 0
        %2030 = vmatpush1.bf16.xpose.msra.mxu0 0
        %2031 = vmatprep.mubr.bf16.mxu0 0
        %2032 = vmatmul.mubr.bf16.gmra.mrb[0].mxu0 %v1994
        %v2033 = vpop.f32.mrb[0].mxu0
        %v2034 = vadd.f32 0.0, %v2033
        %v2035 = vpop.f32.mrb[0].mxu0
        %v2036 = vpop.f32.mrb[0].mxu0
        %v2037 = vpop.f32.mrb[0].mxu0
        %2038 = vdwg.mxu0
        %2039 = vrot.lane.b32.xlu0 %v1538, 112
        %v2040 = vpop.permute.xlu0 %2039
        %2041 = vrot.lane.b32.xlu0 %v1538, 80
        %v2042 = vpop.permute.xlu0 %2041
        %v2044 = vsel %vm1542, %v2040, 0
        %v2047 = vsel %vm1542, %v2042, 0
        %2049 = vmatprep.subr.bf16.mxu0 0
        %2050 = vmatpush1.bf16.xpose.msra.mxu0 %v2047
        %2051 = vmatprep.subr.bf16.mxu0 0
        %2052 = vmatpush1.bf16.xpose.msra.mxu0 0
        %2053 = vmatprep.subr.bf16.mxu0 0
        %2054 = vmatpush1.bf16.xpose.msra.mxu0 0
        %2055 = vmatprep.subr.bf16.mxu0 0
        %2056 = vmatpush1.bf16.xpose.msra.mxu0 0
        %2057 = vmatprep.subr.bf16.mxu0 0
        %2058 = vmatpush1.bf16.xpose.msra.mxu0 0
        %2059 = vmatprep.subr.bf16.mxu0 0
        %2060 = vmatpush1.bf16.xpose.msra.mxu0 0
        %2061 = vmatprep.subr.bf16.mxu0 0
        %2062 = vmatpush1.bf16.xpose.msra.mxu0 0
        %2063 = vmatprep.subr.bf16.mxu0 0
        %2064 = vmatpush1.bf16.xpose.msra.mxu0 0
        %2065 = vmatprep.subr.bf16.mxu0 0
        %2066 = vmatpush1.bf16.xpose.msra.mxu0 0
        %2067 = vmatprep.subr.bf16.mxu0 0
        %2068 = vmatpush1.bf16.xpose.msra.mxu0 0
        %2069 = vmatprep.subr.bf16.mxu0 0
        %2070 = vmatpush1.bf16.xpose.msra.mxu0 0
        %2071 = vmatprep.subr.bf16.mxu0 0
        %2072 = vmatpush1.bf16.xpose.msra.mxu0 0
        %2073 = vmatprep.subr.bf16.mxu0 0
        %2074 = vmatpush1.bf16.xpose.msra.mxu0 0
        %2075 = vmatprep.subr.bf16.mxu0 0
        %2076 = vmatpush1.bf16.xpose.msra.mxu0 0
        %2077 = vmatprep.subr.bf16.mxu0 0
        %2078 = vmatpush1.bf16.xpose.msra.mxu0 0
        %2079 = vmatprep.subr.bf16.mxu0 0
        %2080 = vmatpush1.bf16.xpose.msra.mxu0 0
        %2081 = vmatprep.mubr.bf16.mxu0 0
        %2082 = vmatmul.mubr.bf16.gmra.mrb[0].mxu0 %v2044
        %v2083 = vpop.f32.mrb[0].mxu0
        %v2084 = vadd.f32 0.0, %v2083
        %v2085 = vpop.f32.mrb[0].mxu0
        %v2086 = vpop.f32.mrb[0].mxu0
        %v2087 = vpop.f32.mrb[0].mxu0
        %2088 = vdwg.mxu0
        %v2089 = vmul.f32 %v2034, 0.35355338
        %v2090 = vmul.f32 %v2084, 0.35355338
        %v2091 = vadd.f32 %v2089, %v1530
        %v2092 = vadd.f32 %v2090, %v1531
        %v2093 = vsel %vm1542, %v2091, -inf
        %2094 = vmax.xlane.f32.xlu0 %v2093
        %v2095 = vpop.xlane.xlu0 %2094
        %v2096 = vsel %vm1542, %v2092, -inf
        %2097 = vmax.xlane.f32.xlu0 %v2096
        %v2098 = vpop.xlane.xlu0 %2097
        %v2099 = vsub.f32 %v2091, %v2095
        %v2100 = vsub.f32 %v2092, %v2098
        %v2101 = vmul.f32 %v2099, 1.442695
        %v2102 = vpow.pop %v2101
        %v2103 = vmul.f32 %v2100, 1.442695
        %v2104 = vpow.pop %v2103
        %v2105 = vsel %vm1542, %v2102, 0.0
        %2106 = vadd.xlane.f32.xlu0 %v2105
        %v2107 = vpop.xlane.xlu0 %2106
        %v2108 = vsel %vm1542, %v2104, 0.0
        %2109 = vadd.xlane.f32.xlu0 %v2108
        %v2110 = vpop.xlane.xlu0 %2109
        %v2111 = vrcp.pop %v2107
        %v2112 = vrcp.pop %v2110
        %v2113 = vmul.f32 %v2102, %v2111
        %v2114 = vmul.f32 %v2104, %v2112
        %v2115 = vpack.c.bf16 %v2113, %v2113
        %v2116 = vpack.c.bf16 %v2114, %v2114
        %2117 = vrot.lane.b32.xlu0 %v1537, 48
        %v2118 = vpop.permute.xlu0 %2117
        %v2120 = vsel %vm1542, %v2115, 0
        %v2123 = vsel %vm1671, %v2118, 0
        %2125 = vmatprep.subr.bf16.mxu0 0
        %2126 = vmatpush1.bf16.msra.mxu0 %v2123
        %2127 = vmatprep.subr.bf16.mxu0 0
        %2128 = vmatpush1.bf16.msra.mxu0 0
        %2129 = vmatprep.subr.bf16.mxu0 0
        %2130 = vmatpush1.bf16.msra.mxu0 0
        %2131 = vmatprep.subr.bf16.mxu0 0
        %2132 = vmatpush1.bf16.msra.mxu0 0
        %2133 = vmatprep.subr.bf16.mxu0 0
        %2134 = vmatpush1.bf16.msra.mxu0 0
        %2135 = vmatprep.subr.bf16.mxu0 0
        %2136 = vmatpush1.bf16.msra.mxu0 0
        %2137 = vmatprep.subr.bf16.mxu0 0
        %2138 = vmatpush1.bf16.msra.mxu0 0
        %2139 = vmatprep.subr.bf16.mxu0 0
        %2140 = vmatpush1.bf16.msra.mxu0 0
        %2141 = vmatprep.subr.bf16.mxu0 0
        %2142 = vmatpush1.bf16.msra.mxu0 0
        %2143 = vmatprep.subr.bf16.mxu0 0
        %2144 = vmatpush1.bf16.msra.mxu0 0
        %2145 = vmatprep.subr.bf16.mxu0 0
        %2146 = vmatpush1.bf16.msra.mxu0 0
        %2147 = vmatprep.subr.bf16.mxu0 0
        %2148 = vmatpush1.bf16.msra.mxu0 0
        %2149 = vmatprep.subr.bf16.mxu0 0
        %2150 = vmatpush1.bf16.msra.mxu0 0
        %2151 = vmatprep.subr.bf16.mxu0 0
        %2152 = vmatpush1.bf16.msra.mxu0 0
        %2153 = vmatprep.subr.bf16.mxu0 0
        %2154 = vmatpush1.bf16.msra.mxu0 0
        %2155 = vmatprep.subr.bf16.mxu0 0
        %2156 = vmatpush1.bf16.msra.mxu0 0
        %2157 = vmatprep.mubr.bf16.mxu0 0
        %2158 = vmatmul.mubr.bf16.gmra.mrb[0].mxu0 %v2120
        %v2159 = vpop.f32.mrb[0].mxu0
        %v2160 = vadd.f32 0.0, %v2159
        %v2161 = vpop.f32.mrb[0].mxu0
        %v2162 = vpop.f32.mrb[0].mxu0
        %v2163 = vpop.f32.mrb[0].mxu0
        %2164 = vdwg.mxu0
        %2165 = vrot.lane.b32.xlu0 %v1538, 48
        %v2166 = vpop.permute.xlu0 %2165
        %v2168 = vsel %vm1542, %v2116, 0
        %v2171 = vsel %vm1671, %v2166, 0
        %2173 = vmatprep.subr.bf16.mxu0 0
        %2174 = vmatpush1.bf16.msra.mxu0 %v2171
        %2175 = vmatprep.subr.bf16.mxu0 0
        %2176 = vmatpush1.bf16.msra.mxu0 0
        %2177 = vmatprep.subr.bf16.mxu0 0
        %2178 = vmatpush1.bf16.msra.mxu0 0
        %2179 = vmatprep.subr.bf16.mxu0 0
        %2180 = vmatpush1.bf16.msra.mxu0 0
        %2181 = vmatprep.subr.bf16.mxu0 0
        %2182 = vmatpush1.bf16.msra.mxu0 0
        %2183 = vmatprep.subr.bf16.mxu0 0
        %2184 = vmatpush1.bf16.msra.mxu0 0
        %2185 = vmatprep.subr.bf16.mxu0 0
        %2186 = vmatpush1.bf16.msra.mxu0 0
        %2187 = vmatprep.subr.bf16.mxu0 0
        %2188 = vmatpush1.bf16.msra.mxu0 0
        %2189 = vmatprep.subr.bf16.mxu0 0
        %2190 = vmatpush1.bf16.msra.mxu0 0
        %2191 = vmatprep.subr.bf16.mxu0 0
        %2192 = vmatpush1.bf16.msra.mxu0 0
        %2193 = vmatprep.subr.bf16.mxu0 0
        %2194 = vmatpush1.bf16.msra.mxu0 0
        %2195 = vmatprep.subr.bf16.mxu0 0
        %2196 = vmatpush1.bf16.msra.mxu0 0
        %2197 = vmatprep.subr.bf16.mxu0 0
        %2198 = vmatpush1.bf16.msra.mxu0 0
        %2199 = vmatprep.subr.bf16.mxu0 0
        %2200 = vmatpush1.bf16.msra.mxu0 0
        %2201 = vmatprep.subr.bf16.mxu0 0
        %2202 = vmatpush1.bf16.msra.mxu0 0
        %2203 = vmatprep.subr.bf16.mxu0 0
        %2204 = vmatpush1.bf16.msra.mxu0 0
        %2205 = vmatprep.mubr.bf16.mxu0 0
        %2206 = vmatmul.mubr.bf16.gmra.mrb[0].mxu0 %v2168
        %v2207 = vpop.f32.mrb[0].mxu0
        %v2208 = vadd.f32 0.0, %v2207
        %v2209 = vpop.f32.mrb[0].mxu0
        %v2210 = vpop.f32.mrb[0].mxu0
        %v2211 = vpop.f32.mrb[0].mxu0
        %2212 = vdwg.mxu0
        %v2213 = vadd.f32 %v1987, %v2113
        %v2214 = vadd.f32 %v1988, %v2114
        %2215 = vrot.lane.b32.xlu0 %v1537, 104
        %v2216 = vpop.permute.xlu0 %2215
        %2217 = vrot.lane.b32.xlu0 %v1537, 72
        %v2218 = vpop.permute.xlu0 %2217
        %v2220 = vsel %vm1542, %v2216, 0
        %v2223 = vsel %vm1542, %v2218, 0
        %2225 = vmatprep.subr.bf16.mxu0 0
        %2226 = vmatpush1.bf16.xpose.msra.mxu0 %v2223
        %2227 = vmatprep.subr.bf16.mxu0 0
        %2228 = vmatpush1.bf16.xpose.msra.mxu0 0
        %2229 = vmatprep.subr.bf16.mxu0 0
        %2230 = vmatpush1.bf16.xpose.msra.mxu0 0
        %2231 = vmatprep.subr.bf16.mxu0 0
        %2232 = vmatpush1.bf16.xpose.msra.mxu0 0
        %2233 = vmatprep.subr.bf16.mxu0 0
        %2234 = vmatpush1.bf16.xpose.msra.mxu0 0
        %2235 = vmatprep.subr.bf16.mxu0 0
        %2236 = vmatpush1.bf16.xpose.msra.mxu0 0
        %2237 = vmatprep.subr.bf16.mxu0 0
        %2238 = vmatpush1.bf16.xpose.msra.mxu0 0
        %2239 = vmatprep.subr.bf16.mxu0 0
        %2240 = vmatpush1.bf16.xpose.msra.mxu0 0
        %2241 = vmatprep.subr.bf16.mxu0 0
        %2242 = vmatpush1.bf16.xpose.msra.mxu0 0
        %2243 = vmatprep.subr.bf16.mxu0 0
        %2244 = vmatpush1.bf16.xpose.msra.mxu0 0
        %2245 = vmatprep.subr.bf16.mxu0 0
        %2246 = vmatpush1.bf16.xpose.msra.mxu0 0
        %2247 = vmatprep.subr.bf16.mxu0 0
        %2248 = vmatpush1.bf16.xpose.msra.mxu0 0
        %2249 = vmatprep.subr.bf16.mxu0 0
        %2250 = vmatpush1.bf16.xpose.msra.mxu0 0
        %2251 = vmatprep.subr.bf16.mxu0 0
        %2252 = vmatpush1.bf16.xpose.msra.mxu0 0
        %2253 = vmatprep.subr.bf16.mxu0 0
        %2254 = vmatpush1.bf16.xpose.msra.mxu0 0
        %2255 = vmatprep.subr.bf16.mxu0 0
        %2256 = vmatpush1.bf16.xpose.msra.mxu0 0
        %2257 = vmatprep.mubr.bf16.mxu0 0
        %2258 = vmatmul.mubr.bf16.gmra.mrb[0].mxu0 %v2220
        %v2259 = vpop.f32.mrb[0].mxu0
        %v2260 = vadd.f32 0.0, %v2259
        %v2261 = vpop.f32.mrb[0].mxu0
        %v2262 = vpop.f32.mrb[0].mxu0
        %v2263 = vpop.f32.mrb[0].mxu0
        %2264 = vdwg.mxu0
        %2265 = vrot.lane.b32.xlu0 %v1538, 104
        %v2266 = vpop.permute.xlu0 %2265
        %2267 = vrot.lane.b32.xlu0 %v1538, 72
        %v2268 = vpop.permute.xlu0 %2267
        %v2270 = vsel %vm1542, %v2266, 0
        %v2273 = vsel %vm1542, %v2268, 0
        %2275 = vmatprep.subr.bf16.mxu0 0
        %2276 = vmatpush1.bf16.xpose.msra.mxu0 %v2273
        %2277 = vmatprep.subr.bf16.mxu0 0
        %2278 = vmatpush1.bf16.xpose.msra.mxu0 0
        %2279 = vmatprep.subr.bf16.mxu0 0
        %2280 = vmatpush1.bf16.xpose.msra.mxu0 0
        %2281 = vmatprep.subr.bf16.mxu0 0
        %2282 = vmatpush1.bf16.xpose.msra.mxu0 0
        %2283 = vmatprep.subr.bf16.mxu0 0
        %2284 = vmatpush1.bf16.xpose.msra.mxu0 0
        %2285 = vmatprep.subr.bf16.mxu0 0
        %2286 = vmatpush1.bf16.xpose.msra.mxu0 0
        %2287 = vmatprep.subr.bf16.mxu0 0
        %2288 = vmatpush1.bf16.xpose.msra.mxu0 0
        %2289 = vmatprep.subr.bf16.mxu0 0
        %2290 = vmatpush1.bf16.xpose.msra.mxu0 0
        %2291 = vmatprep.subr.bf16.mxu0 0
        %2292 = vmatpush1.bf16.xpose.msra.mxu0 0
        %2293 = vmatprep.subr.bf16.mxu0 0
        %2294 = vmatpush1.bf16.xpose.msra.mxu0 0
        %2295 = vmatprep.subr.bf16.mxu0 0
        %2296 = vmatpush1.bf16.xpose.msra.mxu0 0
        %2297 = vmatprep.subr.bf16.mxu0 0
        %2298 = vmatpush1.bf16.xpose.msra.mxu0 0
        %2299 = vmatprep.subr.bf16.mxu0 0
        %2300 = vmatpush1.bf16.xpose.msra.mxu0 0
        %2301 = vmatprep.subr.bf16.mxu0 0
        %2302 = vmatpush1.bf16.xpose.msra.mxu0 0
        %2303 = vmatprep.subr.bf16.mxu0 0
        %2304 = vmatpush1.bf16.xpose.msra.mxu0 0
        %2305 = vmatprep.subr.bf16.mxu0 0
        %2306 = vmatpush1.bf16.xpose.msra.mxu0 0
        %2307 = vmatprep.mubr.bf16.mxu0 0
        %2308 = vmatmul.mubr.bf16.gmra.mrb[0].mxu0 %v2270
        %v2309 = vpop.f32.mrb[0].mxu0
        %v2310 = vadd.f32 0.0, %v2309
        %v2311 = vpop.f32.mrb[0].mxu0
        %v2312 = vpop.f32.mrb[0].mxu0
        %v2313 = vpop.f32.mrb[0].mxu0
        %2314 = vdwg.mxu0
        %v2315 = vmul.f32 %v2260, 0.35355338
        %v2316 = vmul.f32 %v2310, 0.35355338
        %v2317 = vadd.f32 %v2315, %v1530
        %v2318 = vadd.f32 %v2316, %v1531
        %v2319 = vsel %vm1542, %v2317, -inf
        %2320 = vmax.xlane.f32.xlu0 %v2319
        %v2321 = vpop.xlane.xlu0 %2320
        %v2322 = vsel %vm1542, %v2318, -inf
        %2323 = vmax.xlane.f32.xlu0 %v2322
        %v2324 = vpop.xlane.xlu0 %2323
        %v2325 = vsub.f32 %v2317, %v2321
        %v2326 = vsub.f32 %v2318, %v2324
        %v2327 = vmul.f32 %v2325, 1.442695
        %v2328 = vpow.pop %v2327
        %v2329 = vmul.f32 %v2326, 1.442695
        %v2330 = vpow.pop %v2329
        %v2331 = vsel %vm1542, %v2328, 0.0
        %2332 = vadd.xlane.f32.xlu0 %v2331
        %v2333 = vpop.xlane.xlu0 %2332
        %v2334 = vsel %vm1542, %v2330, 0.0
        %2335 = vadd.xlane.f32.xlu0 %v2334
        %v2336 = vpop.xlane.xlu0 %2335
        %v2337 = vrcp.pop %v2333
        %v2338 = vrcp.pop %v2336
        %v2339 = vmul.f32 %v2328, %v2337
        %v2340 = vmul.f32 %v2330, %v2338
        %v2341 = vpack.c.bf16 %v2339, %v2339
        %v2342 = vpack.c.bf16 %v2340, %v2340
        %2343 = vrot.lane.b32.xlu0 %v1537, 40
        %v2344 = vpop.permute.xlu0 %2343
        %v2346 = vsel %vm1542, %v2341, 0
        %v2349 = vsel %vm1671, %v2344, 0
        %2351 = vmatprep.subr.bf16.mxu0 0
        %2352 = vmatpush1.bf16.msra.mxu0 %v2349
        %2353 = vmatprep.subr.bf16.mxu0 0
        %2354 = vmatpush1.bf16.msra.mxu0 0
        %2355 = vmatprep.subr.bf16.mxu0 0
        %2356 = vmatpush1.bf16.msra.mxu0 0
        %2357 = vmatprep.subr.bf16.mxu0 0
        %2358 = vmatpush1.bf16.msra.mxu0 0
        %2359 = vmatprep.subr.bf16.mxu0 0
        %2360 = vmatpush1.bf16.msra.mxu0 0
        %2361 = vmatprep.subr.bf16.mxu0 0
        %2362 = vmatpush1.bf16.msra.mxu0 0
        %2363 = vmatprep.subr.bf16.mxu0 0
        %2364 = vmatpush1.bf16.msra.mxu0 0
        %2365 = vmatprep.subr.bf16.mxu0 0
        %2366 = vmatpush1.bf16.msra.mxu0 0
        %2367 = vmatprep.subr.bf16.mxu0 0
        %2368 = vmatpush1.bf16.msra.mxu0 0
        %2369 = vmatprep.subr.bf16.mxu0 0
        %2370 = vmatpush1.bf16.msra.mxu0 0
        %2371 = vmatprep.subr.bf16.mxu0 0
        %2372 = vmatpush1.bf16.msra.mxu0 0
        %2373 = vmatprep.subr.bf16.mxu0 0
        %2374 = vmatpush1.bf16.msra.mxu0 0
        %2375 = vmatprep.subr.bf16.mxu0 0
        %2376 = vmatpush1.bf16.msra.mxu0 0
        %2377 = vmatprep.subr.bf16.mxu0 0
        %2378 = vmatpush1.bf16.msra.mxu0 0
        %2379 = vmatprep.subr.bf16.mxu0 0
        %2380 = vmatpush1.bf16.msra.mxu0 0
        %2381 = vmatprep.subr.bf16.mxu0 0
        %2382 = vmatpush1.bf16.msra.mxu0 0
        %2383 = vmatprep.mubr.bf16.mxu0 0
        %2384 = vmatmul.mubr.bf16.gmra.mrb[0].mxu0 %v2346
        %v2385 = vpop.f32.mrb[0].mxu0
        %v2386 = vadd.f32 0.0, %v2385
        %v2387 = vpop.f32.mrb[0].mxu0
        %v2388 = vpop.f32.mrb[0].mxu0
        %v2389 = vpop.f32.mrb[0].mxu0
        %2390 = vdwg.mxu0
        %2391 = vrot.lane.b32.xlu0 %v1538, 40
        %v2392 = vpop.permute.xlu0 %2391
        %v2394 = vsel %vm1542, %v2342, 0
        %v2397 = vsel %vm1671, %v2392, 0
        %2399 = vmatprep.subr.bf16.mxu0 0
        %2400 = vmatpush1.bf16.msra.mxu0 %v2397
        %2401 = vmatprep.subr.bf16.mxu0 0
        %2402 = vmatpush1.bf16.msra.mxu0 0
        %2403 = vmatprep.subr.bf16.mxu0 0
        %2404 = vmatpush1.bf16.msra.mxu0 0
        %2405 = vmatprep.subr.bf16.mxu0 0
        %2406 = vmatpush1.bf16.msra.mxu0 0
        %2407 = vmatprep.subr.bf16.mxu0 0
        %2408 = vmatpush1.bf16.msra.mxu0 0
        %2409 = vmatprep.subr.bf16.mxu0 0
        %2410 = vmatpush1.bf16.msra.mxu0 0
        %2411 = vmatprep.subr.bf16.mxu0 0
        %2412 = vmatpush1.bf16.msra.mxu0 0
        %2413 = vmatprep.subr.bf16.mxu0 0
        %2414 = vmatpush1.bf16.msra.mxu0 0
        %2415 = vmatprep.subr.bf16.mxu0 0
        %2416 = vmatpush1.bf16.msra.mxu0 0
        %2417 = vmatprep.subr.bf16.mxu0 0
        %2418 = vmatpush1.bf16.msra.mxu0 0
        %2419 = vmatprep.subr.bf16.mxu0 0
        %2420 = vmatpush1.bf16.msra.mxu0 0
        %2421 = vmatprep.subr.bf16.mxu0 0
        %2422 = vmatpush1.bf16.msra.mxu0 0
        %2423 = vmatprep.subr.bf16.mxu0 0
        %2424 = vmatpush1.bf16.msra.mxu0 0
        %2425 = vmatprep.subr.bf16.mxu0 0
        %2426 = vmatpush1.bf16.msra.mxu0 0
        %2427 = vmatprep.subr.bf16.mxu0 0
        %2428 = vmatpush1.bf16.msra.mxu0 0
        %2429 = vmatprep.subr.bf16.mxu0 0
        %2430 = vmatpush1.bf16.msra.mxu0 0
        %2431 = vmatprep.mubr.bf16.mxu0 0
        %2432 = vmatmul.mubr.bf16.gmra.mrb[0].mxu0 %v2394
        %v2433 = vpop.f32.mrb[0].mxu0
        %v2434 = vadd.f32 0.0, %v2433
        %v2435 = vpop.f32.mrb[0].mxu0
        %v2436 = vpop.f32.mrb[0].mxu0
        %v2437 = vpop.f32.mrb[0].mxu0
        %2438 = vdwg.mxu0
        %v2439 = vadd.f32 %v2213, %v2339
        %v2440 = vadd.f32 %v2214, %v2340
        %2443 = vrot.lane.b32.xlu0 %v1934, 8
        %v2444 = vpop.permute.xlu0 %2443
        %2445 = vrot.lane.b32.xlu0 %v1982, 8
        %v2446 = vpop.permute.xlu0 %2445
        %2451 = vrot.lane.b32.xlu0 %v2160, 16
        %v2452 = vpop.permute.xlu0 %2451
        %2453 = vrot.lane.b32.xlu0 %v2208, 16
        %v2454 = vpop.permute.xlu0 %2453
        %2459 = vrot.lane.b32.xlu0 %v2386, 24
        %v2460 = vpop.permute.xlu0 %2459
        %2461 = vrot.lane.b32.xlu0 %v2434, 24
        %v2462 = vpop.permute.xlu0 %2461
        %v2465 = vsel %vm1542, %v1710, %v2444
        %v2466 = vsel %vm1542, %v1758, %v2446
        %vm2467 = vcmask 130048
        %v2468 = vsel %vm2467, %v2465, %v2452
        %v2469 = vsel %vm2467, %v2466, %v2454
        %vm2470 = vcmask 195584
        %v2471 = vsel %vm2470, %v2468, %v2460
        %v2472 = vsel %vm2470, %v2469, %v2462
        %v2473 = vpack.c.bf16 %v2472, %v2471
        %v2475 = vlaneseq
        %v2476 = vshrl.u32 %v2475, 7
        %v2477 = vsub.s32 0, %v2476
        %v2478 = vrot.slane %v1536, %v2477
        %v2484 = vunpack.c.l.b16 %v1532
        %v2485 = vunpack.c.l.b16 %v1533
        %v2486 = vunpack.c.l.b16 %v1534
        %v2487 = vunpack.c.l.b16 %v1535
        %v2488 = vpack.c.b16 %v2485, %v2484
        %v2489 = vpack.c.b16 %v2487, %v2486
        %v2493 = vsel %vm1485, %v2473, 0
        %2495 = vmatprep.subr.bf16.mxu0 0
        %2496 = vmatpush1.bf16.msra.mxu0 %v2488
        %2497 = vmatprep.subr.bf16.mxu0 0
        %2498 = vmatpush1.bf16.msra.mxu0 %v2489
        %2499 = vmatprep.subr.bf16.mxu0 0
        %2500 = vmatpush1.bf16.msra.mxu0 0
        %2501 = vmatprep.subr.bf16.mxu0 0
        %2502 = vmatpush1.bf16.msra.mxu0 0
        %2503 = vmatprep.subr.bf16.mxu0 0
        %2504 = vmatpush1.bf16.msra.mxu0 0
        %2505 = vmatprep.subr.bf16.mxu0 0
        %2506 = vmatpush1.bf16.msra.mxu0 0
        %2507 = vmatprep.subr.bf16.mxu0 0
        %2508 = vmatpush1.bf16.msra.mxu0 0
        %2509 = vmatprep.subr.bf16.mxu0 0
        %2510 = vmatpush1.bf16.msra.mxu0 0
        %2511 = vmatprep.subr.bf16.mxu0 0
        %2512 = vmatpush1.bf16.msra.mxu0 0
        %2513 = vmatprep.subr.bf16.mxu0 0
        %2514 = vmatpush1.bf16.msra.mxu0 0
        %2515 = vmatprep.subr.bf16.mxu0 0
        %2516 = vmatpush1.bf16.msra.mxu0 0
        %2517 = vmatprep.subr.bf16.mxu0 0
        %2518 = vmatpush1.bf16.msra.mxu0 0
        %2519 = vmatprep.subr.bf16.mxu0 0
        %2520 = vmatpush1.bf16.msra.mxu0 0
        %2521 = vmatprep.subr.bf16.mxu0 0
        %2522 = vmatpush1.bf16.msra.mxu0 0
        %2523 = vmatprep.subr.bf16.mxu0 0
        %2524 = vmatpush1.bf16.msra.mxu0 0
        %2525 = vmatprep.subr.bf16.mxu0 0
        %2526 = vmatpush1.bf16.msra.mxu0 0
        %2527 = vmatprep.mubr.bf16.mxu0 0
        %2528 = vmatmul.mubr.bf16.gmra.mrb[0].mxu0 %v2493
        %v2529 = vpop.f32.mrb[0].mxu0
        %v2530 = vadd.f32 %v2478, %v2529
        %v2531 = vpop.f32.mrb[0].mxu0
        %v2532 = vpop.f32.mrb[0].mxu0
        %v2533 = vadd.f32 %v2478, %v2532
        %v2534 = vpop.f32.mrb[0].mxu0
        %2535 = vdwg.mxu0
        %v2536 = vmul.f32 %v2439, 0.25
        %v2537 = vmul.f32 %v2440, 0.25
        %v2538 = vadd.f32 %v1457, %v2530
        %v2539 = vadd.f32 %v1458, %v2533
        %v2540 = vld [vmem:[%s1426] sm:$0x1]
        %v2541 = vld [vmem:[%s1429] sm:$0x1]
        %v2542 = vsel %vm1485, %v2538, 0.0
        %2543 = vadd.xlane.f32.xlu0 %v2542
        %v2544 = vpop.xlane.xlu0 %2543
        %v2545 = vsel %vm1485, %v2539, 0.0
        %2546 = vadd.xlane.f32.xlu0 %v2545
        %v2547 = vpop.xlane.xlu0 %2546
        %v2548 = vrcp.pop 32.0
        %v2549 = vmul.f32 %v2544, %v2548
        %v2550 = vmul.f32 %v2547, %v2548
        %v2551 = vsub.f32 %v2538, %v2549
        %v2552 = vsub.f32 %v2539, %v2550
        %v2553 = vmul.f32 %v2551, %v2551
        %v2554 = vmul.f32 %v2552, %v2552
        %v2555 = vsel %vm1485, %v2553, 0.0
        %2556 = vadd.xlane.f32.xlu0 %v2555
        %v2557 = vpop.xlane.xlu0 %2556
        %v2558 = vsel %vm1485, %v2554, 0.0
        %2559 = vadd.xlane.f32.xlu0 %v2558
        %v2560 = vpop.xlane.xlu0 %2559
        %v2561 = vmul.f32 %v2557, %v2548
        %v2562 = vmul.f32 %v2560, %v2548
        %v2563 = vadd.f32 %v2561, 1e-05
        %v2564 = vadd.f32 %v2562, 1e-05
        %v2565 = vrsqrt.pop %v2563
        %v2566 = vrsqrt.pop %v2564
        %v2567 = vmul.f32 %v2551, %v2565
        %v2568 = vmul.f32 %v2552, %v2566
        %v2570 = vlaneseq
        %v2571 = vshrl.u32 %v2570, 7
        %v2572 = vsub.s32 0, %v2571
        %v2573 = vrot.slane %v2540, %v2572
        %v2575 = vmul.f32 %v2567, %v2573
        %v2576 = vmul.f32 %v2568, %v2573
        %v2578 = vlaneseq
        %v2579 = vshrl.u32 %v2578, 7
        %v2580 = vsub.s32 0, %v2579
        %v2581 = vrot.slane %v2541, %v2580
        %v2583 = vadd.f32 %v2575, %v2581
        %v2584 = vadd.f32 %v2576, %v2581
        %v2585 = vpack.c.bf16 %v2584, %v2583
        %v2586 = vld [vmem:[%s1410] sm:$0xf]
        %v2587 = vld [vmem:[%s1410 + $0x4] sm:$0xf]
        %v2588 = vld [vmem:[%s1410 + $0x8] sm:$0xf]
        %v2589 = vld [vmem:[%s1410 + $0xc] sm:$0xf]
        %v2590 = vld [vmem:[%s1196] sm:$0x1]
        %v2592 = vlaneseq
        %v2593 = vshrl.u32 %v2592, 7
        %v2594 = vsub.s32 0, %v2593
        %v2595 = vrot.slane %v2590, %v2594
        %v2601 = vunpack.c.l.b16 %v2586
        %v2602 = vunpack.c.l.b16 %v2587
        %v2603 = vunpack.c.l.b16 %v2588
        %v2604 = vunpack.c.l.b16 %v2589
        %v2605 = vpack.c.b16 %v2602, %v2601
        %v2606 = vpack.c.b16 %v2604, %v2603
        %v2610 = vsel %vm1485, %v2585, 0
        %2612 = vmatprep.subr.bf16.mxu0 0
        %2613 = vmatpush1.bf16.msra.mxu0 %v2605
        %2614 = vmatprep.subr.bf16.mxu0 0
        %2615 = vmatpush1.bf16.msra.mxu0 %v2606
        %2616 = vmatprep.subr.bf16.mxu0 0
        %2617 = vmatpush1.bf16.msra.mxu0 0
        %2618 = vmatprep.subr.bf16.mxu0 0
        %2619 = vmatpush1.bf16.msra.mxu0 0
        %2620 = vmatprep.subr.bf16.mxu0 0
        %2621 = vmatpush1.bf16.msra.mxu0 0
        %2622 = vmatprep.subr.bf16.mxu0 0
        %2623 = vmatpush1.bf16.msra.mxu0 0
        %2624 = vmatprep.subr.bf16.mxu0 0
        %2625 = vmatpush1.bf16.msra.mxu0 0
        %2626 = vmatprep.subr.bf16.mxu0 0
        %2627 = vmatpush1.bf16.msra.mxu0 0
        %2628 = vmatprep.subr.bf16.mxu0 0
        %2629 = vmatpush1.bf16.msra.mxu0 0
        %2630 = vmatprep.subr.bf16.mxu0 0
        %2631 = vmatpush1.bf16.msra.mxu0 0
        %2632 = vmatprep.subr.bf16.mxu0 0
        %2633 = vmatpush1.bf16.msra.mxu0 0
        %2634 = vmatprep.subr.bf16.mxu0 0
        %2635 = vmatpush1.bf16.msra.mxu0 0
        %2636 = vmatprep.subr.bf16.mxu0 0
        %2637 = vmatpush1.bf16.msra.mxu0 0
        %2638 = vmatprep.subr.bf16.mxu0 0
        %2639 = vmatpush1.bf16.msra.mxu0 0
        %2640 = vmatprep.subr.bf16.mxu0 0
        %2641 = vmatpush1.bf16.msra.mxu0 0
        %2642 = vmatprep.subr.bf16.mxu0 0
        %2643 = vmatpush1.bf16.msra.mxu0 0
        %2644 = vmatprep.mubr.bf16.mxu0 0
        %2645 = vmatmul.mubr.bf16.gmra.mrb[0].mxu0 %v2610
        %v2646 = vpop.f32.mrb[0].mxu0
        %v2647 = vadd.f32 %v2595, %v2646
        %v2648 = vpop.f32.mrb[0].mxu0
        %v2649 = vpop.f32.mrb[0].mxu0
        %v2650 = vadd.f32 %v2595, %v2649
        %v2651 = vpop.f32.mrb[0].mxu0
        %2652 = vdwg.mxu0
        %v2653 = vpack.c.bf16 %v1460, %v1459
        %v2654 = vld [vmem:[%s1415] sm:$0xf]
        %v2655 = vld [vmem:[%s1415 + $0x4] sm:$0xf]
        %v2656 = vld [vmem:[%s1415 + $0x8] sm:$0xf]
        %v2657 = vld [vmem:[%s1415 + $0xc] sm:$0xf]
        %v2658 = vld [vmem:[%s1204] sm:$0x1]
        %v2660 = vlaneseq
        %v2661 = vshrl.u32 %v2660, 7
        %v2662 = vsub.s32 0, %v2661
        %v2663 = vrot.slane %v2658, %v2662
        %v2669 = vunpack.c.l.b16 %v2654
        %v2670 = vunpack.c.l.b16 %v2655
        %v2671 = vunpack.c.l.b16 %v2656
        %v2672 = vunpack.c.l.b16 %v2657
        %v2673 = vpack.c.b16 %v2670, %v2669
        %v2674 = vpack.c.b16 %v2672, %v2671
        %v2678 = vsel %vm1485, %v2653, 0
        %2680 = vmatprep.subr.bf16.mxu0 0
        %2681 = vmatpush1.bf16.msra.mxu0 %v2673
        %2682 = vmatprep.subr.bf16.mxu0 0
        %2683 = vmatpush1.bf16.msra.mxu0 %v2674
        %2684 = vmatprep.subr.bf16.mxu0 0
        %2685 = vmatpush1.bf16.msra.mxu0 0
        %2686 = vmatprep.subr.bf16.mxu0 0
        %2687 = vmatpush1.bf16.msra.mxu0 0
        %2688 = vmatprep.subr.bf16.mxu0 0
        %2689 = vmatpush1.bf16.msra.mxu0 0
        %2690 = vmatprep.subr.bf16.mxu0 0
        %2691 = vmatpush1.bf16.msra.mxu0 0
        %2692 = vmatprep.subr.bf16.mxu0 0
        %2693 = vmatpush1.bf16.msra.mxu0 0
        %2694 = vmatprep.subr.bf16.mxu0 0
        %2695 = vmatpush1.bf16.msra.mxu0 0
        %2696 = vmatprep.subr.bf16.mxu0 0
        %2697 = vmatpush1.bf16.msra.mxu0 0
        %2698 = vmatprep.subr.bf16.mxu0 0
        %2699 = vmatpush1.bf16.msra.mxu0 0
        %2700 = vmatprep.subr.bf16.mxu0 0
        %2701 = vmatpush1.bf16.msra.mxu0 0
        %2702 = vmatprep.subr.bf16.mxu0 0
        %2703 = vmatpush1.bf16.msra.mxu0 0
        %2704 = vmatprep.subr.bf16.mxu0 0
        %2705 = vmatpush1.bf16.msra.mxu0 0
        %2706 = vmatprep.subr.bf16.mxu0 0
        %2707 = vmatpush1.bf16.msra.mxu0 0
        %2708 = vmatprep.subr.bf16.mxu0 0
        %2709 = vmatpush1.bf16.msra.mxu0 0
        %2710 = vmatprep.subr.bf16.mxu0 0
        %2711 = vmatpush1.bf16.msra.mxu0 0
        %2712 = vmatprep.mubr.bf16.mxu0 0
        %2713 = vmatmul.mubr.bf16.gmra.mrb[0].mxu0 %v2678
        %v2714 = vpop.f32.mrb[0].mxu0
        %v2715 = vadd.f32 %v2663, %v2714
        %v2716 = vpop.f32.mrb[0].mxu0
        %v2717 = vpop.f32.mrb[0].mxu0
        %v2718 = vadd.f32 %v2663, %v2717
        %v2719 = vpop.f32.mrb[0].mxu0
        %2720 = vdwg.mxu0
        %v2721 = vld [vmem:[#allocation8] sm:$0xff]
        %v2722 = vld [vmem:[#allocation8 + $0x8] sm:$0xff]
        %v2723 = vld [vmem:[%s1213] sm:$0xf]
        %v2724 = vld [vmem:[%s1213 + $0x4] sm:$0xf]
        %v2725 = vld [vmem:[%s1213 + $0x8] sm:$0xf]
        %v2726 = vld [vmem:[%s1213 + $0xc] sm:$0xf]
        %v2727 = vld [vmem:[%s1221] sm:$0x1]
        %v2728 = vpack.c.bf16 %v2647, %v2647
        %v2729 = vpack.c.bf16 %v2650, %v2650
        %v2730 = vpack.c.bf16 %v2715, %v2715
        %v2731 = vpack.c.bf16 %v2718, %v2718
        %v2733 = vsel %vm1542, %v2728, 0
        %v2736 = vsel %vm1542, %v2730, 0
        %2738 = vmatprep.subr.bf16.mxu0 0
        %2739 = vmatpush1.bf16.xpose.msra.mxu0 %v2736
        %2740 = vmatprep.subr.bf16.mxu0 0
        %2741 = vmatpush1.bf16.xpose.msra.mxu0 0
        %2742 = vmatprep.subr.bf16.mxu0 0
        %2743 = vmatpush1.bf16.xpose.msra.mxu0 0
        %2744 = vmatprep.subr.bf16.mxu0 0
        %2745 = vmatpush1.bf16.xpose.msra.mxu0 0
        %2746 = vmatprep.subr.bf16.mxu0 0
        %2747 = vmatpush1.bf16.xpose.msra.mxu0 0
        %2748 = vmatprep.subr.bf16.mxu0 0
        %2749 = vmatpush1.bf16.xpose.msra.mxu0 0
        %2750 = vmatprep.subr.bf16.mxu0 0
        %2751 = vmatpush1.bf16.xpose.msra.mxu0 0
        %2752 = vmatprep.subr.bf16.mxu0 0
        %2753 = vmatpush1.bf16.xpose.msra.mxu0 0
        %2754 = vmatprep.subr.bf16.mxu0 0
        %2755 = vmatpush1.bf16.xpose.msra.mxu0 0
        %2756 = vmatprep.subr.bf16.mxu0 0
        %2757 = vmatpush1.bf16.xpose.msra.mxu0 0
        %2758 = vmatprep.subr.bf16.mxu0 0
        %2759 = vmatpush1.bf16.xpose.msra.mxu0 0
        %2760 = vmatprep.subr.bf16.mxu0 0
        %2761 = vmatpush1.bf16.xpose.msra.mxu0 0
        %2762 = vmatprep.subr.bf16.mxu0 0
        %2763 = vmatpush1.bf16.xpose.msra.mxu0 0
        %2764 = vmatprep.subr.bf16.mxu0 0
        %2765 = vmatpush1.bf16.xpose.msra.mxu0 0
        %2766 = vmatprep.subr.bf16.mxu0 0
        %2767 = vmatpush1.bf16.xpose.msra.mxu0 0
        %2768 = vmatprep.subr.bf16.mxu0 0
        %2769 = vmatpush1.bf16.xpose.msra.mxu0 0
        %2770 = vmatprep.mubr.bf16.mxu0 0
        %2771 = vmatmul.mubr.bf16.gmra.mrb[0].mxu0 %v2733
        %v2772 = vpop.f32.mrb[0].mxu0
        %v2773 = vadd.f32 0.0, %v2772
        %v2774 = vpop.f32.mrb[0].mxu0
        %v2775 = vpop.f32.mrb[0].mxu0
        %v2776 = vpop.f32.mrb[0].mxu0
        %2777 = vdwg.mxu0
        %v2779 = vsel %vm1542, %v2729, 0
        %v2782 = vsel %vm1542, %v2731, 0
        %2784 = vmatprep.subr.bf16.mxu0 0
        %2785 = vmatpush1.bf16.xpose.msra.mxu0 %v2782
        %2786 = vmatprep.subr.bf16.mxu0 0
        %2787 = vmatpush1.bf16.xpose.msra.mxu0 0
        %2788 = vmatprep.subr.bf16.mxu0 0
        %2789 = vmatpush1.bf16.xpose.msra.mxu0 0
        %2790 = vmatprep.subr.bf16.mxu0 0
        %2791 = vmatpush1.bf16.xpose.msra.mxu0 0
        %2792 = vmatprep.subr.bf16.mxu0 0
        %2793 = vmatpush1.bf16.xpose.msra.mxu0 0
        %2794 = vmatprep.subr.bf16.mxu0 0
        %2795 = vmatpush1.bf16.xpose.msra.mxu0 0
        %2796 = vmatprep.subr.bf16.mxu0 0
        %2797 = vmatpush1.bf16.xpose.msra.mxu0 0
        %2798 = vmatprep.subr.bf16.mxu0 0
        %2799 = vmatpush1.bf16.xpose.msra.mxu0 0
        %2800 = vmatprep.subr.bf16.mxu0 0
        %2801 = vmatpush1.bf16.xpose.msra.mxu0 0
        %2802 = vmatprep.subr.bf16.mxu0 0
        %2803 = vmatpush1.bf16.xpose.msra.mxu0 0
        %2804 = vmatprep.subr.bf16.mxu0 0
        %2805 = vmatpush1.bf16.xpose.msra.mxu0 0
        %2806 = vmatprep.subr.bf16.mxu0 0
        %2807 = vmatpush1.bf16.xpose.msra.mxu0 0
        %2808 = vmatprep.subr.bf16.mxu0 0
        %2809 = vmatpush1.bf16.xpose.msra.mxu0 0
        %2810 = vmatprep.subr.bf16.mxu0 0
        %2811 = vmatpush1.bf16.xpose.msra.mxu0 0
        %2812 = vmatprep.subr.bf16.mxu0 0
        %2813 = vmatpush1.bf16.xpose.msra.mxu0 0
        %2814 = vmatprep.subr.bf16.mxu0 0
        %2815 = vmatpush1.bf16.xpose.msra.mxu0 0
        %2816 = vmatprep.mubr.bf16.mxu0 0
        %2817 = vmatmul.mubr.bf16.gmra.mrb[0].mxu0 %v2779
        %v2818 = vpop.f32.mrb[0].mxu0
        %v2819 = vadd.f32 0.0, %v2818
        %v2820 = vpop.f32.mrb[0].mxu0
        %v2821 = vpop.f32.mrb[0].mxu0
        %v2822 = vpop.f32.mrb[0].mxu0
        %2823 = vdwg.mxu0
        %v2824 = vmul.f32 %v2773, 0.35355338
        %v2825 = vmul.f32 %v2819, 0.35355338
        %v2826 = vadd.f32 %v2824, %v2721
        %v2827 = vadd.f32 %v2825, %v2722
        %v2828 = vsel %vm1542, %v2826, -inf
        %2829 = vmax.xlane.f32.xlu0 %v2828
        %v2830 = vpop.xlane.xlu0 %2829
        %v2831 = vsel %vm1542, %v2827, -inf
        %2832 = vmax.xlane.f32.xlu0 %v2831
        %v2833 = vpop.xlane.xlu0 %2832
        %v2834 = vsub.f32 %v2826, %v2830
        %v2835 = vsub.f32 %v2827, %v2833
        %v2836 = vmul.f32 %v2834, 1.442695
        %v2837 = vpow.pop %v2836
        %v2838 = vmul.f32 %v2835, 1.442695
        %v2839 = vpow.pop %v2838
        %v2840 = vsel %vm1542, %v2837, 0.0
        %2841 = vadd.xlane.f32.xlu0 %v2840
        %v2842 = vpop.xlane.xlu0 %2841
        %v2843 = vsel %vm1542, %v2839, 0.0
        %2844 = vadd.xlane.f32.xlu0 %v2843
        %v2845 = vpop.xlane.xlu0 %2844
        %v2846 = vrcp.pop %v2842
        %v2847 = vrcp.pop %v2845
        %v2848 = vmul.f32 %v2837, %v2846
        %v2849 = vmul.f32 %v2839, %v2847
        %v2850 = vpack.c.bf16 %v2848, %v2848
        %v2851 = vpack.c.bf16 %v2849, %v2849
        %2853 = vrot.lane.b32.xlu0 %v2730, 96
        %v2854 = vpop.permute.xlu0 %2853
        %v2856 = vsel %vm1542, %v2850, 0
        %v2859 = vsel %vm1671, %v2854, 0
        %2861 = vmatprep.subr.bf16.mxu0 0
        %2862 = vmatpush1.bf16.msra.mxu0 %v2859
        %2863 = vmatprep.subr.bf16.mxu0 0
        %2864 = vmatpush1.bf16.msra.mxu0 0
        %2865 = vmatprep.subr.bf16.mxu0 0
        %2866 = vmatpush1.bf16.msra.mxu0 0
        %2867 = vmatprep.subr.bf16.mxu0 0
        %2868 = vmatpush1.bf16.msra.mxu0 0
        %2869 = vmatprep.subr.bf16.mxu0 0
        %2870 = vmatpush1.bf16.msra.mxu0 0
        %2871 = vmatprep.subr.bf16.mxu0 0
        %2872 = vmatpush1.bf16.msra.mxu0 0
        %2873 = vmatprep.subr.bf16.mxu0 0
        %2874 = vmatpush1.bf16.msra.mxu0 0
        %2875 = vmatprep.subr.bf16.mxu0 0
        %2876 = vmatpush1.bf16.msra.mxu0 0
        %2877 = vmatprep.subr.bf16.mxu0 0
        %2878 = vmatpush1.bf16.msra.mxu0 0
        %2879 = vmatprep.subr.bf16.mxu0 0
        %2880 = vmatpush1.bf16.msra.mxu0 0
        %2881 = vmatprep.subr.bf16.mxu0 0
        %2882 = vmatpush1.bf16.msra.mxu0 0
        %2883 = vmatprep.subr.bf16.mxu0 0
        %2884 = vmatpush1.bf16.msra.mxu0 0
        %2885 = vmatprep.subr.bf16.mxu0 0
        %2886 = vmatpush1.bf16.msra.mxu0 0
        %2887 = vmatprep.subr.bf16.mxu0 0
        %2888 = vmatpush1.bf16.msra.mxu0 0
        %2889 = vmatprep.subr.bf16.mxu0 0
        %2890 = vmatpush1.bf16.msra.mxu0 0
        %2891 = vmatprep.subr.bf16.mxu0 0
        %2892 = vmatpush1.bf16.msra.mxu0 0
        %2893 = vmatprep.mubr.bf16.mxu0 0
        %2894 = vmatmul.mubr.bf16.gmra.mrb[0].mxu0 %v2856
        %v2895 = vpop.f32.mrb[0].mxu0
        %v2896 = vadd.f32 0.0, %v2895
        %v2897 = vpop.f32.mrb[0].mxu0
        %v2898 = vpop.f32.mrb[0].mxu0
        %v2899 = vpop.f32.mrb[0].mxu0
        %2900 = vdwg.mxu0
        %2902 = vrot.lane.b32.xlu0 %v2731, 96
        %v2903 = vpop.permute.xlu0 %2902
        %v2905 = vsel %vm1542, %v2851, 0
        %v2908 = vsel %vm1671, %v2903, 0
        %2910 = vmatprep.subr.bf16.mxu0 0
        %2911 = vmatpush1.bf16.msra.mxu0 %v2908
        %2912 = vmatprep.subr.bf16.mxu0 0
        %2913 = vmatpush1.bf16.msra.mxu0 0
        %2914 = vmatprep.subr.bf16.mxu0 0
        %2915 = vmatpush1.bf16.msra.mxu0 0
        %2916 = vmatprep.subr.bf16.mxu0 0
        %2917 = vmatpush1.bf16.msra.mxu0 0
        %2918 = vmatprep.subr.bf16.mxu0 0
        %2919 = vmatpush1.bf16.msra.mxu0 0
        %2920 = vmatprep.subr.bf16.mxu0 0
        %2921 = vmatpush1.bf16.msra.mxu0 0
        %2922 = vmatprep.subr.bf16.mxu0 0
        %2923 = vmatpush1.bf16.msra.mxu0 0
        %2924 = vmatprep.subr.bf16.mxu0 0
        %2925 = vmatpush1.bf16.msra.mxu0 0
        %2926 = vmatprep.subr.bf16.mxu0 0
        %2927 = vmatpush1.bf16.msra.mxu0 0
        %2928 = vmatprep.subr.bf16.mxu0 0
        %2929 = vmatpush1.bf16.msra.mxu0 0
        %2930 = vmatprep.subr.bf16.mxu0 0
        %2931 = vmatpush1.bf16.msra.mxu0 0
        %2932 = vmatprep.subr.bf16.mxu0 0
        %2933 = vmatpush1.bf16.msra.mxu0 0
        %2934 = vmatprep.subr.bf16.mxu0 0
        %2935 = vmatpush1.bf16.msra.mxu0 0
        %2936 = vmatprep.subr.bf16.mxu0 0
        %2937 = vmatpush1.bf16.msra.mxu0 0
        %2938 = vmatprep.subr.bf16.mxu0 0
        %2939 = vmatpush1.bf16.msra.mxu0 0
        %2940 = vmatprep.subr.bf16.mxu0 0
        %2941 = vmatpush1.bf16.msra.mxu0 0
        %2942 = vmatprep.mubr.bf16.mxu0 0
        %2943 = vmatmul.mubr.bf16.gmra.mrb[0].mxu0 %v2905
        %v2944 = vpop.f32.mrb[0].mxu0
        %v2945 = vadd.f32 0.0, %v2944
        %v2946 = vpop.f32.mrb[0].mxu0
        %v2947 = vpop.f32.mrb[0].mxu0
        %v2948 = vpop.f32.mrb[0].mxu0
        %2949 = vdwg.mxu0
        %2951 = vrot.lane.b32.xlu0 %v2728, 120
        %v2952 = vpop.permute.xlu0 %2951
        %2953 = vrot.lane.b32.xlu0 %v2730, 120
        %v2954 = vpop.permute.xlu0 %2953
        %v2956 = vsel %vm1542, %v2952, 0
        %v2959 = vsel %vm1542, %v2954, 0
        %2961 = vmatprep.subr.bf16.mxu0 0
        %2962 = vmatpush1.bf16.xpose.msra.mxu0 %v2959
        %2963 = vmatprep.subr.bf16.mxu0 0
        %2964 = vmatpush1.bf16.xpose.msra.mxu0 0
        %2965 = vmatprep.subr.bf16.mxu0 0
        %2966 = vmatpush1.bf16.xpose.msra.mxu0 0
        %2967 = vmatprep.subr.bf16.mxu0 0
        %2968 = vmatpush1.bf16.xpose.msra.mxu0 0
        %2969 = vmatprep.subr.bf16.mxu0 0
        %2970 = vmatpush1.bf16.xpose.msra.mxu0 0
        %2971 = vmatprep.subr.bf16.mxu0 0
        %2972 = vmatpush1.bf16.xpose.msra.mxu0 0
        %2973 = vmatprep.subr.bf16.mxu0 0
        %2974 = vmatpush1.bf16.xpose.msra.mxu0 0
        %2975 = vmatprep.subr.bf16.mxu0 0
        %2976 = vmatpush1.bf16.xpose.msra.mxu0 0
        %2977 = vmatprep.subr.bf16.mxu0 0
        %2978 = vmatpush1.bf16.xpose.msra.mxu0 0
        %2979 = vmatprep.subr.bf16.mxu0 0
        %2980 = vmatpush1.bf16.xpose.msra.mxu0 0
        %2981 = vmatprep.subr.bf16.mxu0 0
        %2982 = vmatpush1.bf16.xpose.msra.mxu0 0
        %2983 = vmatprep.subr.bf16.mxu0 0
        %2984 = vmatpush1.bf16.xpose.msra.mxu0 0
        %2985 = vmatprep.subr.bf16.mxu0 0
        %2986 = vmatpush1.bf16.xpose.msra.mxu0 0
        %2987 = vmatprep.subr.bf16.mxu0 0
        %2988 = vmatpush1.bf16.xpose.msra.mxu0 0
        %2989 = vmatprep.subr.bf16.mxu0 0
        %2990 = vmatpush1.bf16.xpose.msra.mxu0 0
        %2991 = vmatprep.subr.bf16.mxu0 0
        %2992 = vmatpush1.bf16.xpose.msra.mxu0 0
        %2993 = vmatprep.mubr.bf16.mxu0 0
        %2994 = vmatmul.mubr.bf16.gmra.mrb[0].mxu0 %v2956
        %v2995 = vpop.f32.mrb[0].mxu0
        %v2996 = vadd.f32 0.0, %v2995
        %v2997 = vpop.f32.mrb[0].mxu0
        %v2998 = vpop.f32.mrb[0].mxu0
        %v2999 = vpop.f32.mrb[0].mxu0
        %3000 = vdwg.mxu0
        %3002 = vrot.lane.b32.xlu0 %v2729, 120
        %v3003 = vpop.permute.xlu0 %3002
        %3004 = vrot.lane.b32.xlu0 %v2731, 120
        %v3005 = vpop.permute.xlu0 %3004
        %v3007 = vsel %vm1542, %v3003, 0
        %v3010 = vsel %vm1542, %v3005, 0
        %3012 = vmatprep.subr.bf16.mxu0 0
        %3013 = vmatpush1.bf16.xpose.msra.mxu0 %v3010
        %3014 = vmatprep.subr.bf16.mxu0 0
        %3015 = vmatpush1.bf16.xpose.msra.mxu0 0
        %3016 = vmatprep.subr.bf16.mxu0 0
        %3017 = vmatpush1.bf16.xpose.msra.mxu0 0
        %3018 = vmatprep.subr.bf16.mxu0 0
        %3019 = vmatpush1.bf16.xpose.msra.mxu0 0
        %3020 = vmatprep.subr.bf16.mxu0 0
        %3021 = vmatpush1.bf16.xpose.msra.mxu0 0
        %3022 = vmatprep.subr.bf16.mxu0 0
        %3023 = vmatpush1.bf16.xpose.msra.mxu0 0
        %3024 = vmatprep.subr.bf16.mxu0 0
        %3025 = vmatpush1.bf16.xpose.msra.mxu0 0
        %3026 = vmatprep.subr.bf16.mxu0 0
        %3027 = vmatpush1.bf16.xpose.msra.mxu0 0
        %3028 = vmatprep.subr.bf16.mxu0 0
        %3029 = vmatpush1.bf16.xpose.msra.mxu0 0
        %3030 = vmatprep.subr.bf16.mxu0 0
        %3031 = vmatpush1.bf16.xpose.msra.mxu0 0
        %3032 = vmatprep.subr.bf16.mxu0 0
        %3033 = vmatpush1.bf16.xpose.msra.mxu0 0
        %3034 = vmatprep.subr.bf16.mxu0 0
        %3035 = vmatpush1.bf16.xpose.msra.mxu0 0
        %3036 = vmatprep.subr.bf16.mxu0 0
        %3037 = vmatpush1.bf16.xpose.msra.mxu0 0
        %3038 = vmatprep.subr.bf16.mxu0 0
        %3039 = vmatpush1.bf16.xpose.msra.mxu0 0
        %3040 = vmatprep.subr.bf16.mxu0 0
        %3041 = vmatpush1.bf16.xpose.msra.mxu0 0
        %3042 = vmatprep.subr.bf16.mxu0 0
        %3043 = vmatpush1.bf16.xpose.msra.mxu0 0
        %3044 = vmatprep.mubr.bf16.mxu0 0
        %3045 = vmatmul.mubr.bf16.gmra.mrb[0].mxu0 %v3007
        %v3046 = vpop.f32.mrb[0].mxu0
        %v3047 = vadd.f32 0.0, %v3046
        %v3048 = vpop.f32.mrb[0].mxu0
        %v3049 = vpop.f32.mrb[0].mxu0
        %v3050 = vpop.f32.mrb[0].mxu0
        %3051 = vdwg.mxu0
        %v3052 = vmul.f32 %v2996, 0.35355338
        %v3053 = vmul.f32 %v3047, 0.35355338
        %v3054 = vadd.f32 %v3052, %v2721
        %v3055 = vadd.f32 %v3053, %v2722
        %v3056 = vsel %vm1542, %v3054, -inf
        %3057 = vmax.xlane.f32.xlu0 %v3056
        %v3058 = vpop.xlane.xlu0 %3057
        %v3059 = vsel %vm1542, %v3055, -inf
        %3060 = vmax.xlane.f32.xlu0 %v3059
        %v3061 = vpop.xlane.xlu0 %3060
        %v3062 = vsub.f32 %v3054, %v3058
        %v3063 = vsub.f32 %v3055, %v3061
        %v3064 = vmul.f32 %v3062, 1.442695
        %v3065 = vpow.pop %v3064
        %v3066 = vmul.f32 %v3063, 1.442695
        %v3067 = vpow.pop %v3066
        %v3068 = vsel %vm1542, %v3065, 0.0
        %3069 = vadd.xlane.f32.xlu0 %v3068
        %v3070 = vpop.xlane.xlu0 %3069
        %v3071 = vsel %vm1542, %v3067, 0.0
        %3072 = vadd.xlane.f32.xlu0 %v3071
        %v3073 = vpop.xlane.xlu0 %3072
        %v3074 = vrcp.pop %v3070
        %v3075 = vrcp.pop %v3073
        %v3076 = vmul.f32 %v3065, %v3074
        %v3077 = vmul.f32 %v3067, %v3075
        %v3078 = vpack.c.bf16 %v3076, %v3076
        %v3079 = vpack.c.bf16 %v3077, %v3077
        %3080 = vrot.lane.b32.xlu0 %v2730, 88
        %v3081 = vpop.permute.xlu0 %3080
        %v3083 = vsel %vm1542, %v3078, 0
        %v3086 = vsel %vm1671, %v3081, 0
        %3088 = vmatprep.subr.bf16.mxu0 0
        %3089 = vmatpush1.bf16.msra.mxu0 %v3086
        %3090 = vmatprep.subr.bf16.mxu0 0
        %3091 = vmatpush1.bf16.msra.mxu0 0
        %3092 = vmatprep.subr.bf16.mxu0 0
        %3093 = vmatpush1.bf16.msra.mxu0 0
        %3094 = vmatprep.subr.bf16.mxu0 0
        %3095 = vmatpush1.bf16.msra.mxu0 0
        %3096 = vmatprep.subr.bf16.mxu0 0
        %3097 = vmatpush1.bf16.msra.mxu0 0
        %3098 = vmatprep.subr.bf16.mxu0 0
        %3099 = vmatpush1.bf16.msra.mxu0 0
        %3100 = vmatprep.subr.bf16.mxu0 0
        %3101 = vmatpush1.bf16.msra.mxu0 0
        %3102 = vmatprep.subr.bf16.mxu0 0
        %3103 = vmatpush1.bf16.msra.mxu0 0
        %3104 = vmatprep.subr.bf16.mxu0 0
        %3105 = vmatpush1.bf16.msra.mxu0 0
        %3106 = vmatprep.subr.bf16.mxu0 0
        %3107 = vmatpush1.bf16.msra.mxu0 0
        %3108 = vmatprep.subr.bf16.mxu0 0
        %3109 = vmatpush1.bf16.msra.mxu0 0
        %3110 = vmatprep.subr.bf16.mxu0 0
        %3111 = vmatpush1.bf16.msra.mxu0 0
        %3112 = vmatprep.subr.bf16.mxu0 0
        %3113 = vmatpush1.bf16.msra.mxu0 0
        %3114 = vmatprep.subr.bf16.mxu0 0
        %3115 = vmatpush1.bf16.msra.mxu0 0
        %3116 = vmatprep.subr.bf16.mxu0 0
        %3117 = vmatpush1.bf16.msra.mxu0 0
        %3118 = vmatprep.subr.bf16.mxu0 0
        %3119 = vmatpush1.bf16.msra.mxu0 0
        %3120 = vmatprep.mubr.bf16.mxu0 0
        %3121 = vmatmul.mubr.bf16.gmra.mrb[0].mxu0 %v3083
        %v3122 = vpop.f32.mrb[0].mxu0
        %v3123 = vadd.f32 0.0, %v3122
        %v3124 = vpop.f32.mrb[0].mxu0
        %v3125 = vpop.f32.mrb[0].mxu0
        %v3126 = vpop.f32.mrb[0].mxu0
        %3127 = vdwg.mxu0
        %3128 = vrot.lane.b32.xlu0 %v2731, 88
        %v3129 = vpop.permute.xlu0 %3128
        %v3131 = vsel %vm1542, %v3079, 0
        %v3134 = vsel %vm1671, %v3129, 0
        %3136 = vmatprep.subr.bf16.mxu0 0
        %3137 = vmatpush1.bf16.msra.mxu0 %v3134
        %3138 = vmatprep.subr.bf16.mxu0 0
        %3139 = vmatpush1.bf16.msra.mxu0 0
        %3140 = vmatprep.subr.bf16.mxu0 0
        %3141 = vmatpush1.bf16.msra.mxu0 0
        %3142 = vmatprep.subr.bf16.mxu0 0
        %3143 = vmatpush1.bf16.msra.mxu0 0
        %3144 = vmatprep.subr.bf16.mxu0 0
        %3145 = vmatpush1.bf16.msra.mxu0 0
        %3146 = vmatprep.subr.bf16.mxu0 0
        %3147 = vmatpush1.bf16.msra.mxu0 0
        %3148 = vmatprep.subr.bf16.mxu0 0
        %3149 = vmatpush1.bf16.msra.mxu0 0
        %3150 = vmatprep.subr.bf16.mxu0 0
        %3151 = vmatpush1.bf16.msra.mxu0 0
        %3152 = vmatprep.subr.bf16.mxu0 0
        %3153 = vmatpush1.bf16.msra.mxu0 0
        %3154 = vmatprep.subr.bf16.mxu0 0
        %3155 = vmatpush1.bf16.msra.mxu0 0
        %3156 = vmatprep.subr.bf16.mxu0 0
        %3157 = vmatpush1.bf16.msra.mxu0 0
        %3158 = vmatprep.subr.bf16.mxu0 0
        %3159 = vmatpush1.bf16.msra.mxu0 0
        %3160 = vmatprep.subr.bf16.mxu0 0
        %3161 = vmatpush1.bf16.msra.mxu0 0
        %3162 = vmatprep.subr.bf16.mxu0 0
        %3163 = vmatpush1.bf16.msra.mxu0 0
        %3164 = vmatprep.subr.bf16.mxu0 0
        %3165 = vmatpush1.bf16.msra.mxu0 0
        %3166 = vmatprep.subr.bf16.mxu0 0
        %3167 = vmatpush1.bf16.msra.mxu0 0
        %3168 = vmatprep.mubr.bf16.mxu0 0
        %3169 = vmatmul.mubr.bf16.gmra.mrb[0].mxu0 %v3131
        %v3170 = vpop.f32.mrb[0].mxu0
        %v3171 = vadd.f32 0.0, %v3170
        %v3172 = vpop.f32.mrb[0].mxu0
        %v3173 = vpop.f32.mrb[0].mxu0
        %v3174 = vpop.f32.mrb[0].mxu0
        %3175 = vdwg.mxu0
        %v3176 = vadd.f32 %v2848, %v3076
        %v3177 = vadd.f32 %v2849, %v3077
        %3178 = vrot.lane.b32.xlu0 %v2728, 112
        %v3179 = vpop.permute.xlu0 %3178
        %3180 = vrot.lane.b32.xlu0 %v2730, 112
        %v3181 = vpop.permute.xlu0 %3180
        %v3183 = vsel %vm1542, %v3179, 0
        %v3186 = vsel %vm1542, %v3181, 0
        %3188 = vmatprep.subr.bf16.mxu0 0
        %3189 = vmatpush1.bf16.xpose.msra.mxu0 %v3186
        %3190 = vmatprep.subr.bf16.mxu0 0
        %3191 = vmatpush1.bf16.xpose.msra.mxu0 0
        %3192 = vmatprep.subr.bf16.mxu0 0
        %3193 = vmatpush1.bf16.xpose.msra.mxu0 0
        %3194 = vmatprep.subr.bf16.mxu0 0
        %3195 = vmatpush1.bf16.xpose.msra.mxu0 0
        %3196 = vmatprep.subr.bf16.mxu0 0
        %3197 = vmatpush1.bf16.xpose.msra.mxu0 0
        %3198 = vmatprep.subr.bf16.mxu0 0
        %3199 = vmatpush1.bf16.xpose.msra.mxu0 0
        %3200 = vmatprep.subr.bf16.mxu0 0
        %3201 = vmatpush1.bf16.xpose.msra.mxu0 0
        %3202 = vmatprep.subr.bf16.mxu0 0
        %3203 = vmatpush1.bf16.xpose.msra.mxu0 0
        %3204 = vmatprep.subr.bf16.mxu0 0
        %3205 = vmatpush1.bf16.xpose.msra.mxu0 0
        %3206 = vmatprep.subr.bf16.mxu0 0
        %3207 = vmatpush1.bf16.xpose.msra.mxu0 0
        %3208 = vmatprep.subr.bf16.mxu0 0
        %3209 = vmatpush1.bf16.xpose.msra.mxu0 0
        %3210 = vmatprep.subr.bf16.mxu0 0
        %3211 = vmatpush1.bf16.xpose.msra.mxu0 0
        %3212 = vmatprep.subr.bf16.mxu0 0
        %3213 = vmatpush1.bf16.xpose.msra.mxu0 0
        %3214 = vmatprep.subr.bf16.mxu0 0
        %3215 = vmatpush1.bf16.xpose.msra.mxu0 0
        %3216 = vmatprep.subr.bf16.mxu0 0
        %3217 = vmatpush1.bf16.xpose.msra.mxu0 0
        %3218 = vmatprep.subr.bf16.mxu0 0
        %3219 = vmatpush1.bf16.xpose.msra.mxu0 0
        %3220 = vmatprep.mubr.bf16.mxu0 0
        %3221 = vmatmul.mubr.bf16.gmra.mrb[0].mxu0 %v3183
        %v3222 = vpop.f32.mrb[0].mxu0
        %v3223 = vadd.f32 0.0, %v3222
        %v3224 = vpop.f32.mrb[0].mxu0
        %v3225 = vpop.f32.mrb[0].mxu0
        %v3226 = vpop.f32.mrb[0].mxu0
        %3227 = vdwg.mxu0
        %3228 = vrot.lane.b32.xlu0 %v2729, 112
        %v3229 = vpop.permute.xlu0 %3228
        %3230 = vrot.lane.b32.xlu0 %v2731, 112
        %v3231 = vpop.permute.xlu0 %3230
        %v3233 = vsel %vm1542, %v3229, 0
        %v3236 = vsel %vm1542, %v3231, 0
        %3238 = vmatprep.subr.bf16.mxu0 0
        %3239 = vmatpush1.bf16.xpose.msra.mxu0 %v3236
        %3240 = vmatprep.subr.bf16.mxu0 0
        %3241 = vmatpush1.bf16.xpose.msra.mxu0 0
        %3242 = vmatprep.subr.bf16.mxu0 0
        %3243 = vmatpush1.bf16.xpose.msra.mxu0 0
        %3244 = vmatprep.subr.bf16.mxu0 0
        %3245 = vmatpush1.bf16.xpose.msra.mxu0 0
        %3246 = vmatprep.subr.bf16.mxu0 0
        %3247 = vmatpush1.bf16.xpose.msra.mxu0 0
        %3248 = vmatprep.subr.bf16.mxu0 0
        %3249 = vmatpush1.bf16.xpose.msra.mxu0 0
        %3250 = vmatprep.subr.bf16.mxu0 0
        %3251 = vmatpush1.bf16.xpose.msra.mxu0 0
        %3252 = vmatprep.subr.bf16.mxu0 0
        %3253 = vmatpush1.bf16.xpose.msra.mxu0 0
        %3254 = vmatprep.subr.bf16.mxu0 0
        %3255 = vmatpush1.bf16.xpose.msra.mxu0 0
        %3256 = vmatprep.subr.bf16.mxu0 0
        %3257 = vmatpush1.bf16.xpose.msra.mxu0 0
        %3258 = vmatprep.subr.bf16.mxu0 0
        %3259 = vmatpush1.bf16.xpose.msra.mxu0 0
        %3260 = vmatprep.subr.bf16.mxu0 0
        %3261 = vmatpush1.bf16.xpose.msra.mxu0 0
        %3262 = vmatprep.subr.bf16.mxu0 0
        %3263 = vmatpush1.bf16.xpose.msra.mxu0 0
        %3264 = vmatprep.subr.bf16.mxu0 0
        %3265 = vmatpush1.bf16.xpose.msra.mxu0 0
        %3266 = vmatprep.subr.bf16.mxu0 0
        %3267 = vmatpush1.bf16.xpose.msra.mxu0 0
        %3268 = vmatprep.subr.bf16.mxu0 0
        %3269 = vmatpush1.bf16.xpose.msra.mxu0 0
        %3270 = vmatprep.mubr.bf16.mxu0 0
        %3271 = vmatmul.mubr.bf16.gmra.mrb[0].mxu0 %v3233
        %v3272 = vpop.f32.mrb[0].mxu0
        %v3273 = vadd.f32 0.0, %v3272
        %v3274 = vpop.f32.mrb[0].mxu0
        %v3275 = vpop.f32.mrb[0].mxu0
        %v3276 = vpop.f32.mrb[0].mxu0
        %3277 = vdwg.mxu0
        %v3278 = vmul.f32 %v3223, 0.35355338
        %v3279 = vmul.f32 %v3273, 0.35355338
        %v3280 = vadd.f32 %v3278, %v2721
        %v3281 = vadd.f32 %v3279, %v2722
        %v3282 = vsel %vm1542, %v3280, -inf
        %3283 = vmax.xlane.f32.xlu0 %v3282
        %v3284 = vpop.xlane.xlu0 %3283
        %v3285 = vsel %vm1542, %v3281, -inf
        %3286 = vmax.xlane.f32.xlu0 %v3285
        %v3287 = vpop.xlane.xlu0 %3286
        %v3288 = vsub.f32 %v3280, %v3284
        %v3289 = vsub.f32 %v3281, %v3287
        %v3290 = vmul.f32 %v3288, 1.442695
        %v3291 = vpow.pop %v3290
        %v3292 = vmul.f32 %v3289, 1.442695
        %v3293 = vpow.pop %v3292
        %v3294 = vsel %vm1542, %v3291, 0.0
        %3295 = vadd.xlane.f32.xlu0 %v3294
        %v3296 = vpop.xlane.xlu0 %3295
        %v3297 = vsel %vm1542, %v3293, 0.0
        %3298 = vadd.xlane.f32.xlu0 %v3297
        %v3299 = vpop.xlane.xlu0 %3298
        %v3300 = vrcp.pop %v3296
        %v3301 = vrcp.pop %v3299
        %v3302 = vmul.f32 %v3291, %v3300
        %v3303 = vmul.f32 %v3293, %v3301
        %v3304 = vpack.c.bf16 %v3302, %v3302
        %v3305 = vpack.c.bf16 %v3303, %v3303
        %3306 = vrot.lane.b32.xlu0 %v2730, 80
        %v3307 = vpop.permute.xlu0 %3306
        %v3309 = vsel %vm1542, %v3304, 0
        %v3312 = vsel %vm1671, %v3307, 0
        %3314 = vmatprep.subr.bf16.mxu0 0
        %3315 = vmatpush1.bf16.msra.mxu0 %v3312
        %3316 = vmatprep.subr.bf16.mxu0 0
        %3317 = vmatpush1.bf16.msra.mxu0 0
        %3318 = vmatprep.subr.bf16.mxu0 0
        %3319 = vmatpush1.bf16.msra.mxu0 0
        %3320 = vmatprep.subr.bf16.mxu0 0
        %3321 = vmatpush1.bf16.msra.mxu0 0
        %3322 = vmatprep.subr.bf16.mxu0 0
        %3323 = vmatpush1.bf16.msra.mxu0 0
        %3324 = vmatprep.subr.bf16.mxu0 0
        %3325 = vmatpush1.bf16.msra.mxu0 0
        %3326 = vmatprep.subr.bf16.mxu0 0
        %3327 = vmatpush1.bf16.msra.mxu0 0
        %3328 = vmatprep.subr.bf16.mxu0 0
        %3329 = vmatpush1.bf16.msra.mxu0 0
        %3330 = vmatprep.subr.bf16.mxu0 0
        %3331 = vmatpush1.bf16.msra.mxu0 0
        %3332 = vmatprep.subr.bf16.mxu0 0
        %3333 = vmatpush1.bf16.msra.mxu0 0
        %3334 = vmatprep.subr.bf16.mxu0 0
        %3335 = vmatpush1.bf16.msra.mxu0 0
        %3336 = vmatprep.subr.bf16.mxu0 0
        %3337 = vmatpush1.bf16.msra.mxu0 0
        %3338 = vmatprep.subr.bf16.mxu0 0
        %3339 = vmatpush1.bf16.msra.mxu0 0
        %3340 = vmatprep.subr.bf16.mxu0 0
        %3341 = vmatpush1.bf16.msra.mxu0 0
        %3342 = vmatprep.subr.bf16.mxu0 0
        %3343 = vmatpush1.bf16.msra.mxu0 0
        %3344 = vmatprep.subr.bf16.mxu0 0
        %3345 = vmatpush1.bf16.msra.mxu0 0
        %3346 = vmatprep.mubr.bf16.mxu0 0
        %3347 = vmatmul.mubr.bf16.gmra.mrb[0].mxu0 %v3309
        %v3348 = vpop.f32.mrb[0].mxu0
        %v3349 = vadd.f32 0.0, %v3348
        %v3350 = vpop.f32.mrb[0].mxu0
        %v3351 = vpop.f32.mrb[0].mxu0
        %v3352 = vpop.f32.mrb[0].mxu0
        %3353 = vdwg.mxu0
        %3354 = vrot.lane.b32.xlu0 %v2731, 80
        %v3355 = vpop.permute.xlu0 %3354
        %v3357 = vsel %vm1542, %v3305, 0
        %v3360 = vsel %vm1671, %v3355, 0
        %3362 = vmatprep.subr.bf16.mxu0 0
        %3363 = vmatpush1.bf16.msra.mxu0 %v3360
        %3364 = vmatprep.subr.bf16.mxu0 0
        %3365 = vmatpush1.bf16.msra.mxu0 0
        %3366 = vmatprep.subr.bf16.mxu0 0
        %3367 = vmatpush1.bf16.msra.mxu0 0
        %3368 = vmatprep.subr.bf16.mxu0 0
        %3369 = vmatpush1.bf16.msra.mxu0 0
        %3370 = vmatprep.subr.bf16.mxu0 0
        %3371 = vmatpush1.bf16.msra.mxu0 0
        %3372 = vmatprep.subr.bf16.mxu0 0
        %3373 = vmatpush1.bf16.msra.mxu0 0
        %3374 = vmatprep.subr.bf16.mxu0 0
        %3375 = vmatpush1.bf16.msra.mxu0 0
        %3376 = vmatprep.subr.bf16.mxu0 0
        %3377 = vmatpush1.bf16.msra.mxu0 0
        %3378 = vmatprep.subr.bf16.mxu0 0
        %3379 = vmatpush1.bf16.msra.mxu0 0
        %3380 = vmatprep.subr.bf16.mxu0 0
        %3381 = vmatpush1.bf16.msra.mxu0 0
        %3382 = vmatprep.subr.bf16.mxu0 0
        %3383 = vmatpush1.bf16.msra.mxu0 0
        %3384 = vmatprep.subr.bf16.mxu0 0
        %3385 = vmatpush1.bf16.msra.mxu0 0
        %3386 = vmatprep.subr.bf16.mxu0 0
        %3387 = vmatpush1.bf16.msra.mxu0 0
        %3388 = vmatprep.subr.bf16.mxu0 0
        %3389 = vmatpush1.bf16.msra.mxu0 0
        %3390 = vmatprep.subr.bf16.mxu0 0
        %3391 = vmatpush1.bf16.msra.mxu0 0
        %3392 = vmatprep.subr.bf16.mxu0 0
        %3393 = vmatpush1.bf16.msra.mxu0 0
        %3394 = vmatprep.mubr.bf16.mxu0 0
        %3395 = vmatmul.mubr.bf16.gmra.mrb[0].mxu0 %v3357
        %v3396 = vpop.f32.mrb[0].mxu0
        %v3397 = vadd.f32 0.0, %v3396
        %v3398 = vpop.f32.mrb[0].mxu0
        %v3399 = vpop.f32.mrb[0].mxu0
        %v3400 = vpop.f32.mrb[0].mxu0
        %3401 = vdwg.mxu0
        %v3402 = vadd.f32 %v3176, %v3302
        %v3403 = vadd.f32 %v3177, %v3303
        %3404 = vrot.lane.b32.xlu0 %v2728, 104
        %v3405 = vpop.permute.xlu0 %3404
        %3406 = vrot.lane.b32.xlu0 %v2730, 104
        %v3407 = vpop.permute.xlu0 %3406
        %v3409 = vsel %vm1542, %v3405, 0
        %v3412 = vsel %vm1542, %v3407, 0
        %3414 = vmatprep.subr.bf16.mxu0 0
        %3415 = vmatpush1.bf16.xpose.msra.mxu0 %v3412
        %3416 = vmatprep.subr.bf16.mxu0 0
        %3417 = vmatpush1.bf16.xpose.msra.mxu0 0
        %3418 = vmatprep.subr.bf16.mxu0 0
        %3419 = vmatpush1.bf16.xpose.msra.mxu0 0
        %3420 = vmatprep.subr.bf16.mxu0 0
        %3421 = vmatpush1.bf16.xpose.msra.mxu0 0
        %3422 = vmatprep.subr.bf16.mxu0 0
        %3423 = vmatpush1.bf16.xpose.msra.mxu0 0
        %3424 = vmatprep.subr.bf16.mxu0 0
        %3425 = vmatpush1.bf16.xpose.msra.mxu0 0
        %3426 = vmatprep.subr.bf16.mxu0 0
        %3427 = vmatpush1.bf16.xpose.msra.mxu0 0
        %3428 = vmatprep.subr.bf16.mxu0 0
        %3429 = vmatpush1.bf16.xpose.msra.mxu0 0
        %3430 = vmatprep.subr.bf16.mxu0 0
        %3431 = vmatpush1.bf16.xpose.msra.mxu0 0
        %3432 = vmatprep.subr.bf16.mxu0 0
        %3433 = vmatpush1.bf16.xpose.msra.mxu0 0
        %3434 = vmatprep.subr.bf16.mxu0 0
        %3435 = vmatpush1.bf16.xpose.msra.mxu0 0
        %3436 = vmatprep.subr.bf16.mxu0 0
        %3437 = vmatpush1.bf16.xpose.msra.mxu0 0
        %3438 = vmatprep.subr.bf16.mxu0 0
        %3439 = vmatpush1.bf16.xpose.msra.mxu0 0
        %3440 = vmatprep.subr.bf16.mxu0 0
        %3441 = vmatpush1.bf16.xpose.msra.mxu0 0
        %3442 = vmatprep.subr.bf16.mxu0 0
        %3443 = vmatpush1.bf16.xpose.msra.mxu0 0
        %3444 = vmatprep.subr.bf16.mxu0 0
        %3445 = vmatpush1.bf16.xpose.msra.mxu0 0
        %3446 = vmatprep.mubr.bf16.mxu0 0
        %3447 = vmatmul.mubr.bf16.gmra.mrb[0].mxu0 %v3409
        %v3448 = vpop.f32.mrb[0].mxu0
        %v3449 = vadd.f32 0.0, %v3448
        %v3450 = vpop.f32.mrb[0].mxu0
        %v3451 = vpop.f32.mrb[0].mxu0
        %v3452 = vpop.f32.mrb[0].mxu0
        %3453 = vdwg.mxu0
        %3454 = vrot.lane.b32.xlu0 %v2729, 104
        %v3455 = vpop.permute.xlu0 %3454
        %3456 = vrot.lane.b32.xlu0 %v2731, 104
        %v3457 = vpop.permute.xlu0 %3456
        %v3459 = vsel %vm1542, %v3455, 0
        %v3462 = vsel %vm1542, %v3457, 0
        %3464 = vmatprep.subr.bf16.mxu0 0
        %3465 = vmatpush1.bf16.xpose.msra.mxu0 %v3462
        %3466 = vmatprep.subr.bf16.mxu0 0
        %3467 = vmatpush1.bf16.xpose.msra.mxu0 0
        %3468 = vmatprep.subr.bf16.mxu0 0
        %3469 = vmatpush1.bf16.xpose.msra.mxu0 0
        %3470 = vmatprep.subr.bf16.mxu0 0
        %3471 = vmatpush1.bf16.xpose.msra.mxu0 0
        %3472 = vmatprep.subr.bf16.mxu0 0
        %3473 = vmatpush1.bf16.xpose.msra.mxu0 0
        %3474 = vmatprep.subr.bf16.mxu0 0
        %3475 = vmatpush1.bf16.xpose.msra.mxu0 0
        %3476 = vmatprep.subr.bf16.mxu0 0
        %3477 = vmatpush1.bf16.xpose.msra.mxu0 0
        %3478 = vmatprep.subr.bf16.mxu0 0
        %3479 = vmatpush1.bf16.xpose.msra.mxu0 0
        %3480 = vmatprep.subr.bf16.mxu0 0
        %3481 = vmatpush1.bf16.xpose.msra.mxu0 0
        %3482 = vmatprep.subr.bf16.mxu0 0
        %3483 = vmatpush1.bf16.xpose.msra.mxu0 0
        %3484 = vmatprep.subr.bf16.mxu0 0
        %3485 = vmatpush1.bf16.xpose.msra.mxu0 0
        %3486 = vmatprep.subr.bf16.mxu0 0
        %3487 = vmatpush1.bf16.xpose.msra.mxu0 0
        %3488 = vmatprep.subr.bf16.mxu0 0
        %3489 = vmatpush1.bf16.xpose.msra.mxu0 0
        %3490 = vmatprep.subr.bf16.mxu0 0
        %3491 = vmatpush1.bf16.xpose.msra.mxu0 0
        %3492 = vmatprep.subr.bf16.mxu0 0
        %3493 = vmatpush1.bf16.xpose.msra.mxu0 0
        %3494 = vmatprep.subr.bf16.mxu0 0
        %3495 = vmatpush1.bf16.xpose.msra.mxu0 0
        %3496 = vmatprep.mubr.bf16.mxu0 0
        %3497 = vmatmul.mubr.bf16.gmra.mrb[0].mxu0 %v3459
        %v3498 = vpop.f32.mrb[0].mxu0
        %v3499 = vadd.f32 0.0, %v3498
        %v3500 = vpop.f32.mrb[0].mxu0
        %v3501 = vpop.f32.mrb[0].mxu0
        %v3502 = vpop.f32.mrb[0].mxu0
        %3503 = vdwg.mxu0
        %v3504 = vmul.f32 %v3449, 0.35355338
        %v3505 = vmul.f32 %v3499, 0.35355338
        %v3506 = vadd.f32 %v3504, %v2721
        %v3507 = vadd.f32 %v3505, %v2722
        %v3508 = vsel %vm1542, %v3506, -inf
        %3509 = vmax.xlane.f32.xlu0 %v3508
        %v3510 = vpop.xlane.xlu0 %3509
        %v3511 = vsel %vm1542, %v3507, -inf
        %3512 = vmax.xlane.f32.xlu0 %v3511
        %v3513 = vpop.xlane.xlu0 %3512
        %v3514 = vsub.f32 %v3506, %v3510
        %v3515 = vsub.f32 %v3507, %v3513
        %v3516 = vmul.f32 %v3514, 1.442695
        %v3517 = vpow.pop %v3516
        %v3518 = vmul.f32 %v3515, 1.442695
        %v3519 = vpow.pop %v3518
        %v3520 = vsel %vm1542, %v3517, 0.0
        %3521 = vadd.xlane.f32.xlu0 %v3520
        %v3522 = vpop.xlane.xlu0 %3521
        %v3523 = vsel %vm1542, %v3519, 0.0
        %3524 = vadd.xlane.f32.xlu0 %v3523
        %v3525 = vpop.xlane.xlu0 %3524
        %v3526 = vrcp.pop %v3522
        %v3527 = vrcp.pop %v3525
        %v3528 = vmul.f32 %v3517, %v3526
        %v3529 = vmul.f32 %v3519, %v3527
        %v3530 = vpack.c.bf16 %v3528, %v3528
        %v3531 = vpack.c.bf16 %v3529, %v3529
        %3532 = vrot.lane.b32.xlu0 %v2730, 72
        %v3533 = vpop.permute.xlu0 %3532
        %v3535 = vsel %vm1542, %v3530, 0
        %v3538 = vsel %vm1671, %v3533, 0
        %3540 = vmatprep.subr.bf16.mxu0 0
        %3541 = vmatpush1.bf16.msra.mxu0 %v3538
        %3542 = vmatprep.subr.bf16.mxu0 0
        %3543 = vmatpush1.bf16.msra.mxu0 0
        %3544 = vmatprep.subr.bf16.mxu0 0
        %3545 = vmatpush1.bf16.msra.mxu0 0
        %3546 = vmatprep.subr.bf16.mxu0 0
        %3547 = vmatpush1.bf16.msra.mxu0 0
        %3548 = vmatprep.subr.bf16.mxu0 0
        %3549 = vmatpush1.bf16.msra.mxu0 0
        %3550 = vmatprep.subr.bf16.mxu0 0
        %3551 = vmatpush1.bf16.msra.mxu0 0
        %3552 = vmatprep.subr.bf16.mxu0 0
        %3553 = vmatpush1.bf16.msra.mxu0 0
        %3554 = vmatprep.subr.bf16.mxu0 0
        %3555 = vmatpush1.bf16.msra.mxu0 0
        %3556 = vmatprep.subr.bf16.mxu0 0
        %3557 = vmatpush1.bf16.msra.mxu0 0
        %3558 = vmatprep.subr.bf16.mxu0 0
        %3559 = vmatpush1.bf16.msra.mxu0 0
        %3560 = vmatprep.subr.bf16.mxu0 0
        %3561 = vmatpush1.bf16.msra.mxu0 0
        %3562 = vmatprep.subr.bf16.mxu0 0
        %3563 = vmatpush1.bf16.msra.mxu0 0
        %3564 = vmatprep.subr.bf16.mxu0 0
        %3565 = vmatpush1.bf16.msra.mxu0 0
        %3566 = vmatprep.subr.bf16.mxu0 0
        %3567 = vmatpush1.bf16.msra.mxu0 0
        %3568 = vmatprep.subr.bf16.mxu0 0
        %3569 = vmatpush1.bf16.msra.mxu0 0
        %3570 = vmatprep.subr.bf16.mxu0 0
        %3571 = vmatpush1.bf16.msra.mxu0 0
        %3572 = vmatprep.mubr.bf16.mxu0 0
        %3573 = vmatmul.mubr.bf16.gmra.mrb[0].mxu0 %v3535
        %v3574 = vpop.f32.mrb[0].mxu0
        %v3575 = vadd.f32 0.0, %v3574
        %v3576 = vpop.f32.mrb[0].mxu0
        %v3577 = vpop.f32.mrb[0].mxu0
        %v3578 = vpop.f32.mrb[0].mxu0
        %3579 = vdwg.mxu0
        %3580 = vrot.lane.b32.xlu0 %v2731, 72
        %v3581 = vpop.permute.xlu0 %3580
        %v3583 = vsel %vm1542, %v3531, 0
        %v3586 = vsel %vm1671, %v3581, 0
        %3588 = vmatprep.subr.bf16.mxu0 0
        %3589 = vmatpush1.bf16.msra.mxu0 %v3586
        %3590 = vmatprep.subr.bf16.mxu0 0
        %3591 = vmatpush1.bf16.msra.mxu0 0
        %3592 = vmatprep.subr.bf16.mxu0 0
        %3593 = vmatpush1.bf16.msra.mxu0 0
        %3594 = vmatprep.subr.bf16.mxu0 0
        %3595 = vmatpush1.bf16.msra.mxu0 0
        %3596 = vmatprep.subr.bf16.mxu0 0
        %3597 = vmatpush1.bf16.msra.mxu0 0
        %3598 = vmatprep.subr.bf16.mxu0 0
        %3599 = vmatpush1.bf16.msra.mxu0 0
        %3600 = vmatprep.subr.bf16.mxu0 0
        %3601 = vmatpush1.bf16.msra.mxu0 0
        %3602 = vmatprep.subr.bf16.mxu0 0
        %3603 = vmatpush1.bf16.msra.mxu0 0
        %3604 = vmatprep.subr.bf16.mxu0 0
        %3605 = vmatpush1.bf16.msra.mxu0 0
        %3606 = vmatprep.subr.bf16.mxu0 0
        %3607 = vmatpush1.bf16.msra.mxu0 0
        %3608 = vmatprep.subr.bf16.mxu0 0
        %3609 = vmatpush1.bf16.msra.mxu0 0
        %3610 = vmatprep.subr.bf16.mxu0 0
        %3611 = vmatpush1.bf16.msra.mxu0 0
        %3612 = vmatprep.subr.bf16.mxu0 0
        %3613 = vmatpush1.bf16.msra.mxu0 0
        %3614 = vmatprep.subr.bf16.mxu0 0
        %3615 = vmatpush1.bf16.msra.mxu0 0
        %3616 = vmatprep.subr.bf16.mxu0 0
        %3617 = vmatpush1.bf16.msra.mxu0 0
        %3618 = vmatprep.subr.bf16.mxu0 0
        %3619 = vmatpush1.bf16.msra.mxu0 0
        %3620 = vmatprep.mubr.bf16.mxu0 0
        %3621 = vmatmul.mubr.bf16.gmra.mrb[0].mxu0 %v3583
        %v3622 = vpop.f32.mrb[0].mxu0
        %v3623 = vadd.f32 0.0, %v3622
        %v3624 = vpop.f32.mrb[0].mxu0
        %v3625 = vpop.f32.mrb[0].mxu0
        %v3626 = vpop.f32.mrb[0].mxu0
        %3627 = vdwg.mxu0
        %v3628 = vadd.f32 %v3402, %v3528
        %v3629 = vadd.f32 %v3403, %v3529
        %3632 = vrot.lane.b32.xlu0 %v3123, 8
        %v3633 = vpop.permute.xlu0 %3632
        %3634 = vrot.lane.b32.xlu0 %v3171, 8
        %v3635 = vpop.permute.xlu0 %3634
        %3640 = vrot.lane.b32.xlu0 %v3349, 16
        %v3641 = vpop.permute.xlu0 %3640
        %3642 = vrot.lane.b32.xlu0 %v3397, 16
        %v3643 = vpop.permute.xlu0 %3642
        %3648 = vrot.lane.b32.xlu0 %v3575, 24
        %v3649 = vpop.permute.xlu0 %3648
        %3650 = vrot.lane.b32.xlu0 %v3623, 24
        %v3651 = vpop.permute.xlu0 %3650
        %v3654 = vsel %vm1542, %v2896, %v3633
        %v3655 = vsel %vm1542, %v2945, %v3635
        %v3656 = vsel %vm2467, %v3654, %v3641
        %v3657 = vsel %vm2467, %v3655, %v3643
        %v3658 = vsel %vm2470, %v3656, %v3649
        %v3659 = vsel %vm2470, %v3657, %v3651
        %v3660 = vpack.c.bf16 %v3659, %v3658
        %v3662 = vlaneseq
        %v3663 = vshrl.u32 %v3662, 7
        %v3664 = vsub.s32 0, %v3663
        %v3665 = vrot.slane %v2727, %v3664
        %v3671 = vunpack.c.l.b16 %v2723
        %v3672 = vunpack.c.l.b16 %v2724
        %v3673 = vunpack.c.l.b16 %v2725
        %v3674 = vunpack.c.l.b16 %v2726
        %v3675 = vpack.c.b16 %v3672, %v3671
        %v3676 = vpack.c.b16 %v3674, %v3673
        %v3680 = vsel %vm1485, %v3660, 0
        %3682 = vmatprep.subr.bf16.mxu0 0
        %3683 = vmatpush1.bf16.msra.mxu0 %v3675
        %3684 = vmatprep.subr.bf16.mxu0 0
        %3685 = vmatpush1.bf16.msra.mxu0 %v3676
        %3686 = vmatprep.subr.bf16.mxu0 0
        %3687 = vmatpush1.bf16.msra.mxu0 0
        %3688 = vmatprep.subr.bf16.mxu0 0
        %3689 = vmatpush1.bf16.msra.mxu0 0
        %3690 = vmatprep.subr.bf16.mxu0 0
        %3691 = vmatpush1.bf16.msra.mxu0 0
        %3692 = vmatprep.subr.bf16.mxu0 0
        %3693 = vmatpush1.bf16.msra.mxu0 0
        %3694 = vmatprep.subr.bf16.mxu0 0
        %3695 = vmatpush1.bf16.msra.mxu0 0
        %3696 = vmatprep.subr.bf16.mxu0 0
        %3697 = vmatpush1.bf16.msra.mxu0 0
        %3698 = vmatprep.subr.bf16.mxu0 0
        %3699 = vmatpush1.bf16.msra.mxu0 0
        %3700 = vmatprep.subr.bf16.mxu0 0
        %3701 = vmatpush1.bf16.msra.mxu0 0
        %3702 = vmatprep.subr.bf16.mxu0 0
        %3703 = vmatpush1.bf16.msra.mxu0 0
        %3704 = vmatprep.subr.bf16.mxu0 0
        %3705 = vmatpush1.bf16.msra.mxu0 0
        %3706 = vmatprep.subr.bf16.mxu0 0
        %3707 = vmatpush1.bf16.msra.mxu0 0
        %3708 = vmatprep.subr.bf16.mxu0 0
        %3709 = vmatpush1.bf16.msra.mxu0 0
        %3710 = vmatprep.subr.bf16.mxu0 0
        %3711 = vmatpush1.bf16.msra.mxu0 0
        %3712 = vmatprep.subr.bf16.mxu0 0
        %3713 = vmatpush1.bf16.msra.mxu0 0
        %3714 = vmatprep.mubr.bf16.mxu0 0
        %3715 = vmatmul.mubr.bf16.gmra.mrb[0].mxu0 %v3680
        %v3716 = vpop.f32.mrb[0].mxu0
        %v3717 = vadd.f32 %v3665, %v3716
        %v3718 = vpop.f32.mrb[0].mxu0
        %v3719 = vpop.f32.mrb[0].mxu0
        %v3720 = vadd.f32 %v3665, %v3719
        %v3721 = vpop.f32.mrb[0].mxu0
        %3722 = vdwg.mxu0
        %v3723 = vmul.f32 %v3628, 0.25
        %v3724 = vmul.f32 %v3629, 0.25
        %v3725 = vadd.f32 %v2583, %v3717
        %v3726 = vadd.f32 %v2584, %v3720
        %v3727 = vld [vmem:[%s1432] sm:$0x1]
        %v3728 = vld [vmem:[%s1435] sm:$0x1]
        %v3729 = vsel %vm1485, %v3725, 0.0
        %3730 = vadd.xlane.f32.xlu0 %v3729
        %v3731 = vpop.xlane.xlu0 %3730
        %v3732 = vsel %vm1485, %v3726, 0.0
        %3733 = vadd.xlane.f32.xlu0 %v3732
        %v3734 = vpop.xlane.xlu0 %3733
        %v3735 = vmul.f32 %v3731, %v2548
        %v3736 = vmul.f32 %v3734, %v2548
        %v3737 = vsub.f32 %v3725, %v3735
        %v3738 = vsub.f32 %v3726, %v3736
        %v3739 = vmul.f32 %v3737, %v3737
        %v3740 = vmul.f32 %v3738, %v3738
        %v3741 = vsel %vm1485, %v3739, 0.0
        %3742 = vadd.xlane.f32.xlu0 %v3741
        %v3743 = vpop.xlane.xlu0 %3742
        %v3744 = vsel %vm1485, %v3740, 0.0
        %3745 = vadd.xlane.f32.xlu0 %v3744
        %v3746 = vpop.xlane.xlu0 %3745
        %v3747 = vmul.f32 %v3743, %v2548
        %v3748 = vmul.f32 %v3746, %v2548
        %v3749 = vadd.f32 %v3747, 1e-05
        %v3750 = vadd.f32 %v3748, 1e-05
        %v3751 = vrsqrt.pop %v3749
        %v3752 = vrsqrt.pop %v3750
        %v3753 = vmul.f32 %v3737, %v3751
        %v3754 = vmul.f32 %v3738, %v3752
        %v3756 = vlaneseq
        %v3757 = vshrl.u32 %v3756, 7
        %v3758 = vsub.s32 0, %v3757
        %v3759 = vrot.slane %v3727, %v3758
        %v3761 = vmul.f32 %v3753, %v3759
        %v3762 = vmul.f32 %v3754, %v3759
        %v3764 = vlaneseq
        %v3765 = vshrl.u32 %v3764, 7
        %v3766 = vsub.s32 0, %v3765
        %v3767 = vrot.slane %v3728, %v3766
        %v3769 = vadd.f32 %v3761, %v3767
        %v3770 = vadd.f32 %v3762, %v3767
        %v3771 = vpack.c.bf16 %v3770, %v3769
        %v3772 = vld [vmem:[%s1230] sm:$0xf]
        %v3773 = vld [vmem:[%s1230 + $0x4] sm:$0xf]
        %v3774 = vld [vmem:[%s1230 + $0x8] sm:$0xf]
        %v3775 = vld [vmem:[%s1230 + $0xc] sm:$0xf]
        %v3776 = vld [vmem:[%s1238] sm:$0x1]
        %v3778 = vlaneseq
        %v3779 = vshrl.u32 %v3778, 7
        %v3780 = vsub.s32 0, %v3779
        %v3781 = vrot.slane %v3776, %v3780
        %v3787 = vunpack.c.l.b16 %v3772
        %v3788 = vunpack.c.l.b16 %v3773
        %v3789 = vunpack.c.l.b16 %v3774
        %v3790 = vunpack.c.l.b16 %v3775
        %v3791 = vpack.c.b16 %v3788, %v3787
        %v3792 = vpack.c.b16 %v3790, %v3789
        %v3796 = vsel %vm1485, %v3771, 0
        %3798 = vmatprep.subr.bf16.mxu0 0
        %3799 = vmatpush1.bf16.msra.mxu0 %v3791
        %3800 = vmatprep.subr.bf16.mxu0 0
        %3801 = vmatpush1.bf16.msra.mxu0 %v3792
        %3802 = vmatprep.subr.bf16.mxu0 0
        %3803 = vmatpush1.bf16.msra.mxu0 0
        %3804 = vmatprep.subr.bf16.mxu0 0
        %3805 = vmatpush1.bf16.msra.mxu0 0
        %3806 = vmatprep.subr.bf16.mxu0 0
        %3807 = vmatpush1.bf16.msra.mxu0 0
        %3808 = vmatprep.subr.bf16.mxu0 0
        %3809 = vmatpush1.bf16.msra.mxu0 0
        %3810 = vmatprep.subr.bf16.mxu0 0
        %3811 = vmatpush1.bf16.msra.mxu0 0
        %3812 = vmatprep.subr.bf16.mxu0 0
        %3813 = vmatpush1.bf16.msra.mxu0 0
        %3814 = vmatprep.subr.bf16.mxu0 0
        %3815 = vmatpush1.bf16.msra.mxu0 0
        %3816 = vmatprep.subr.bf16.mxu0 0
        %3817 = vmatpush1.bf16.msra.mxu0 0
        %3818 = vmatprep.subr.bf16.mxu0 0
        %3819 = vmatpush1.bf16.msra.mxu0 0
        %3820 = vmatprep.subr.bf16.mxu0 0
        %3821 = vmatpush1.bf16.msra.mxu0 0
        %3822 = vmatprep.subr.bf16.mxu0 0
        %3823 = vmatpush1.bf16.msra.mxu0 0
        %3824 = vmatprep.subr.bf16.mxu0 0
        %3825 = vmatpush1.bf16.msra.mxu0 0
        %3826 = vmatprep.subr.bf16.mxu0 0
        %3827 = vmatpush1.bf16.msra.mxu0 0
        %3828 = vmatprep.subr.bf16.mxu0 0
        %3829 = vmatpush1.bf16.msra.mxu0 0
        %3830 = vmatprep.mubr.bf16.mxu0 0
        %3831 = vmatmul.mubr.bf16.gmra.mrb[0].mxu0 %v3796
        %v3832 = vpop.f32.mrb[0].mxu0
        %v3833 = vadd.f32 %v3781, %v3832
        %v3834 = vpop.f32.mrb[0].mxu0
        %v3835 = vpop.f32.mrb[0].mxu0
        %v3836 = vadd.f32 %v3781, %v3835
        %v3837 = vpop.f32.mrb[0].mxu0
        %3838 = vdwg.mxu0
        %v3839 = vmax.f32 %v3833, 0.0
        %v3840 = vmax.f32 %v3836, 0.0
        %v3841 = vpack.c.bf16 %v3840, %v3839
        %v3842 = vld [vmem:[%s1420] sm:$0xf]
        %v3843 = vld [vmem:[%s1420 + $0x4] sm:$0xf]
        %v3844 = vld [vmem:[%s1420 + $0x8] sm:$0xf]
        %v3845 = vld [vmem:[%s1420 + $0xc] sm:$0xf]
        %v3846 = vld [vmem:[%s1420 + $0x10] sm:$0xf]
        %v3847 = vld [vmem:[%s1420 + $0x14] sm:$0xf]
        %v3848 = vld [vmem:[%s1420 + $0x18] sm:$0xf]
        %v3849 = vld [vmem:[%s1420 + $0x1c] sm:$0xf]
        %v3850 = vld [vmem:[%s1423] sm:$0x1]
        %v3852 = vlaneseq
        %v3853 = vshrl.u32 %v3852, 7
        %v3854 = vsub.s32 0, %v3853
        %v3855 = vrot.slane %v3850, %v3854
        %v3865 = vunpack.c.l.b16 %v3842
        %v3866 = vunpack.c.l.b16 %v3843
        %v3867 = vunpack.c.l.b16 %v3844
        %v3868 = vunpack.c.l.b16 %v3845
        %v3869 = vunpack.c.l.b16 %v3846
        %v3870 = vunpack.c.l.b16 %v3847
        %v3871 = vunpack.c.l.b16 %v3848
        %v3872 = vunpack.c.l.b16 %v3849
        %v3873 = vpack.c.b16 %v3866, %v3865
        %v3874 = vpack.c.b16 %v3868, %v3867
        %v3875 = vpack.c.b16 %v3870, %v3869
        %v3876 = vpack.c.b16 %v3872, %v3871
        %vm3881 = vcmask 523264
        %v3883 = vsel %vm3881, %v3841, 0
        %3885 = vmatprep.subr.bf16.mxu0 0
        %3886 = vmatpush1.bf16.msra.mxu0 %v3873
        %3887 = vmatprep.subr.bf16.mxu0 0
        %3888 = vmatpush1.bf16.msra.mxu0 %v3874
        %3889 = vmatprep.subr.bf16.mxu0 0
        %3890 = vmatpush1.bf16.msra.mxu0 %v3875
        %3891 = vmatprep.subr.bf16.mxu0 0
        %3892 = vmatpush1.bf16.msra.mxu0 %v3876
        %3893 = vmatprep.subr.bf16.mxu0 0
        %3894 = vmatpush1.bf16.msra.mxu0 0
        %3895 = vmatprep.subr.bf16.mxu0 0
        %3896 = vmatpush1.bf16.msra.mxu0 0
        %3897 = vmatprep.subr.bf16.mxu0 0
        %3898 = vmatpush1.bf16.msra.mxu0 0
        %3899 = vmatprep.subr.bf16.mxu0 0
        %3900 = vmatpush1.bf16.msra.mxu0 0
        %3901 = vmatprep.subr.bf16.mxu0 0
        %3902 = vmatpush1.bf16.msra.mxu0 0
        %3903 = vmatprep.subr.bf16.mxu0 0
        %3904 = vmatpush1.bf16.msra.mxu0 0
        %3905 = vmatprep.subr.bf16.mxu0 0
        %3906 = vmatpush1.bf16.msra.mxu0 0
        %3907 = vmatprep.subr.bf16.mxu0 0
        %3908 = vmatpush1.bf16.msra.mxu0 0
        %3909 = vmatprep.subr.bf16.mxu0 0
        %3910 = vmatpush1.bf16.msra.mxu0 0
        %3911 = vmatprep.subr.bf16.mxu0 0
        %3912 = vmatpush1.bf16.msra.mxu0 0
        %3913 = vmatprep.subr.bf16.mxu0 0
        %3914 = vmatpush1.bf16.msra.mxu0 0
        %3915 = vmatprep.subr.bf16.mxu0 0
        %3916 = vmatpush1.bf16.msra.mxu0 0
        %3917 = vmatprep.mubr.bf16.mxu0 0
        %3918 = vmatmul.mubr.bf16.gmra.mrb[0].mxu0 %v3883
        %v3919 = vpop.f32.mrb[0].mxu0
        %v3920 = vadd.f32 %v3855, %v3919
        %v3921 = vpop.f32.mrb[0].mxu0
        %v3922 = vpop.f32.mrb[0].mxu0
        %v3923 = vadd.f32 %v3855, %v3922
        %v3924 = vpop.f32.mrb[0].mxu0
        %3925 = vdwg.mxu0
        %v3926 = vadd.f32 %v3769, %v3920
        %v3927 = vadd.f32 %v3770, %v3923
        %v3928 = vld [vmem:[%s1438] sm:$0x1]
        %v3929 = vld [vmem:[%s1441] sm:$0x1]
        %v3930 = vsel %vm1485, %v3926, 0.0
        %3931 = vadd.xlane.f32.xlu0 %v3930
        %v3932 = vpop.xlane.xlu0 %3931
        %v3933 = vsel %vm1485, %v3927, 0.0
        %3934 = vadd.xlane.f32.xlu0 %v3933
        %v3935 = vpop.xlane.xlu0 %3934
        %v3936 = vmul.f32 %v3932, %v2548
        %v3937 = vmul.f32 %v3935, %v2548
        %v3938 = vsub.f32 %v3926, %v3936
        %v3939 = vsub.f32 %v3927, %v3937
        %v3940 = vmul.f32 %v3938, %v3938
        %v3941 = vmul.f32 %v3939, %v3939
        %v3942 = vsel %vm1485, %v3940, 0.0
        %3943 = vadd.xlane.f32.xlu0 %v3942
        %v3944 = vpop.xlane.xlu0 %3943
        %v3945 = vsel %vm1485, %v3941, 0.0
        %3946 = vadd.xlane.f32.xlu0 %v3945
        %v3947 = vpop.xlane.xlu0 %3946
        %v3948 = vmul.f32 %v3944, %v2548
        %v3949 = vmul.f32 %v3947, %v2548
        %v3950 = vadd.f32 %v3948, 1e-05
        %v3951 = vadd.f32 %v3949, 1e-05
        %v3952 = vrsqrt.pop %v3950
        %v3953 = vrsqrt.pop %v3951
        %v3954 = vmul.f32 %v3938, %v3952
        %v3955 = vmul.f32 %v3939, %v3953
        %v3957 = vlaneseq
        %v3958 = vshrl.u32 %v3957, 7
        %v3959 = vsub.s32 0, %v3958
        %v3960 = vrot.slane %v3928, %v3959
        %v3962 = vmul.f32 %v3954, %v3960
        %v3963 = vmul.f32 %v3955, %v3960
        %v3965 = vlaneseq
        %v3966 = vshrl.u32 %v3965, 7
        %v3967 = vsub.s32 0, %v3966
        %v3968 = vrot.slane %v3929, %v3967
        %v3970 = vadd.f32 %v3962, %v3968
        %v3971 = vadd.f32 %v3963, %v3968
        %3972 = vst.msk [vmem:[#allocation23] sm:$0xff] %vm1485, %v3970
        %3973 = vst.msk [vmem:[#allocation23 + $0x8] sm:$0xff] %vm1485, %v3971
        %3974 = vst.msk [vmem:[%s1381] sm:$0xff] %vm1542, %v3723
        %3975 = vst.msk [vmem:[%s1381 + $0x8] sm:$0xff] %vm1542, %v3724
        %3976 = vst.msk [vmem:[%s1388] sm:$0xff] %vm1542, %v2536
        %3977 = vst.msk [vmem:[%s1388 + $0x8] sm:$0xff] %vm1542, %v2537
        %v3978 = vld [vmem:[#allocation10] sm:$0xff]
        %v3979 = vld [vmem:[#allocation10 + $0x8] sm:$0xff]
        %v3980 = vmul.f32 %v3723, %v3978
        %v3981 = vmul.f32 %v3724, %v3979
        %v3982 = vsel %vm1542, %v3980, 0.0
        %v3983 = vsel %vm1542, %v3981, 0.0
        %v3984 = vadd.f32 %v3982, %v3983
        %3985 = vadd.xlane.f32.xlu0 %v3984
        %v3986 = vpop.xlane.xlu0 %3985
        %v3987 = vrot.slane %v3986, 4
        %v3988 = vadd.f32 %v3986, %v3987
        %v3989 = vrot.slane %v3988, 2
        %v3990 = vadd.f32 %v3988, %v3989
        %v3991 = vrot.slane %v3990, 1
        %v3992 = vadd.f32 %v3990, %v3991
        %s3993 = vtos %v3992
        %p3994 = scmp.lt.s32.totalorder %s65, 2
        // Predicated region
        $region177: #{tpu_custom_call.1} parent=119 // pred_check
          %p3995 = pneg %p3994
        $region178: #{tpu_custom_call.1} parent=119 // pred_check_branch
          %3997 = sbr.rel (%p3995) target = $region180
        $region179: #{tpu_custom_call.1} parent=119 // pred_region
          %v3998 = vld [vmem:[#allocation27] sm:$0x1]
          %v3999 = vstv %s3993
          %v4000 = vadd.f32 %v3998, %v3999
          %vm4001 = vcmask 0
          %4002 = vst.msk [vmem:[#allocation27] sm:$0x1] %vm4001, %v4000
        $region180: #{tpu_custom_call.1} parent=119 // pred_fallthru
          _
        %s4003 = sand.u32 %s60, 1
        %s4004 = scalar_lea.sflag [#allocation25], %s4003
        %s4005 = sand.u32 %s758, 1
        %s4006 = smul.addr %s4005, 16
        %s4007 = scalar_lea.vmem [#allocation24], %s4006
        %s4008 = sand.u32 %s60, 1
        %s4009 = scalar_lea.sflag [#allocation25], %s4008
        %s4010 = sand.u32 %s786, 1
        %s4011 = smul.addr %s4010, 16
        %s4012 = scalar_lea.vmem [#allocation26], %s4011
        // Predicated region
        $region181: #{tpu_custom_call.1} parent=119 // pred_check
          %p4013 = pneg %p740
        $region182: #{tpu_custom_call.1} parent=119 // pred_check_branch
          %4015 = sbr.rel (%p4013) target = $region184
        $region183: #{tpu_custom_call.1} parent=119 // pred_region
          %s4016 = smul.u32 2, %s64
          %s4018 = ssub.s32 256, 256
          %4019 = vsyncadd [#allocation4], %s4018
          %s4020 = smul.addr %s4016, 128
          %s4021 = scalar_lea.hbm %s25, %s4020
          %s4022 = sshll.u32 [#allocation23], 4
          %s4023 = int_to_ptr.vmem [resolvable:$true] %s4022
          %4028 = dma.vmem_to_hbm [thread:$0]  %s4023, 256, %s4021, [#allocation4], 128, 128, 8
        $region184: #{tpu_custom_call.1} parent=119 // pred_fallthru
          _
        // Predicated region
        $region185: #{tpu_custom_call.1} parent=119 // pred_check
          %p4029 = pneg %p768
        $region186: #{tpu_custom_call.1} parent=119 // pred_check_branch
          %4031 = sbr.rel (%p4029) target = $region188
        $region187: #{tpu_custom_call.1} parent=119 // pred_region
          %s4032 = smul.u32 2, %s64
          %s4034 = ssub.s32 256, 256
          %4035 = vsyncadd %s4004, %s4034
          %s4036 = smul.addr %s65, 2
          %s4037 = sadd.s32 %s4032, %s4036
          %s4038 = smul.addr %s4037, 128
          %s4039 = scalar_lea.hbm %s26, %s4038
          %s4040 = sshll.u32 %s4007, 4
          %s4041 = int_to_ptr.vmem [resolvable:$true] %s4040
          %4046 = dma.vmem_to_hbm [thread:$0]  %s4041, 256, %s4039, %s4004, 128, 128, 8
        $region188: #{tpu_custom_call.1} parent=119 // pred_fallthru
          _
        // Predicated region
        $region189: #{tpu_custom_call.1} parent=119 // pred_check
          %p4047 = pneg %p796
        $region190: #{tpu_custom_call.1} parent=119 // pred_check_branch
          %4049 = sbr.rel (%p4047) target = $region192
        $region191: #{tpu_custom_call.1} parent=119 // pred_region
          %s4050 = smul.u32 2, %s64
          %s4052 = ssub.s32 256, 256
          %4053 = vsyncadd %s4009, %s4052
          %s4054 = smul.addr %s65, 2
          %s4055 = sadd.s32 %s4050, %s4054
          %s4056 = smul.addr %s4055, 128
          %s4057 = scalar_lea.hbm %s27, %s4056
          %s4058 = sshll.u32 %s4012, 4
          %s4059 = int_to_ptr.vmem [resolvable:$true] %s4058
          %4064 = dma.vmem_to_hbm [thread:$0]  %s4059, 256, %s4057, %s4009, 128, 128, 8
        $region192: #{tpu_custom_call.1} parent=119 // pred_fallthru
          _
        // Predicated region
        $region193: #{tpu_custom_call.1} parent=119 // pred_check
          %p4065 = pneg %p822
        $region194: #{tpu_custom_call.1} parent=119 // pred_check_branch
          %4067 = sbr.rel (%p4065) target = $region196
        $region195: #{tpu_custom_call.1} parent=119 // pred_region
          %s4069 = ssub.s32 16, 16
          %4070 = vsyncadd [#allocation28], %s4069
          %s4071 = smul.addr %s64, 16
          %s4072 = scalar_lea.hbm %s28, %s4071
          %s4074 = sshll.u32 [#allocation27], 4
          %s4075 = int_to_ptr.vmem [resolvable:$true] %s4074
          %4077 = dma.vmem_to_hbm [thread:$0]  %s4075, 16, %s4072, [#allocation28]
        $region196: #{tpu_custom_call.1} parent=119 // pred_fallthru
          _
        // Predicated region
        $region197: #{tpu_custom_call.1} parent=119 // pred_check
          %p4078 = pneg %p740
        $region198: #{tpu_custom_call.1} parent=119 // pred_check_branch
          %4080 = sbr.rel (%p4078) target = $region200
        $region199: #{tpu_custom_call.1} parent=119 // pred_region
          %4081 = dma.done [#allocation4], 256
        $region200: #{tpu_custom_call.1} parent=119 // pred_fallthru
          _
        // Predicated region
        $region201: #{tpu_custom_call.1} parent=119 // pred_check
          %p4082 = pneg %p822
        $region202: #{tpu_custom_call.1} parent=119 // pred_check_branch
          %4084 = sbr.rel (%p4082) target = $region204
        $region203: #{tpu_custom_call.1} parent=119 // pred_region
          %4085 = dma.done [#allocation28], 16
        $region204: #{tpu_custom_call.1} parent=119 // pred_fallthru
          _
      $region120: #{tpu_custom_call.1} parent=5 // pred_fallthru
        _
      %p4086 = scmp.le.s32.totalorder 2, %s55
      // Predicated region
      $region205: #{tpu_custom_call.1} parent=5 // pred_check
        %p4087 = pneg %p4086
      $region206: #{tpu_custom_call.1} parent=5 // pred_check_branch
        %4089 = sbr.rel (%p4087) target = $region208
      $region207: #{tpu_custom_call.1} parent=5 // pred_region
        %s4090 = ssub.s32 %s55, 2
        // Predicated region
        $region209: #{tpu_custom_call.1} parent=207 // pred_check
          %p4091 = pneg %p774
        $region210: #{tpu_custom_call.1} parent=207 // pred_check_branch
          %4093 = sbr.rel (%p4091) target = $region212
        $region211: #{tpu_custom_call.1} parent=207 // pred_region
          %s4094 = sand.u32 %s61, 1
          %s4095 = scalar_lea.sflag [#allocation25], %s4094
          %s4096 = sand.u32 %s759, 1
          %s4097 = smul.addr %s4096, 16
          %s4098 = scalar_lea.vmem [#allocation24], %s4097
          %4099 = dma.done %s4095, 256
        $region212: #{tpu_custom_call.1} parent=207 // pred_fallthru
          _
        // Predicated region
        $region213: #{tpu_custom_call.1} parent=207 // pred_check
          %p4100 = pneg %p802
        $region214: #{tpu_custom_call.1} parent=207 // pred_check_branch
          %4102 = sbr.rel (%p4100) target = $region216
        $region215: #{tpu_custom_call.1} parent=207 // pred_region
          %s4103 = sand.u32 %s61, 1
          %s4104 = scalar_lea.sflag [#allocation25], %s4103
          %s4105 = sand.u32 %s787, 1
          %s4106 = smul.addr %s4105, 16
          %s4107 = scalar_lea.vmem [#allocation26], %s4106
          %4108 = dma.done %s4104, 256
        $region216: #{tpu_custom_call.1} parent=207 // pred_fallthru
          _
      $region208: #{tpu_custom_call.1} parent=5 // pred_fallthru
        _
    $region6: #{tpu_custom_call.1} parent=1 // loop_footer
      %s59 = sadd.s32 1, %s55
    $region7: #{tpu_custom_call.1} parent=1 // loop_footer_branch
      %54 = sbr.rel target = $region3
    $region8: #{tpu_custom_call.1} parent=1 // loop_exit
      _
    %4109 = vsyncpa [#allocation3], 1
    %s4110 = scalar_lea.sflag [#allocation3], 1
    %4111 = vsyncpa %s4110, 1
    %4112 = vsyncpa [#allocation6], 1
    %4113 = vsyncpa [#allocation9], 1
    %4114 = vsyncpa [#allocation12], 1
    %s4115 = scalar_lea.sflag [#allocation12], 1
    %4116 = vsyncpa %s4115, 1
    %4117 = vsyncpa [#allocation15], 1
    %s4118 = scalar_lea.sflag [#allocation15], 1
    %4119 = vsyncpa %s4118, 1
    %4120 = vsyncpa [#allocation18], 1
    %s4121 = scalar_lea.sflag [#allocation18], 1
    %4122 = vsyncpa %s4121, 1
    %4123 = vsyncpa [#allocation21], 1
    %s4124 = scalar_lea.sflag [#allocation21], 1
    %4125 = vsyncpa %s4124, 1
    %4126 = vsyncpa [#allocation4], 1
    %s4127 = scalar_lea.sflag [#allocation4], 1
    %4128 = vsyncpa %s4127, 1
    %4129 = vsyncpa [#allocation25], 1
    %s4130 = scalar_lea.sflag [#allocation25], 1
    %4131 = vsyncpa %s4130, 1
    %4132 = vsyncpa [#allocation28], 1

</llo_original>
